<compile_context>
chip_gen: v5e
topology: v5e:2x2
jax: 0.10.0
libtpu: 0.0.40
codegen_flags: <defaults>
</compile_context>

<pallas_src>
import functools

import jax
import jax.numpy as jnp
from jax.experimental import pallas as pl
from jax.experimental.pallas import tpu as pltpu

FILL_VALUE = -9000000000000000.0


def _cdiv(a, b):
    return -(-a // b)


# ----------------------------------------------------------------------------
# in-kernel helpers (operate on head-batched 3-D VMEM values)
# ----------------------------------------------------------------------------
def _attn(hq, hk, mask_bias, inv_temp, include_self):
    """BiGCNLayer.scaled_dot_attention, row-oriented and batch/head-batched.

    hq: (B, n_q, d)  query rows  (the "y" side / output rows)
    hk: (B, n_k, d)  key+value rows (the "x" side being aggregated)
    mask_bias: (B, 1, n_k) additive f32 bias (FILL_VALUE where masked) or None

    include_self=True reproduces include_y=True, including the PyTorch
    broadcast quirk where the self row of the softmax (a (1, d) result) is
    summed over ALL query rows and added to every output row.
    Returns (B, n_q, d) float32.
    """
    hq32 = hq.astype(jnp.float32)
    hq_lo = hq.astype(jnp.bfloat16)
    hk_lo = hk.astype(jnp.bfloat16)

    # s[b, q, k] = hq[b, q] . hk[b, k] * inv_temp   (bf16 MXU, f32 accumulate)
    s = jnp.einsum("bqd,bkd->bqk", hq_lo, hk_lo,
                   preferred_element_type=jnp.float32) * inv_temp
    if mask_bias is not None:
        s = s + mask_bias                              # additive mask bias

    if include_self:
        s_self = jnp.sum(hq32 * hq32, axis=-1, keepdims=True) * inv_temp   # (B, n_q, 1)
        m = jnp.maximum(jnp.max(s, axis=-1, keepdims=True), s_self)
        e = jnp.exp(s - m)                                                  # (B, n_q, n_k)
        e_self = jnp.exp(s_self - m)                                        # (B, n_q, 1)
        denom = jnp.sum(e, axis=-1, keepdims=True) + e_self
        r = pl.reciprocal(denom, approx=True)                               # EUP slot
        num = jnp.einsum("bqk,bkd->bqd", e.astype(jnp.bfloat16), hk_lo,
                         preferred_element_type=jnp.float32)                # (B, n_q, d)
        p_self = e_self * r
        # PyTorch broadcast quirk: the self path is reduced over ALL query
        # rows and broadcast-added to every output row.
        return num * r + jnp.sum(p_self * hq32, axis=1, keepdims=True)

    m = jnp.max(s, axis=-1, keepdims=True)
    e = jnp.exp(s - m)
    r = pl.reciprocal(jnp.sum(e, axis=-1, keepdims=True), approx=True)
    num = jnp.einsum("bqk,bkd->bqd", e.astype(jnp.bfloat16), hk_lo,
                     preferred_element_type=jnp.float32)
    return num * r


def _project(act_hrd, w_lo, b_f32):
    """Head-batched linear: (H, R, d) x (H, d, d) -> (H, R, d) f32, plus bias."""
    h = jnp.einsum("hrd,hde->hre", act_hrd.astype(jnp.bfloat16), w_lo,
                   preferred_element_type=jnp.float32)
    return h + b_f32


# ----------------------------------------------------------------------------
# Pallas kernel: one program = TB batch elements, ALL heads (head-batched)
# ----------------------------------------------------------------------------
def symbigcn_kernel(x_ref, z_ref, maskb_ref, hy1_ref,
                    w1_ref, b1_ref, w2_ref, b2_ref, w3_ref, b3_ref,
                    out_ref, *, inv_temp):
    tb, n_x, d = x_ref.shape
    n_z = z_ref.shape[1]
    n_heads, n_topics, _ = hy1_ref.shape
    B = n_heads * tb          # flattened head-major batch for the attention einsums

    w1, w2, w3 = w1_ref[...], w2_ref[...], w3_ref[...]      # bf16 (H, d, d)
    b1, b2, b3 = b1_ref[...], b2_ref[...], b3_ref[...]      # f32  (H, 1, d)

    # ---- head-batched input projections: shared activations are replicated
    #      along a new leading head axis (cheap tile replication, no lane
    #      shuffles), weights are indexed by the leading head axis. -----------
    x_flat = x_ref[...].reshape(tb * n_x, d)                                 # bf16
    hx = _project(jnp.broadcast_to(x_flat[None], (n_heads, tb * n_x, d)),
                  w1, b1).reshape(B, n_x, d)                                 # f32

    z_flat = z_ref[...].reshape(tb * n_z, d)                                 # bf16
    hz = _project(jnp.broadcast_to(z_flat[None], (n_heads, tb * n_z, d)),
                  w3, b3).reshape(B, n_z, d)                                 # f32

    hy1 = jnp.broadcast_to(hy1_ref[...][:, None],
                           (n_heads, tb, n_topics, d)).reshape(B, n_topics, d)
    mask_bias = jnp.broadcast_to(maskb_ref[...][None],
                                 (n_heads, tb, 1, n_x)).reshape(B, 1, n_x)

    # ---- x2y_layer: include_y=True, mask over x nodes -----------------------
    y_hat = _attn(hy1, hx, mask_bias, inv_temp, include_self=True)           # (B, n_topics, d)

    # ---- y2y_layer: include_y=False, x is y (shared projection) -------------
    h2 = _project(y_hat.reshape(n_heads, tb * n_topics, d),
                  w2, b2).reshape(B, n_topics, d)
    y_hat2 = _attn(h2, h2, None, inv_temp, include_self=False)

    # ---- y2z_layer: include_y=True, no mask ---------------------------------
    hx3 = _project(y_hat2.reshape(n_heads, tb * n_topics, d),
                   w3, b3).reshape(B, n_topics, d)
    res = _attn(hz, hx3, None, inv_temp, include_self=True)                  # (B, n_z, d)

    # ---- store heads into the fused-lane (torch.cat(heads, -1)) output block.
    # TODO(synk): with production d >= 128 these become full-width unmasked
    # stores; at d=32 they are H small masked stores (cheaper than a lane
    # concatenate relayout).
    res = res.reshape(n_heads, tb, n_z, d)
    for h in range(n_heads):
        out_ref[:, :, h * d:(h + 1) * d] = res[h].astype(out_ref.dtype)


# ----------------------------------------------------------------------------
# wrapper
# ----------------------------------------------------------------------------
def multi_head_sym_bigcn(x, z_in, mask, params, *, batch_block=8):
    bs, n_x, d = x.shape
    n_z = z_in.shape[1]
    topics = params["topic_nodes"]
    n_topics = topics.shape[0]
    w1, b1 = params["w1"], params["b1"]        # (H, d, d), (H, 1, d)
    w2, b2 = params["w2"], params["b2"]
    w3, b3 = params["w3"], params["b3"]
    n_heads = w1.shape[0]
    hd = n_heads * d

    # Batch tile: big enough to amortize per-grid-step overhead, small enough
    # to keep >= 2 grid steps when bs allows (v7x has 2 TensorCores and the
    # batch axis is marked "parallel").
    tb = max(1, min(batch_block, _cdiv(bs, 2))) if bs > 1 else 1
    bs_p = _cdiv(bs, tb) * tb
    pad = bs_p - bs

    # Batch-invariant topic projection hoisted out of the kernel (tiny matmul).
    hy1 = jnp.einsum("td,hde->hte", topics, w1,
                     precision=jax.lax.Precision.HIGHEST) + b1             # (H, n_topics, d)

    # bf16 MXU operands (f32 accumulation in-kernel); biases / mask stay f32.
    x_lo = x.astype(jnp.bfloat16)
    z_lo = z_in.astype(jnp.bfloat16)
    hy1_lo = hy1.astype(jnp.bfloat16)
    w1_lo = w1.astype(jnp.bfloat16)
    w2_lo = w2.astype(jnp.bfloat16)
    w3_lo = w3.astype(jnp.bfloat16)

    # Additive mask bias (True == masked out), lane-dense along n_x.
    mask_bias = jnp.where(mask, FILL_VALUE, 0.0).astype(jnp.float32)[:, None, :]

    if pad:
        x_lo = jnp.pad(x_lo, ((0, pad), (0, 0), (0, 0)))
        z_lo = jnp.pad(z_lo, ((0, pad), (0, 0), (0, 0)))
        mask_bias = jnp.pad(mask_bias, ((0, pad), (0, 0), (0, 0)))

    inv_temp = 1.0 / (float(d) ** 0.5)
    kernel = functools.partial(symbigcn_kernel, inv_temp=inv_temp)
    grid = (bs_p // tb,)

    def _run(single_buffer_consts):
        def const_spec(shape):
            kwargs = {}
            if single_buffer_consts:
                # Batch-invariant block (constant index_map => DMA'd once).
                # Single-buffering halves resident-weight VMEM (matters on
                # v7x: 64 MiB physical / 32 MiB default-scoped VMEM).
                kwargs["pipeline_mode"] = pl.Buffered(1)
            return pl.BlockSpec(shape, lambda b: (0, 0, 0), **kwargs)

        grid_spec = pltpu.PrefetchScalarGridSpec(
            num_scalar_prefetch=0,
            grid=grid,
            in_specs=[
                pl.BlockSpec((tb, n_x, d), lambda b: (b, 0, 0)),      # x  (bf16)
                pl.BlockSpec((tb, n_z, d), lambda b: (b, 0, 0)),      # z  (bf16)
                pl.BlockSpec((tb, 1, n_x), lambda b: (b, 0, 0)),      # mask bias (f32)
                const_spec((n_heads, n_topics, d)),                   # hy1 (bf16)
                const_spec((n_heads, d, d)),                          # w1 (bf16)
                const_spec((n_heads, 1, d)),                          # b1 (f32)
                const_spec((n_heads, d, d)),                          # w2 (bf16)
                const_spec((n_heads, 1, d)),                          # b2 (f32)
                const_spec((n_heads, d, d)),                          # w3 (bf16)
                const_spec((n_heads, 1, d)),                          # b3 (f32)
            ],
            out_specs=pl.BlockSpec((tb, n_z, hd), lambda b: (b, 0, 0)),
        )
        out = pl.pallas_call(
            kernel,
            out_shape=jax.ShapeDtypeStruct((bs_p, n_z, hd), jnp.float32),
            grid_spec=grid_spec,
            compiler_params=pltpu.CompilerParams(
                dimension_semantics=("parallel",)),   # batch blocks -> both v7x TCs
        )(x_lo, z_lo, mask_bias, hy1_lo,
          w1_lo, b1.astype(jnp.float32),
          w2_lo, b2.astype(jnp.float32),
          w3_lo, b3.astype(jnp.float32))
        return jax.block_until_ready(out)

    try:
        out = _run(True)
    except Exception:   # fallback if this JAX rejects pl.Buffered(1) on inputs
        out = _run(False)

    # already in torch.cat(heads, dim=-1) layout: (bs, n_z, n_heads*d)
    return out[:bs]


# ----------------------------------------------------------------------------
# pure-JAX reference (mirrors the PyTorch math, including the broadcast quirk)
# ----------------------------------------------------------------------------
def _ref_attn(hx, hy, mask, temp, include_y):
    hp = jax.lax.Precision.HIGHEST
    a_xy = jnp.einsum("bxd,byd->bxy", hx, hy, precision=hp) / temp
    if mask is not None:
        a_xy = jnp.where(mask[:, :, None], FILL_VALUE, a_xy)
    if include_y:
        a_yy = jnp.sum(hy * hy, axis=-1) / temp                       # (bs, n_y)
        a = jnp.concatenate([a_xy, a_yy[:, None, :]], axis=1)
        a = jax.nn.softmax(a, axis=1)
        p_xy, p_yy = a[:, :-1, :], a[:, -1:, :]
        zout = (jnp.einsum("bxy,bxd->byd", p_xy, hx, precision=hp)
                + jnp.matmul(p_yy, hy, precision=hp))                 # (bs,1,d) broadcast
    else:
        a = jax.nn.softmax(a_xy, axis=1)
        zout = jnp.einsum("bxy,bxd->byd", a, hx, precision=hp)
    return zout


def reference(x, z_in, mask, params):
    bs, n_x, d = x.shape
    temp = float(d) ** 0.5
    topics = params["topic_nodes"]
    outs = []
    n_heads = params["w1"].shape[0]
    hp = jax.lax.Precision.HIGHEST
    for h in range(n_heads):
        w1, b1 = params["w1"][h], params["b1"][h]
        w2, b2 = params["w2"][h], params["b2"][h]
        w3, b3 = params["w3"][h], params["b3"][h]
        hx = jnp.einsum("bxd,de->bxe", x, w1, precision=hp) + b1
        hy = (jnp.dot(topics, w1, precision=hp) + b1)[None].repeat(bs, axis=0)
        y_hat = _ref_attn(hx, hy, mask, temp, include_y=True)
        h2 = jnp.einsum("bxd,de->bxe", y_hat, w2, precision=hp) + b2
        y_hat2 = _ref_attn(h2, h2, None, temp, include_y=False)
        hx3 = jnp.einsum("bxd,de->bxe", y_hat2, w3, precision=hp) + b3
        hy3 = jnp.einsum("bxd,de->bxe", z_in, w3, precision=hp) + b3
        outs.append(_ref_attn(hx3, hy3, None, temp, include_y=True))
    return jnp.concatenate(outs, axis=-1)


# ----------------------------------------------------------------------------
# main
# ----------------------------------------------------------------------------
if __name__ == "__main__":
    bs, n_x, n_topics, n_z, d, n_heads = 2, 8, 8, 8, 32, 2

    key = jax.random.PRNGKey(0)
    ks = jax.random.split(key, 12)

    # deterministic synthetic parameters (xavier-ish uniform)
    lim_t = (6.0 / (n_topics + d)) ** 0.5
    lim_w = (6.0 / (d + d)) ** 0.5
    params = {
        "topic_nodes": jax.random.uniform(ks[0], (n_topics, d), jnp.float32,
                                          -lim_t, lim_t),
        "w1": jax.random.uniform(ks[1], (n_heads, d, d), jnp.float32, -lim_w, lim_w),
        "b1": jax.random.uniform(ks[2], (n_heads, 1, d), jnp.float32, -0.1, 0.1),
        "w2": jax.random.uniform(ks[3], (n_heads, d, d), jnp.float32, -lim_w, lim_w),
        "b2": jax.random.uniform(ks[4], (n_heads, 1, d), jnp.float32, -0.1, 0.1),
        "w3": jax.random.uniform(ks[5], (n_heads, d, d), jnp.float32, -lim_w, lim_w),
        "b3": jax.random.uniform(ks[6], (n_heads, 1, d), jnp.float32, -0.1, 0.1),
    }

    x = jax.random.normal(ks[7], (bs, n_x, d), jnp.float32)
    z_in = jax.random.normal(ks[8], (bs, n_z, d), jnp.float32)
    # mask==True means "masked out" (as in masked_fill_); batch 0 masks last 2 rows
    lengths = jnp.array([n_x - 2, n_x], dtype=jnp.int32)
    mask = jnp.arange(n_x)[None, :] >= lengths[:, None]                # (bs, n_x) bool

    out = multi_head_sym_bigcn(x, z_in, mask, params)
    out = jax.block_until_ready(out)

    assert out.shape == (bs, n_z, n_heads * d), out.shape
    assert bool(jnp.all(jnp.isfinite(out)))

    ref = reference(x, z_in, mask, params)
    err = float(jnp.max(jnp.abs(out - ref)))
    scale = float(jnp.max(jnp.abs(ref)))
    # bf16 MXU inputs (f32 accumulation) + approx EUP reciprocal => tolerance
    # scaled to the output magnitude rather than exact-f32 parity.
    assert err <= 5e-2 + 2.5e-2 * scale, f"max abs err {err} (ref max {scale})"

    # TODO(synk): dropout is treated as identity (eval mode); training-mode
    # stochastic dropout would need pltpu.prng_* inside the kernel.
    print("KERNEL_OK")
</pallas_src>

<mosaic_0001>
module attributes {stable_mosaic.version = 11 : i64} {
  func.func @symbigcn_kernel(%arg0: i32, %arg1: memref<1x8x32xbf16, #tpu.memory_space<vmem>>, %arg2: memref<1x8x32xbf16, #tpu.memory_space<vmem>>, %arg3: memref<1x1x8xf32, #tpu.memory_space<vmem>>, %arg4: memref<2x8x32xbf16, #tpu.memory_space<vmem>>, %arg5: memref<2x32x32xbf16, #tpu.memory_space<vmem>>, %arg6: memref<2x1x32xf32, #tpu.memory_space<vmem>>, %arg7: memref<2x32x32xbf16, #tpu.memory_space<vmem>>, %arg8: memref<2x1x32xf32, #tpu.memory_space<vmem>>, %arg9: memref<2x32x32xbf16, #tpu.memory_space<vmem>>, %arg10: memref<2x1x32xf32, #tpu.memory_space<vmem>>, %arg11: memref<1x8x64xf32, #tpu.memory_space<vmem>>) attributes {dimension_semantics = [#tpu.dimension_semantics<parallel>], iteration_bounds = array<i64: 2>, scalar_prefetch = 0 : i64, scratch_operands = 0 : i64, tpu.core_type = #tpu.core_type<tc>, window_params = [{transform_indices = @transform_0, window_bounds = array<i64: 1, 8, 32>}, {transform_indices = @transform_1, window_bounds = array<i64: 1, 8, 32>}, {transform_indices = @transform_2, window_bounds = array<i64: 1, 1, 8>}, {pipeline_mode = #tpu.pipeline_mode<synchronous>, transform_indices = @transform_3, window_bounds = array<i64: 2, 8, 32>}, {pipeline_mode = #tpu.pipeline_mode<synchronous>, transform_indices = @transform_4, window_bounds = array<i64: 2, 32, 32>}, {pipeline_mode = #tpu.pipeline_mode<synchronous>, transform_indices = @transform_5, window_bounds = array<i64: 2, 1, 32>}, {pipeline_mode = #tpu.pipeline_mode<synchronous>, transform_indices = @transform_6, window_bounds = array<i64: 2, 32, 32>}, {pipeline_mode = #tpu.pipeline_mode<synchronous>, transform_indices = @transform_7, window_bounds = array<i64: 2, 1, 32>}, {pipeline_mode = #tpu.pipeline_mode<synchronous>, transform_indices = @transform_8, window_bounds = array<i64: 2, 32, 32>}, {pipeline_mode = #tpu.pipeline_mode<synchronous>, transform_indices = @transform_9, window_bounds = array<i64: 2, 1, 32>}, {transform_indices = @transform_10, window_bounds = array<i64: 1, 8, 64>}]} {
    %c0 = arith.constant 0 : index
    %c0_0 = arith.constant 0 : index
    %c0_1 = arith.constant 0 : index
    %0 = vector.load %arg5[%c0, %c0_0, %c0_1] : memref<2x32x32xbf16, #tpu.memory_space<vmem>>, vector<2x32x32xbf16>
    %c0_2 = arith.constant 0 : index
    %c0_3 = arith.constant 0 : index
    %c0_4 = arith.constant 0 : index
    %1 = vector.load %arg7[%c0_2, %c0_3, %c0_4] : memref<2x32x32xbf16, #tpu.memory_space<vmem>>, vector<2x32x32xbf16>
    %c0_5 = arith.constant 0 : index
    %c0_6 = arith.constant 0 : index
    %c0_7 = arith.constant 0 : index
    %2 = vector.load %arg9[%c0_5, %c0_6, %c0_7] : memref<2x32x32xbf16, #tpu.memory_space<vmem>>, vector<2x32x32xbf16>
    %c0_8 = arith.constant 0 : index
    %c0_9 = arith.constant 0 : index
    %c0_10 = arith.constant 0 : index
    %3 = vector.load %arg6[%c0_8, %c0_9, %c0_10] : memref<2x1x32xf32, #tpu.memory_space<vmem>>, vector<2x1x32xf32>
    %c0_11 = arith.constant 0 : index
    %c0_12 = arith.constant 0 : index
    %c0_13 = arith.constant 0 : index
    %4 = vector.load %arg8[%c0_11, %c0_12, %c0_13] : memref<2x1x32xf32, #tpu.memory_space<vmem>>, vector<2x1x32xf32>
    %c0_14 = arith.constant 0 : index
    %c0_15 = arith.constant 0 : index
    %c0_16 = arith.constant 0 : index
    %5 = vector.load %arg10[%c0_14, %c0_15, %c0_16] : memref<2x1x32xf32, #tpu.memory_space<vmem>>, vector<2x1x32xf32>
    %c0_17 = arith.constant 0 : index
    %c0_18 = arith.constant 0 : index
    %c0_19 = arith.constant 0 : index
    %6 = vector.load %arg1[%c0_17, %c0_18, %c0_19] : memref<1x8x32xbf16, #tpu.memory_space<vmem>>, vector<1x8x32xbf16>
    %7 = vector.shape_cast %6 : vector<1x8x32xbf16> to vector<8x32xbf16>
    %8 = vector.shape_cast %7 : vector<8x32xbf16> to vector<1x8x32xbf16>
    %9 = vector.shape_cast %8 : vector<1x8x32xbf16> to vector<1x8x32xbf16>
    %10 = vector.broadcast %9 : vector<1x8x32xbf16> to vector<2x8x32xbf16>
    "tpu.trace_start"() <{level = 10 : i32, message = "hrd,hde->hre"}> : () -> ()
    %cst = arith.constant dense<0.000000e+00> : vector<2x8x32xf32>
    %11 = tpu.matmul %10, %0, %cst {dimension_numbers = #tpu.dot_dimension_numbers<[2], [1], [1], [2], [0, 0, 0, 1, 1, 2], [0], [0]>} : vector<2x8x32xbf16>, vector<2x32x32xbf16>, vector<2x8x32xf32> -> vector<2x8x32xf32>
    "tpu.trace_stop"() : () -> ()
    %12 = vector.broadcast %3 : vector<2x1x32xf32> to vector<2x8x32xf32>
    %13 = arith.addf %11, %12 : vector<2x8x32xf32>
    %c0_20 = arith.constant 0 : index
    %c0_21 = arith.constant 0 : index
    %c0_22 = arith.constant 0 : index
    %14 = vector.load %arg2[%c0_20, %c0_21, %c0_22] : memref<1x8x32xbf16, #tpu.memory_space<vmem>>, vector<1x8x32xbf16>
    %15 = vector.shape_cast %14 : vector<1x8x32xbf16> to vector<8x32xbf16>
    %16 = vector.shape_cast %15 : vector<8x32xbf16> to vector<1x8x32xbf16>
    %17 = vector.shape_cast %16 : vector<1x8x32xbf16> to vector<1x8x32xbf16>
    %18 = vector.broadcast %17 : vector<1x8x32xbf16> to vector<2x8x32xbf16>
    "tpu.trace_start"() <{level = 10 : i32, message = "hrd,hde->hre"}> : () -> ()
    %cst_23 = arith.constant dense<0.000000e+00> : vector<2x8x32xf32>
    %19 = tpu.matmul %18, %2, %cst_23 {dimension_numbers = #tpu.dot_dimension_numbers<[2], [1], [1], [2], [0, 0, 0, 1, 1, 2], [0], [0]>} : vector<2x8x32xbf16>, vector<2x32x32xbf16>, vector<2x8x32xf32> -> vector<2x8x32xf32>
    "tpu.trace_stop"() : () -> ()
    %20 = vector.broadcast %5 : vector<2x1x32xf32> to vector<2x8x32xf32>
    %21 = arith.addf %19, %20 : vector<2x8x32xf32>
    %c0_24 = arith.constant 0 : index
    %c0_25 = arith.constant 0 : index
    %c0_26 = arith.constant 0 : index
    %22 = vector.load %arg4[%c0_24, %c0_25, %c0_26] : memref<2x8x32xbf16, #tpu.memory_space<vmem>>, vector<2x8x32xbf16>
    %23 = vector.shape_cast %22 : vector<2x8x32xbf16> to vector<2x1x8x32xbf16>
    %24 = vector.shape_cast %23 : vector<2x1x8x32xbf16> to vector<2x8x32xbf16>
    %c0_27 = arith.constant 0 : index
    %c0_28 = arith.constant 0 : index
    %c0_29 = arith.constant 0 : index
    %25 = vector.load %arg3[%c0_27, %c0_28, %c0_29] : memref<1x1x8xf32, #tpu.memory_space<vmem>>, vector<1x1x8xf32>
    %26 = vector.shape_cast %25 : vector<1x1x8xf32> to vector<1x1x1x8xf32>
    %27 = vector.shape_cast %26 : vector<1x1x1x8xf32> to vector<1x1x1x8xf32>
    %28 = vector.broadcast %27 : vector<1x1x1x8xf32> to vector<2x1x1x8xf32>
    %29 = vector.shape_cast %28 : vector<2x1x1x8xf32> to vector<2x1x8xf32>
    %30 = arith.extf %24 : vector<2x8x32xbf16> to vector<2x8x32xf32>
    %31 = arith.truncf %13 : vector<2x8x32xf32> to vector<2x8x32xbf16>
    "tpu.trace_start"() <{level = 10 : i32, message = "bqd,bkd->bqk"}> : () -> ()
    %cst_30 = arith.constant dense<0.000000e+00> : vector<2x8x8xf32>
    %32 = tpu.matmul %24, %31, %cst_30 {dimension_numbers = #tpu.dot_dimension_numbers<[2], [2], [1], [1], [0, 0, 0, 1, 1, 1], [0], [0]>} : vector<2x8x32xbf16>, vector<2x8x32xbf16>, vector<2x8x8xf32> -> vector<2x8x8xf32>
    "tpu.trace_stop"() : () -> ()
    %cst_31 = arith.constant 0.176776692 : f32
    %33 = vector.broadcast %cst_31 : f32 to vector<2x8x8xf32>
    %34 = arith.mulf %32, %33 : vector<2x8x8xf32>
    %35 = vector.broadcast %29 : vector<2x1x8xf32> to vector<2x8x8xf32>
    %36 = arith.addf %34, %35 : vector<2x8x8xf32>
    %37 = arith.mulf %30, %30 : vector<2x8x32xf32>
    %cst_32 = arith.constant dense<0.000000e+00> : vector<2x8xf32>
    %38 = vector.multi_reduction <add>, %37, %cst_32 [2] : vector<2x8x32xf32> to vector<2x8xf32>
    %39 = vector.shape_cast %38 : vector<2x8xf32> to vector<2x8x1xf32>
    %cst_33 = arith.constant 0.176776692 : f32
    %40 = vector.broadcast %cst_33 : f32 to vector<2x8x1xf32>
    %41 = arith.mulf %39, %40 : vector<2x8x1xf32>
    %cst_34 = arith.constant dense<0xFF800000> : vector<2x8xf32>
    %42 = vector.multi_reduction <maximumf>, %36, %cst_34 [2] : vector<2x8x8xf32> to vector<2x8xf32>
    %43 = vector.shape_cast %42 : vector<2x8xf32> to vector<2x8x1xf32>
    %44 = arith.maximumf %43, %41 : vector<2x8x1xf32>
    %45 = vector.broadcast %44 : vector<2x8x1xf32> to vector<2x8x8xf32>
    %46 = arith.subf %36, %45 : vector<2x8x8xf32>
    %47 = math.exp %46 : vector<2x8x8xf32>
    %48 = arith.subf %41, %44 : vector<2x8x1xf32>
    %49 = math.exp %48 : vector<2x8x1xf32>
    %cst_35 = arith.constant dense<0.000000e+00> : vector<2x8xf32>
    %50 = vector.multi_reduction <add>, %47, %cst_35 [2] : vector<2x8x8xf32> to vector<2x8xf32>
    %51 = vector.shape_cast %50 : vector<2x8xf32> to vector<2x8x1xf32>
    %52 = arith.addf %51, %49 : vector<2x8x1xf32>
    %53 = tpu.reciprocal %52 {approx = true} : vector<2x8x1xf32> -> vector<2x8x1xf32>
    %54 = arith.truncf %47 : vector<2x8x8xf32> to vector<2x8x8xbf16>
    "tpu.trace_start"() <{level = 10 : i32, message = "bqk,bkd->bqd"}> : () -> ()
    %cst_36 = arith.constant dense<0.000000e+00> : vector<2x8x32xf32>
    %55 = tpu.matmul %54, %31, %cst_36 {dimension_numbers = #tpu.dot_dimension_numbers<[2], [1], [1], [2], [0, 0, 0, 1, 1, 2], [0], [0]>} : vector<2x8x8xbf16>, vector<2x8x32xbf16>, vector<2x8x32xf32> -> vector<2x8x32xf32>
    "tpu.trace_stop"() : () -> ()
    %56 = arith.mulf %49, %53 : vector<2x8x1xf32>
    %57 = vector.broadcast %53 : vector<2x8x1xf32> to vector<2x8x32xf32>
    %58 = arith.mulf %55, %57 : vector<2x8x32xf32>
    %59 = vector.broadcast %56 : vector<2x8x1xf32> to vector<2x8x32xf32>
    %60 = arith.mulf %59, %30 : vector<2x8x32xf32>
    %cst_37 = arith.constant dense<0.000000e+00> : vector<2x32xf32>
    %61 = vector.multi_reduction <add>, %60, %cst_37 [1] : vector<2x8x32xf32> to vector<2x32xf32>
    %62 = vector.shape_cast %61 : vector<2x32xf32> to vector<2x1x32xf32>
    %63 = vector.broadcast %62 : vector<2x1x32xf32> to vector<2x8x32xf32>
    %64 = arith.addf %58, %63 : vector<2x8x32xf32>
    %65 = arith.truncf %64 : vector<2x8x32xf32> to vector<2x8x32xbf16>
    "tpu.trace_start"() <{level = 10 : i32, message = "hrd,hde->hre"}> : () -> ()
    %cst_38 = arith.constant dense<0.000000e+00> : vector<2x8x32xf32>
    %66 = tpu.matmul %65, %1, %cst_38 {dimension_numbers = #tpu.dot_dimension_numbers<[2], [1], [1], [2], [0, 0, 0, 1, 1, 2], [0], [0]>} : vector<2x8x32xbf16>, vector<2x32x32xbf16>, vector<2x8x32xf32> -> vector<2x8x32xf32>
    "tpu.trace_stop"() : () -> ()
    %67 = vector.broadcast %4 : vector<2x1x32xf32> to vector<2x8x32xf32>
    %68 = arith.addf %66, %67 : vector<2x8x32xf32>
    %69 = arith.truncf %68 : vector<2x8x32xf32> to vector<2x8x32xbf16>
    %70 = arith.truncf %68 : vector<2x8x32xf32> to vector<2x8x32xbf16>
    "tpu.trace_start"() <{level = 10 : i32, message = "bqd,bkd->bqk"}> : () -> ()
    %cst_39 = arith.constant dense<0.000000e+00> : vector<2x8x8xf32>
    %71 = tpu.matmul %69, %70, %cst_39 {dimension_numbers = #tpu.dot_dimension_numbers<[2], [2], [1], [1], [0, 0, 0, 1, 1, 1], [0], [0]>} : vector<2x8x32xbf16>, vector<2x8x32xbf16>, vector<2x8x8xf32> -> vector<2x8x8xf32>
    "tpu.trace_stop"() : () -> ()
    %cst_40 = arith.constant 0.176776692 : f32
    %72 = vector.broadcast %cst_40 : f32 to vector<2x8x8xf32>
    %73 = arith.mulf %71, %72 : vector<2x8x8xf32>
    %cst_41 = arith.constant dense<0xFF800000> : vector<2x8xf32>
    %74 = vector.multi_reduction <maximumf>, %73, %cst_41 [2] : vector<2x8x8xf32> to vector<2x8xf32>
    %75 = vector.shape_cast %74 : vector<2x8xf32> to vector<2x8x1xf32>
    %76 = vector.broadcast %75 : vector<2x8x1xf32> to vector<2x8x8xf32>
    %77 = arith.subf %73, %76 : vector<2x8x8xf32>
    %78 = math.exp %77 : vector<2x8x8xf32>
    %cst_42 = arith.constant dense<0.000000e+00> : vector<2x8xf32>
    %79 = vector.multi_reduction <add>, %78, %cst_42 [2] : vector<2x8x8xf32> to vector<2x8xf32>
    %80 = vector.shape_cast %79 : vector<2x8xf32> to vector<2x8x1xf32>
    %81 = tpu.reciprocal %80 {approx = true} : vector<2x8x1xf32> -> vector<2x8x1xf32>
    %82 = arith.truncf %78 : vector<2x8x8xf32> to vector<2x8x8xbf16>
    "tpu.trace_start"() <{level = 10 : i32, message = "bqk,bkd->bqd"}> : () -> ()
    %cst_43 = arith.constant dense<0.000000e+00> : vector<2x8x32xf32>
    %83 = tpu.matmul %82, %70, %cst_43 {dimension_numbers = #tpu.dot_dimension_numbers<[2], [1], [1], [2], [0, 0, 0, 1, 1, 2], [0], [0]>} : vector<2x8x8xbf16>, vector<2x8x32xbf16>, vector<2x8x32xf32> -> vector<2x8x32xf32>
    "tpu.trace_stop"() : () -> ()
    %84 = vector.broadcast %81 : vector<2x8x1xf32> to vector<2x8x32xf32>
    %85 = arith.mulf %83, %84 : vector<2x8x32xf32>
    %86 = arith.truncf %85 : vector<2x8x32xf32> to vector<2x8x32xbf16>
    "tpu.trace_start"() <{level = 10 : i32, message = "hrd,hde->hre"}> : () -> ()
    %cst_44 = arith.constant dense<0.000000e+00> : vector<2x8x32xf32>
    %87 = tpu.matmul %86, %2, %cst_44 {dimension_numbers = #tpu.dot_dimension_numbers<[2], [1], [1], [2], [0, 0, 0, 1, 1, 2], [0], [0]>} : vector<2x8x32xbf16>, vector<2x32x32xbf16>, vector<2x8x32xf32> -> vector<2x8x32xf32>
    "tpu.trace_stop"() : () -> ()
    %88 = vector.broadcast %5 : vector<2x1x32xf32> to vector<2x8x32xf32>
    %89 = arith.addf %87, %88 : vector<2x8x32xf32>
    %90 = arith.truncf %21 : vector<2x8x32xf32> to vector<2x8x32xbf16>
    %91 = arith.truncf %89 : vector<2x8x32xf32> to vector<2x8x32xbf16>
    "tpu.trace_start"() <{level = 10 : i32, message = "bqd,bkd->bqk"}> : () -> ()
    %cst_45 = arith.constant dense<0.000000e+00> : vector<2x8x8xf32>
    %92 = tpu.matmul %90, %91, %cst_45 {dimension_numbers = #tpu.dot_dimension_numbers<[2], [2], [1], [1], [0, 0, 0, 1, 1, 1], [0], [0]>} : vector<2x8x32xbf16>, vector<2x8x32xbf16>, vector<2x8x8xf32> -> vector<2x8x8xf32>
    "tpu.trace_stop"() : () -> ()
    %cst_46 = arith.constant 0.176776692 : f32
    %93 = vector.broadcast %cst_46 : f32 to vector<2x8x8xf32>
    %94 = arith.mulf %92, %93 : vector<2x8x8xf32>
    %95 = arith.mulf %21, %21 : vector<2x8x32xf32>
    %cst_47 = arith.constant dense<0.000000e+00> : vector<2x8xf32>
    %96 = vector.multi_reduction <add>, %95, %cst_47 [2] : vector<2x8x32xf32> to vector<2x8xf32>
    %97 = vector.shape_cast %96 : vector<2x8xf32> to vector<2x8x1xf32>
    %cst_48 = arith.constant 0.176776692 : f32
    %98 = vector.broadcast %cst_48 : f32 to vector<2x8x1xf32>
    %99 = arith.mulf %97, %98 : vector<2x8x1xf32>
    %cst_49 = arith.constant dense<0xFF800000> : vector<2x8xf32>
    %100 = vector.multi_reduction <maximumf>, %94, %cst_49 [2] : vector<2x8x8xf32> to vector<2x8xf32>
    %101 = vector.shape_cast %100 : vector<2x8xf32> to vector<2x8x1xf32>
    %102 = arith.maximumf %101, %99 : vector<2x8x1xf32>
    %103 = vector.broadcast %102 : vector<2x8x1xf32> to vector<2x8x8xf32>
    %104 = arith.subf %94, %103 : vector<2x8x8xf32>
    %105 = math.exp %104 : vector<2x8x8xf32>
    %106 = arith.subf %99, %102 : vector<2x8x1xf32>
    %107 = math.exp %106 : vector<2x8x1xf32>
    %cst_50 = arith.constant dense<0.000000e+00> : vector<2x8xf32>
    %108 = vector.multi_reduction <add>, %105, %cst_50 [2] : vector<2x8x8xf32> to vector<2x8xf32>
    %109 = vector.shape_cast %108 : vector<2x8xf32> to vector<2x8x1xf32>
    %110 = arith.addf %109, %107 : vector<2x8x1xf32>
    %111 = tpu.reciprocal %110 {approx = true} : vector<2x8x1xf32> -> vector<2x8x1xf32>
    %112 = arith.truncf %105 : vector<2x8x8xf32> to vector<2x8x8xbf16>
    "tpu.trace_start"() <{level = 10 : i32, message = "bqk,bkd->bqd"}> : () -> ()
    %cst_51 = arith.constant dense<0.000000e+00> : vector<2x8x32xf32>
    %113 = tpu.matmul %112, %91, %cst_51 {dimension_numbers = #tpu.dot_dimension_numbers<[2], [1], [1], [2], [0, 0, 0, 1, 1, 2], [0], [0]>} : vector<2x8x8xbf16>, vector<2x8x32xbf16>, vector<2x8x32xf32> -> vector<2x8x32xf32>
    "tpu.trace_stop"() : () -> ()
    %114 = arith.mulf %107, %111 : vector<2x8x1xf32>
    %115 = vector.broadcast %111 : vector<2x8x1xf32> to vector<2x8x32xf32>
    %116 = arith.mulf %113, %115 : vector<2x8x32xf32>
    %117 = vector.broadcast %114 : vector<2x8x1xf32> to vector<2x8x32xf32>
    %118 = arith.mulf %117, %21 : vector<2x8x32xf32>
    %cst_52 = arith.constant dense<0.000000e+00> : vector<2x32xf32>
    %119 = vector.multi_reduction <add>, %118, %cst_52 [1] : vector<2x8x32xf32> to vector<2x32xf32>
    %120 = vector.shape_cast %119 : vector<2x32xf32> to vector<2x1x32xf32>
    %121 = vector.broadcast %120 : vector<2x1x32xf32> to vector<2x8x32xf32>
    %122 = arith.addf %116, %121 : vector<2x8x32xf32>
    %123 = vector.shape_cast %122 : vector<2x8x32xf32> to vector<2x1x8x32xf32>
    %124 = vector.extract_strided_slice %123 {offsets = [0, 0, 0, 0], sizes = [1, 1, 8, 32], strides = [1, 1, 1, 1]} : vector<2x1x8x32xf32> to vector<1x1x8x32xf32>
    %125 = vector.shape_cast %124 : vector<1x1x8x32xf32> to vector<1x8x32xf32>
    %c0_53 = arith.constant 0 : index
    %c0_54 = arith.constant 0 : index
    %c0_55 = arith.constant 0 : index
    %126 = vector.load %arg11[%c0_53, %c0_54, %c0_55] : memref<1x8x64xf32, #tpu.memory_space<vmem>>, vector<1x8x32xf32>
    tpu.vector_store %arg11[%c0_53, %c0_54, %c0_55], %125 {strides = array<i32>} : memref<1x8x64xf32, #tpu.memory_space<vmem>>, vector<1x8x32xf32>,
    %127 = vector.extract_strided_slice %123 {offsets = [1, 0, 0, 0], sizes = [1, 1, 8, 32], strides = [1, 1, 1, 1]} : vector<2x1x8x32xf32> to vector<1x1x8x32xf32>
    %128 = vector.shape_cast %127 : vector<1x1x8x32xf32> to vector<1x8x32xf32>
    %c0_56 = arith.constant 0 : index
    %c0_57 = arith.constant 0 : index
    %c32 = arith.constant 32 : index
    %129 = vector.load %arg11[%c0_56, %c0_57, %c32] : memref<1x8x64xf32, #tpu.memory_space<vmem>>, vector<1x8x32xf32>
    tpu.vector_store %arg11[%c0_56, %c0_57, %c32], %128 {strides = array<i32>} : memref<1x8x64xf32, #tpu.memory_space<vmem>>, vector<1x8x32xf32>,
    return
  }
  func.func @transform_0(%arg0: i32) -> (i32, i32, i32) {
    %c0_i32 = arith.constant 0 : i32
    %c0_i32_0 = arith.constant 0 : i32
    %c0_i32_1 = arith.constant 0 : i32
    return %arg0, %c0_i32, %c0_i32_0 : i32, i32, i32
  }
  func.func @transform_1(%arg0: i32) -> (i32, i32, i32) {
    %c0_i32 = arith.constant 0 : i32
    %c0_i32_0 = arith.constant 0 : i32
    %c0_i32_1 = arith.constant 0 : i32
    return %arg0, %c0_i32, %c0_i32_0 : i32, i32, i32
  }
  func.func @transform_2(%arg0: i32) -> (i32, i32, i32) {
    %c0_i32 = arith.constant 0 : i32
    %c0_i32_0 = arith.constant 0 : i32
    %c0_i32_1 = arith.constant 0 : i32
    return %arg0, %c0_i32, %c0_i32_0 : i32, i32, i32
  }
  func.func @transform_3(%arg0: i32) -> (i32, i32, i32) {
    %c0_i32 = arith.constant 0 : i32
    %c0_i32_0 = arith.constant 0 : i32
    %c0_i32_1 = arith.constant 0 : i32
    %c0_i32_2 = arith.constant 0 : i32
    return %c0_i32, %c0_i32_0, %c0_i32_1 : i32, i32, i32
  }
  func.func @transform_4(%arg0: i32) -> (i32, i32, i32) {
    %c0_i32 = arith.constant 0 : i32
    %c0_i32_0 = arith.constant 0 : i32
    %c0_i32_1 = arith.constant 0 : i32
    %c0_i32_2 = arith.constant 0 : i32
    return %c0_i32, %c0_i32_0, %c0_i32_1 : i32, i32, i32
  }
  func.func @transform_5(%arg0: i32) -> (i32, i32, i32) {
    %c0_i32 = arith.constant 0 : i32
    %c0_i32_0 = arith.constant 0 : i32
    %c0_i32_1 = arith.constant 0 : i32
    %c0_i32_2 = arith.constant 0 : i32
    return %c0_i32, %c0_i32_0, %c0_i32_1 : i32, i32, i32
  }
  func.func @transform_6(%arg0: i32) -> (i32, i32, i32) {
    %c0_i32 = arith.constant 0 : i32
    %c0_i32_0 = arith.constant 0 : i32
    %c0_i32_1 = arith.constant 0 : i32
    %c0_i32_2 = arith.constant 0 : i32
    return %c0_i32, %c0_i32_0, %c0_i32_1 : i32, i32, i32
  }
  func.func @transform_7(%arg0: i32) -> (i32, i32, i32) {
    %c0_i32 = arith.constant 0 : i32
    %c0_i32_0 = arith.constant 0 : i32
    %c0_i32_1 = arith.constant 0 : i32
    %c0_i32_2 = arith.constant 0 : i32
    return %c0_i32, %c0_i32_0, %c0_i32_1 : i32, i32, i32
  }
  func.func @transform_8(%arg0: i32) -> (i32, i32, i32) {
    %c0_i32 = arith.constant 0 : i32
    %c0_i32_0 = arith.constant 0 : i32
    %c0_i32_1 = arith.constant 0 : i32
    %c0_i32_2 = arith.constant 0 : i32
    return %c0_i32, %c0_i32_0, %c0_i32_1 : i32, i32, i32
  }
  func.func @transform_9(%arg0: i32) -> (i32, i32, i32) {
    %c0_i32 = arith.constant 0 : i32
    %c0_i32_0 = arith.constant 0 : i32
    %c0_i32_1 = arith.constant 0 : i32
    %c0_i32_2 = arith.constant 0 : i32
    return %c0_i32, %c0_i32_0, %c0_i32_1 : i32, i32, i32
  }
  func.func @transform_10(%arg0: i32) -> (i32, i32, i32) {
    %c0_i32 = arith.constant 0 : i32
    %c0_i32_0 = arith.constant 0 : i32
    %c0_i32_1 = arith.constant 0 : i32
    return %arg0, %c0_i32, %c0_i32_0 : i32, i32, i32
  }
}

module attributes {stable_mosaic.version = 11 : i64} {
  func.func @symbigcn_kernel(%arg0: i32, %arg1: memref<1x8x32xbf16, #tpu.memory_space<vmem>>, %arg2: memref<1x8x32xbf16, #tpu.memory_space<vmem>>, %arg3: memref<1x1x8xf32, #tpu.memory_space<vmem>>, %arg4: memref<2x8x32xbf16, #tpu.memory_space<vmem>>, %arg5: memref<2x32x32xbf16, #tpu.memory_space<vmem>>, %arg6: memref<2x1x32xf32, #tpu.memory_space<vmem>>, %arg7: memref<2x32x32xbf16, #tpu.memory_space<vmem>>, %arg8: memref<2x1x32xf32, #tpu.memory_space<vmem>>, %arg9: memref<2x32x32xbf16, #tpu.memory_space<vmem>>, %arg10: memref<2x1x32xf32, #tpu.memory_space<vmem>>, %arg11: memref<1x8x64xf32, #tpu.memory_space<vmem>>) attributes {dimension_semantics = [#tpu.dimension_semantics<parallel>], iteration_bounds = array<i64: 2>, scalar_prefetch = 0 : i64, scratch_operands = 0 : i64, tpu.core_type = #tpu.core_type<tc>, window_params = [{transform_indices = @transform_0, window_bounds = array<i64: 1, 8, 32>}, {transform_indices = @transform_1, window_bounds = array<i64: 1, 8, 32>}, {transform_indices = @transform_2, window_bounds = array<i64: 1, 1, 8>}, {pipeline_mode = #tpu.pipeline_mode<synchronous>, transform_indices = @transform_3, window_bounds = array<i64: 2, 8, 32>}, {pipeline_mode = #tpu.pipeline_mode<synchronous>, transform_indices = @transform_4, window_bounds = array<i64: 2, 32, 32>}, {pipeline_mode = #tpu.pipeline_mode<synchronous>, transform_indices = @transform_5, window_bounds = array<i64: 2, 1, 32>}, {pipeline_mode = #tpu.pipeline_mode<synchronous>, transform_indices = @transform_6, window_bounds = array<i64: 2, 32, 32>}, {pipeline_mode = #tpu.pipeline_mode<synchronous>, transform_indices = @transform_7, window_bounds = array<i64: 2, 1, 32>}, {pipeline_mode = #tpu.pipeline_mode<synchronous>, transform_indices = @transform_8, window_bounds = array<i64: 2, 32, 32>}, {pipeline_mode = #tpu.pipeline_mode<synchronous>, transform_indices = @transform_9, window_bounds = array<i64: 2, 1, 32>}, {transform_indices = @transform_10, window_bounds = array<i64: 1, 8, 64>}]} {
    %c0 = arith.constant 0 : index
    %c0_0 = arith.constant 0 : index
    %c0_1 = arith.constant 0 : index
    %0 = vector.load %arg5[%c0, %c0_0, %c0_1] : memref<2x32x32xbf16, #tpu.memory_space<vmem>>, vector<2x32x32xbf16>
    %c0_2 = arith.constant 0 : index
    %c0_3 = arith.constant 0 : index
    %c0_4 = arith.constant 0 : index
    %1 = vector.load %arg7[%c0_2, %c0_3, %c0_4] : memref<2x32x32xbf16, #tpu.memory_space<vmem>>, vector<2x32x32xbf16>
    %c0_5 = arith.constant 0 : index
    %c0_6 = arith.constant 0 : index
    %c0_7 = arith.constant 0 : index
    %2 = vector.load %arg9[%c0_5, %c0_6, %c0_7] : memref<2x32x32xbf16, #tpu.memory_space<vmem>>, vector<2x32x32xbf16>
    %c0_8 = arith.constant 0 : index
    %c0_9 = arith.constant 0 : index
    %c0_10 = arith.constant 0 : index
    %3 = vector.load %arg6[%c0_8, %c0_9, %c0_10] : memref<2x1x32xf32, #tpu.memory_space<vmem>>, vector<2x1x32xf32>
    %c0_11 = arith.constant 0 : index
    %c0_12 = arith.constant 0 : index
    %c0_13 = arith.constant 0 : index
    %4 = vector.load %arg8[%c0_11, %c0_12, %c0_13] : memref<2x1x32xf32, #tpu.memory_space<vmem>>, vector<2x1x32xf32>
    %c0_14 = arith.constant 0 : index
    %c0_15 = arith.constant 0 : index
    %c0_16 = arith.constant 0 : index
    %5 = vector.load %arg10[%c0_14, %c0_15, %c0_16] : memref<2x1x32xf32, #tpu.memory_space<vmem>>, vector<2x1x32xf32>
    %c0_17 = arith.constant 0 : index
    %c0_18 = arith.constant 0 : index
    %c0_19 = arith.constant 0 : index
    %6 = vector.load %arg1[%c0_17, %c0_18, %c0_19] : memref<1x8x32xbf16, #tpu.memory_space<vmem>>, vector<1x8x32xbf16>
    %7 = vector.shape_cast %6 : vector<1x8x32xbf16> to vector<8x32xbf16>
    %8 = vector.shape_cast %7 : vector<8x32xbf16> to vector<1x8x32xbf16>
    %9 = vector.shape_cast %8 : vector<1x8x32xbf16> to vector<1x8x32xbf16>
    %10 = vector.broadcast %9 : vector<1x8x32xbf16> to vector<2x8x32xbf16>
    "tpu.trace_start"() <{level = 10 : i32, message = "hrd,hde->hre"}> : () -> ()
    %cst = arith.constant dense<0.000000e+00> : vector<2x8x32xf32>
    %11 = tpu.matmul %10, %0, %cst {dimension_numbers = #tpu.dot_dimension_numbers<[2], [1], [1], [2], [0, 0, 0, 1, 1, 2], [0], [0]>} : vector<2x8x32xbf16>, vector<2x32x32xbf16>, vector<2x8x32xf32> -> vector<2x8x32xf32>
    "tpu.trace_stop"() : () -> ()
    %12 = vector.broadcast %3 : vector<2x1x32xf32> to vector<2x8x32xf32>
    %13 = arith.addf %11, %12 : vector<2x8x32xf32>
    %c0_20 = arith.constant 0 : index
    %c0_21 = arith.constant 0 : index
    %c0_22 = arith.constant 0 : index
    %14 = vector.load %arg2[%c0_20, %c0_21, %c0_22] : memref<1x8x32xbf16, #tpu.memory_space<vmem>>, vector<1x8x32xbf16>
    %15 = vector.shape_cast %14 : vector<1x8x32xbf16> to vector<8x32xbf16>
    %16 = vector.shape_cast %15 : vector<8x32xbf16> to vector<1x8x32xbf16>
    %17 = vector.shape_cast %16 : vector<1x8x32xbf16> to vector<1x8x32xbf16>
    %18 = vector.broadcast %17 : vector<1x8x32xbf16> to vector<2x8x32xbf16>
    "tpu.trace_start"() <{level = 10 : i32, message = "hrd,hde->hre"}> : () -> ()
    %cst_23 = arith.constant dense<0.000000e+00> : vector<2x8x32xf32>
    %19 = tpu.matmul %18, %2, %cst_23 {dimension_numbers = #tpu.dot_dimension_numbers<[2], [1], [1], [2], [0, 0, 0, 1, 1, 2], [0], [0]>} : vector<2x8x32xbf16>, vector<2x32x32xbf16>, vector<2x8x32xf32> -> vector<2x8x32xf32>
    "tpu.trace_stop"() : () -> ()
    %20 = vector.broadcast %5 : vector<2x1x32xf32> to vector<2x8x32xf32>
    %21 = arith.addf %19, %20 : vector<2x8x32xf32>
    %c0_24 = arith.constant 0 : index
    %c0_25 = arith.constant 0 : index
    %c0_26 = arith.constant 0 : index
    %22 = vector.load %arg4[%c0_24, %c0_25, %c0_26] : memref<2x8x32xbf16, #tpu.memory_space<vmem>>, vector<2x8x32xbf16>
    %23 = vector.shape_cast %22 : vector<2x8x32xbf16> to vector<2x1x8x32xbf16>
    %24 = vector.shape_cast %23 : vector<2x1x8x32xbf16> to vector<2x8x32xbf16>
    %c0_27 = arith.constant 0 : index
    %c0_28 = arith.constant 0 : index
    %c0_29 = arith.constant 0 : index
    %25 = vector.load %arg3[%c0_27, %c0_28, %c0_29] : memref<1x1x8xf32, #tpu.memory_space<vmem>>, vector<1x1x8xf32>
    %26 = vector.shape_cast %25 : vector<1x1x8xf32> to vector<1x1x1x8xf32>
    %27 = vector.shape_cast %26 : vector<1x1x1x8xf32> to vector<1x1x1x8xf32>
    %28 = vector.broadcast %27 : vector<1x1x1x8xf32> to vector<2x1x1x8xf32>
    %29 = vector.shape_cast %28 : vector<2x1x1x8xf32> to vector<2x1x8xf32>
    %30 = arith.extf %24 : vector<2x8x32xbf16> to vector<2x8x32xf32>
    %31 = arith.truncf %13 : vector<2x8x32xf32> to vector<2x8x32xbf16>
    "tpu.trace_start"() <{level = 10 : i32, message = "bqd,bkd->bqk"}> : () -> ()
    %cst_30 = arith.constant dense<0.000000e+00> : vector<2x8x8xf32>
    %32 = tpu.matmul %24, %31, %cst_30 {dimension_numbers = #tpu.dot_dimension_numbers<[2], [2], [1], [1], [0, 0, 0, 1, 1, 1], [0], [0]>} : vector<2x8x32xbf16>, vector<2x8x32xbf16>, vector<2x8x8xf32> -> vector<2x8x8xf32>
    "tpu.trace_stop"() : () -> ()
    %cst_31 = arith.constant 0.176776692 : f32
    %33 = vector.broadcast %cst_31 : f32 to vector<2x8x8xf32>
    %34 = arith.mulf %32, %33 : vector<2x8x8xf32>
    %35 = vector.broadcast %29 : vector<2x1x8xf32> to vector<2x8x8xf32>
    %36 = arith.addf %34, %35 : vector<2x8x8xf32>
    %37 = arith.mulf %30, %30 : vector<2x8x32xf32>
    %cst_32 = arith.constant dense<0.000000e+00> : vector<2x8xf32>
    %38 = vector.multi_reduction <add>, %37, %cst_32 [2] : vector<2x8x32xf32> to vector<2x8xf32>
    %39 = vector.shape_cast %38 : vector<2x8xf32> to vector<2x8x1xf32>
    %cst_33 = arith.constant 0.176776692 : f32
    %40 = vector.broadcast %cst_33 : f32 to vector<2x8x1xf32>
    %41 = arith.mulf %39, %40 : vector<2x8x1xf32>
    %cst_34 = arith.constant dense<0xFF800000> : vector<2x8xf32>
    %42 = vector.multi_reduction <maximumf>, %36, %cst_34 [2] : vector<2x8x8xf32> to vector<2x8xf32>
    %43 = vector.shape_cast %42 : vector<2x8xf32> to vector<2x8x1xf32>
    %44 = arith.maximumf %43, %41 : vector<2x8x1xf32>
    %45 = vector.broadcast %44 : vector<2x8x1xf32> to vector<2x8x8xf32>
    %46 = arith.subf %36, %45 : vector<2x8x8xf32>
    %47 = math.exp %46 : vector<2x8x8xf32>
    %48 = arith.subf %41, %44 : vector<2x8x1xf32>
    %49 = math.exp %48 : vector<2x8x1xf32>
    %cst_35 = arith.constant dense<0.000000e+00> : vector<2x8xf32>
    %50 = vector.multi_reduction <add>, %47, %cst_35 [2] : vector<2x8x8xf32> to vector<2x8xf32>
    %51 = vector.shape_cast %50 : vector<2x8xf32> to vector<2x8x1xf32>
    %52 = arith.addf %51, %49 : vector<2x8x1xf32>
    %53 = tpu.reciprocal %52 {approx = true} : vector<2x8x1xf32> -> vector<2x8x1xf32>
    %54 = arith.truncf %47 : vector<2x8x8xf32> to vector<2x8x8xbf16>
    "tpu.trace_start"() <{level = 10 : i32, message = "bqk,bkd->bqd"}> : () -> ()
    %cst_36 = arith.constant dense<0.000000e+00> : vector<2x8x32xf32>
    %55 = tpu.matmul %54, %31, %cst_36 {dimension_numbers = #tpu.dot_dimension_numbers<[2], [1], [1], [2], [0, 0, 0, 1, 1, 2], [0], [0]>} : vector<2x8x8xbf16>, vector<2x8x32xbf16>, vector<2x8x32xf32> -> vector<2x8x32xf32>
    "tpu.trace_stop"() : () -> ()
    %56 = arith.mulf %49, %53 : vector<2x8x1xf32>
    %57 = vector.broadcast %53 : vector<2x8x1xf32> to vector<2x8x32xf32>
    %58 = arith.mulf %55, %57 : vector<2x8x32xf32>
    %59 = vector.broadcast %56 : vector<2x8x1xf32> to vector<2x8x32xf32>
    %60 = arith.mulf %59, %30 : vector<2x8x32xf32>
    %cst_37 = arith.constant dense<0.000000e+00> : vector<2x32xf32>
    %61 = vector.multi_reduction <add>, %60, %cst_37 [1] : vector<2x8x32xf32> to vector<2x32xf32>
    %62 = vector.shape_cast %61 : vector<2x32xf32> to vector<2x1x32xf32>
    %63 = vector.broadcast %62 : vector<2x1x32xf32> to vector<2x8x32xf32>
    %64 = arith.addf %58, %63 : vector<2x8x32xf32>
    %65 = arith.truncf %64 : vector<2x8x32xf32> to vector<2x8x32xbf16>
    "tpu.trace_start"() <{level = 10 : i32, message = "hrd,hde->hre"}> : () -> ()
    %cst_38 = arith.constant dense<0.000000e+00> : vector<2x8x32xf32>
    %66 = tpu.matmul %65, %1, %cst_38 {dimension_numbers = #tpu.dot_dimension_numbers<[2], [1], [1], [2], [0, 0, 0, 1, 1, 2], [0], [0]>} : vector<2x8x32xbf16>, vector<2x32x32xbf16>, vector<2x8x32xf32> -> vector<2x8x32xf32>
    "tpu.trace_stop"() : () -> ()
    %67 = vector.broadcast %4 : vector<2x1x32xf32> to vector<2x8x32xf32>
    %68 = arith.addf %66, %67 : vector<2x8x32xf32>
    %69 = arith.truncf %68 : vector<2x8x32xf32> to vector<2x8x32xbf16>
    %70 = arith.truncf %68 : vector<2x8x32xf32> to vector<2x8x32xbf16>
    "tpu.trace_start"() <{level = 10 : i32, message = "bqd,bkd->bqk"}> : () -> ()
    %cst_39 = arith.constant dense<0.000000e+00> : vector<2x8x8xf32>
    %71 = tpu.matmul %69, %70, %cst_39 {dimension_numbers = #tpu.dot_dimension_numbers<[2], [2], [1], [1], [0, 0, 0, 1, 1, 1], [0], [0]>} : vector<2x8x32xbf16>, vector<2x8x32xbf16>, vector<2x8x8xf32> -> vector<2x8x8xf32>
    "tpu.trace_stop"() : () -> ()
    %cst_40 = arith.constant 0.176776692 : f32
    %72 = vector.broadcast %cst_40 : f32 to vector<2x8x8xf32>
    %73 = arith.mulf %71, %72 : vector<2x8x8xf32>
    %cst_41 = arith.constant dense<0xFF800000> : vector<2x8xf32>
    %74 = vector.multi_reduction <maximumf>, %73, %cst_41 [2] : vector<2x8x8xf32> to vector<2x8xf32>
    %75 = vector.shape_cast %74 : vector<2x8xf32> to vector<2x8x1xf32>
    %76 = vector.broadcast %75 : vector<2x8x1xf32> to vector<2x8x8xf32>
    %77 = arith.subf %73, %76 : vector<2x8x8xf32>
    %78 = math.exp %77 : vector<2x8x8xf32>
    %cst_42 = arith.constant dense<0.000000e+00> : vector<2x8xf32>
    %79 = vector.multi_reduction <add>, %78, %cst_42 [2] : vector<2x8x8xf32> to vector<2x8xf32>
    %80 = vector.shape_cast %79 : vector<2x8xf32> to vector<2x8x1xf32>
    %81 = tpu.reciprocal %80 {approx = true} : vector<2x8x1xf32> -> vector<2x8x1xf32>
    %82 = arith.truncf %78 : vector<2x8x8xf32> to vector<2x8x8xbf16>
    "tpu.trace_start"() <{level = 10 : i32, message = "bqk,bkd->bqd"}> : () -> ()
    %cst_43 = arith.constant dense<0.000000e+00> : vector<2x8x32xf32>
    %83 = tpu.matmul %82, %70, %cst_43 {dimension_numbers = #tpu.dot_dimension_numbers<[2], [1], [1], [2], [0, 0, 0, 1, 1, 2], [0], [0]>} : vector<2x8x8xbf16>, vector<2x8x32xbf16>, vector<2x8x32xf32> -> vector<2x8x32xf32>
    "tpu.trace_stop"() : () -> ()
    %84 = vector.broadcast %81 : vector<2x8x1xf32> to vector<2x8x32xf32>
    %85 = arith.mulf %83, %84 : vector<2x8x32xf32>
    %86 = arith.truncf %85 : vector<2x8x32xf32> to vector<2x8x32xbf16>
    "tpu.trace_start"() <{level = 10 : i32, message = "hrd,hde->hre"}> : () -> ()
    %cst_44 = arith.constant dense<0.000000e+00> : vector<2x8x32xf32>
    %87 = tpu.matmul %86, %2, %cst_44 {dimension_numbers = #tpu.dot_dimension_numbers<[2], [1], [1], [2], [0, 0, 0, 1, 1, 2], [0], [0]>} : vector<2x8x32xbf16>, vector<2x32x32xbf16>, vector<2x8x32xf32> -> vector<2x8x32xf32>
    "tpu.trace_stop"() : () -> ()
    %88 = vector.broadcast %5 : vector<2x1x32xf32> to vector<2x8x32xf32>
    %89 = arith.addf %87, %88 : vector<2x8x32xf32>
    %90 = arith.truncf %21 : vector<2x8x32xf32> to vector<2x8x32xbf16>
    %91 = arith.truncf %89 : vector<2x8x32xf32> to vector<2x8x32xbf16>
    "tpu.trace_start"() <{level = 10 : i32, message = "bqd,bkd->bqk"}> : () -> ()
    %cst_45 = arith.constant dense<0.000000e+00> : vector<2x8x8xf32>
    %92 = tpu.matmul %90, %91, %cst_45 {dimension_numbers = #tpu.dot_dimension_numbers<[2], [2], [1], [1], [0, 0, 0, 1, 1, 1], [0], [0]>} : vector<2x8x32xbf16>, vector<2x8x32xbf16>, vector<2x8x8xf32> -> vector<2x8x8xf32>
    "tpu.trace_stop"() : () -> ()
    %cst_46 = arith.constant 0.176776692 : f32
    %93 = vector.broadcast %cst_46 : f32 to vector<2x8x8xf32>
    %94 = arith.mulf %92, %93 : vector<2x8x8xf32>
    %95 = arith.mulf %21, %21 : vector<2x8x32xf32>
    %cst_47 = arith.constant dense<0.000000e+00> : vector<2x8xf32>
    %96 = vector.multi_reduction <add>, %95, %cst_47 [2] : vector<2x8x32xf32> to vector<2x8xf32>
    %97 = vector.shape_cast %96 : vector<2x8xf32> to vector<2x8x1xf32>
    %cst_48 = arith.constant 0.176776692 : f32
    %98 = vector.broadcast %cst_48 : f32 to vector<2x8x1xf32>
    %99 = arith.mulf %97, %98 : vector<2x8x1xf32>
    %cst_49 = arith.constant dense<0xFF800000> : vector<2x8xf32>
    %100 = vector.multi_reduction <maximumf>, %94, %cst_49 [2] : vector<2x8x8xf32> to vector<2x8xf32>
    %101 = vector.shape_cast %100 : vector<2x8xf32> to vector<2x8x1xf32>
    %102 = arith.maximumf %101, %99 : vector<2x8x1xf32>
    %103 = vector.broadcast %102 : vector<2x8x1xf32> to vector<2x8x8xf32>
    %104 = arith.subf %94, %103 : vector<2x8x8xf32>
    %105 = math.exp %104 : vector<2x8x8xf32>
    %106 = arith.subf %99, %102 : vector<2x8x1xf32>
    %107 = math.exp %106 : vector<2x8x1xf32>
    %cst_50 = arith.constant dense<0.000000e+00> : vector<2x8xf32>
    %108 = vector.multi_reduction <add>, %105, %cst_50 [2] : vector<2x8x8xf32> to vector<2x8xf32>
    %109 = vector.shape_cast %108 : vector<2x8xf32> to vector<2x8x1xf32>
    %110 = arith.addf %109, %107 : vector<2x8x1xf32>
    %111 = tpu.reciprocal %110 {approx = true} : vector<2x8x1xf32> -> vector<2x8x1xf32>
    %112 = arith.truncf %105 : vector<2x8x8xf32> to vector<2x8x8xbf16>
    "tpu.trace_start"() <{level = 10 : i32, message = "bqk,bkd->bqd"}> : () -> ()
    %cst_51 = arith.constant dense<0.000000e+00> : vector<2x8x32xf32>
    %113 = tpu.matmul %112, %91, %cst_51 {dimension_numbers = #tpu.dot_dimension_numbers<[2], [1], [1], [2], [0, 0, 0, 1, 1, 2], [0], [0]>} : vector<2x8x8xbf16>, vector<2x8x32xbf16>, vector<2x8x32xf32> -> vector<2x8x32xf32>
    "tpu.trace_stop"() : () -> ()
    %114 = arith.mulf %107, %111 : vector<2x8x1xf32>
    %115 = vector.broadcast %111 : vector<2x8x1xf32> to vector<2x8x32xf32>
    %116 = arith.mulf %113, %115 : vector<2x8x32xf32>
    %117 = vector.broadcast %114 : vector<2x8x1xf32> to vector<2x8x32xf32>
    %118 = arith.mulf %117, %21 : vector<2x8x32xf32>
    %cst_52 = arith.constant dense<0.000000e+00> : vector<2x32xf32>
    %119 = vector.multi_reduction <add>, %118, %cst_52 [1] : vector<2x8x32xf32> to vector<2x32xf32>
    %120 = vector.shape_cast %119 : vector<2x32xf32> to vector<2x1x32xf32>
    %121 = vector.broadcast %120 : vector<2x1x32xf32> to vector<2x8x32xf32>
    %122 = arith.addf %116, %121 : vector<2x8x32xf32>
    %123 = vector.shape_cast %122 : vector<2x8x32xf32> to vector<2x1x8x32xf32>
    %124 = vector.extract_strided_slice %123 {offsets = [0, 0, 0, 0], sizes = [1, 1, 8, 32], strides = [1, 1, 1, 1]} : vector<2x1x8x32xf32> to vector<1x1x8x32xf32>
    %125 = vector.shape_cast %124 : vector<1x1x8x32xf32> to vector<1x8x32xf32>
    %c0_53 = arith.constant 0 : index
    %c0_54 = arith.constant 0 : index
    %c0_55 = arith.constant 0 : index
    %126 = vector.load %arg11[%c0_53, %c0_54, %c0_55] : memref<1x8x64xf32, #tpu.memory_space<vmem>>, vector<1x8x32xf32>
    tpu.vector_store %arg11[%c0_53, %c0_54, %c0_55], %125 {strides = array<i32>} : memref<1x8x64xf32, #tpu.memory_space<vmem>>, vector<1x8x32xf32>,
    %127 = vector.extract_strided_slice %123 {offsets = [1, 0, 0, 0], sizes = [1, 1, 8, 32], strides = [1, 1, 1, 1]} : vector<2x1x8x32xf32> to vector<1x1x8x32xf32>
    %128 = vector.shape_cast %127 : vector<1x1x8x32xf32> to vector<1x8x32xf32>
    %c0_56 = arith.constant 0 : index
    %c0_57 = arith.constant 0 : index
    %c32 = arith.constant 32 : index
    %129 = vector.load %arg11[%c0_56, %c0_57, %c32] : memref<1x8x64xf32, #tpu.memory_space<vmem>>, vector<1x8x32xf32>
    tpu.vector_store %arg11[%c0_56, %c0_57, %c32], %128 {strides = array<i32>} : memref<1x8x64xf32, #tpu.memory_space<vmem>>, vector<1x8x32xf32>,
    return
  }
  func.func @transform_0(%arg0: i32) -> (i32, i32, i32) {
    %c0_i32 = arith.constant 0 : i32
    %c0_i32_0 = arith.constant 0 : i32
    %c0_i32_1 = arith.constant 0 : i32
    return %arg0, %c0_i32, %c0_i32_0 : i32, i32, i32
  }
  func.func @transform_1(%arg0: i32) -> (i32, i32, i32) {
    %c0_i32 = arith.constant 0 : i32
    %c0_i32_0 = arith.constant 0 : i32
    %c0_i32_1 = arith.constant 0 : i32
    return %arg0, %c0_i32, %c0_i32_0 : i32, i32, i32
  }
  func.func @transform_2(%arg0: i32) -> (i32, i32, i32) {
    %c0_i32 = arith.constant 0 : i32
    %c0_i32_0 = arith.constant 0 : i32
    %c0_i32_1 = arith.constant 0 : i32
    return %arg0, %c0_i32, %c0_i32_0 : i32, i32, i32
  }
  func.func @transform_3(%arg0: i32) -> (i32, i32, i32) {
    %c0_i32 = arith.constant 0 : i32
    %c0_i32_0 = arith.constant 0 : i32
    %c0_i32_1 = arith.constant 0 : i32
    %c0_i32_2 = arith.constant 0 : i32
    return %c0_i32, %c0_i32_0, %c0_i32_1 : i32, i32, i32
  }
  func.func @transform_4(%arg0: i32) -> (i32, i32, i32) {
    %c0_i32 = arith.constant 0 : i32
    %c0_i32_0 = arith.constant 0 : i32
    %c0_i32_1 = arith.constant 0 : i32
    %c0_i32_2 = arith.constant 0 : i32
    return %c0_i32, %c0_i32_0, %c0_i32_1 : i32, i32, i32
  }
  func.func @transform_5(%arg0: i32) -> (i32, i32, i32) {
    %c0_i32 = arith.constant 0 : i32
    %c0_i32_0 = arith.constant 0 : i32
    %c0_i32_1 = arith.constant 0 : i32
    %c0_i32_2 = arith.constant 0 : i32
    return %c0_i32, %c0_i32_0, %c0_i32_1 : i32, i32, i32
  }
  func.func @transform_6(%arg0: i32) -> (i32, i32, i32) {
    %c0_i32 = arith.constant 0 : i32
    %c0_i32_0 = arith.constant 0 : i32
    %c0_i32_1 = arith.constant 0 : i32
    %c0_i32_2 = arith.constant 0 : i32
    return %c0_i32, %c0_i32_0, %c0_i32_1 : i32, i32, i32
  }
  func.func @transform_7(%arg0: i32) -> (i32, i32, i32) {
    %c0_i32 = arith.constant 0 : i32
    %c0_i32_0 = arith.constant 0 : i32
    %c0_i32_1 = arith.constant 0 : i32
    %c0_i32_2 = arith.constant 0 : i32
    return %c0_i32, %c0_i32_0, %c0_i32_1 : i32, i32, i32
  }
  func.func @transform_8(%arg0: i32) -> (i32, i32, i32) {
    %c0_i32 = arith.constant 0 : i32
    %c0_i32_0 = arith.constant 0 : i32
    %c0_i32_1 = arith.constant 0 : i32
    %c0_i32_2 = arith.constant 0 : i32
    return %c0_i32, %c0_i32_0, %c0_i32_1 : i32, i32, i32
  }
  func.func @transform_9(%arg0: i32) -> (i32, i32, i32) {
    %c0_i32 = arith.constant 0 : i32
    %c0_i32_0 = arith.constant 0 : i32
    %c0_i32_1 = arith.constant 0 : i32
    %c0_i32_2 = arith.constant 0 : i32
    return %c0_i32, %c0_i32_0, %c0_i32_1 : i32, i32, i32
  }
  func.func @transform_10(%arg0: i32) -> (i32, i32, i32) {
    %c0_i32 = arith.constant 0 : i32
    %c0_i32_0 = arith.constant 0 : i32
    %c0_i32_1 = arith.constant 0 : i32
    return %arg0, %c0_i32, %c0_i32_0 : i32, i32, i32
  }
}

</mosaic_0001>

<llo_original>
// kernel: tpu_custom_call.1
$region0: #{tpu_custom_call.1}
  #allocation0 [shape = 'u32[]', space=smem, size = 0x4, offset = 0x4, fixed_abs, tag = 'smem constant byte address 0x4 - core index']
  #allocation1 [shape = 'u32[72,128]{1,0:T(1,128)}', space=vmem, size = 0x9000, scoped, tag = 'internal scratch']
  %s0 = inlined_call_operand.hbm [shape: bf16[2,8,32], index: 0, kind: input, shape index: {}]
  %s1 = inlined_call_operand.hbm [shape: bf16[2,8,32], index: 1, kind: input, shape index: {}]
  %s2 = inlined_call_operand.hbm [shape: f32[2,1,8], index: 2, kind: input, shape index: {}]
  %s3 = inlined_call_operand.hbm [shape: bf16[2,8,32], index: 3, kind: input, shape index: {}]
  %s4 = inlined_call_operand.hbm [shape: bf16[2,32,32], index: 4, kind: input, shape index: {}]
  %s5 = inlined_call_operand.vmem [shape: f32[2,1,32], index: 5, kind: input, shape index: {}]
  %s6 = inlined_call_operand.hbm [shape: bf16[2,32,32], index: 6, kind: input, shape index: {}]
  %s7 = inlined_call_operand.vmem [shape: f32[2,1,32], index: 7, kind: input, shape index: {}]
  %s8 = inlined_call_operand.hbm [shape: bf16[2,32,32], index: 8, kind: input, shape index: {}]
  %s9 = inlined_call_operand.vmem [shape: f32[2,1,32], index: 9, kind: input, shape index: {}]
  %s10 = inlined_call_operand.hbm [shape: f32[2,8,64], index: 10, kind: output, shape index: {}]
  %s11 = sld [smem:[#allocation0]]
  $region101: #{tpu_custom_call.1} parent=0
    _
  %s13 = ssub.s32 1, %s11
  %s14 = scalar_select 0, %s13, %s11
  $region1: #{tpu_custom_call.1} parent=0
    #allocation2 [shape = 'u8[4096]{0}', space=vmem, size = 0x1000, scoped, tag = 'input window, operand 0']
    #allocation3 [shape = 's32[2]{0}', space=sflag, size = 0x8, scoped, tag = 'scoped memory for tpu_custom_call.1']
    #allocation4 [shape = 's32[2]{0}', space=sflag, size = 0x8, scoped, tag = 'scoped memory for tpu_custom_call.1']
    #allocation5 [shape = 'u8[4096]{0}', space=vmem, size = 0x1000, scoped, tag = 'input window, operand 1']
    #allocation6 [shape = 's32[2]{0}', space=sflag, size = 0x8, scoped, tag = 'scoped memory for tpu_custom_call.1']
    #allocation7 [shape = 'u8[1024]{0}', space=vmem, size = 0x400, scoped, tag = 'input window, operand 2']
    #allocation8 [shape = 'u8[4096]{0}', space=vmem, size = 0x1000, scoped, tag = 'input window, operand 3, single buffered']
    #allocation9 [shape = 's32[1]{0}', space=sflag, size = 0x4, scoped, tag = 'scoped memory for tpu_custom_call.1']
    #allocation10 [shape = 'u8[16384]{0}', space=vmem, size = 0x4000, scoped, tag = 'input window, operand 4, single buffered']
    #allocation11 [shape = 'u8[16384]{0}', space=vmem, size = 0x4000, scoped, tag = 'input window, operand 6, single buffered']
    #allocation12 [shape = 's32[1]{0}', space=sflag, size = 0x4, scoped, tag = 'scoped memory for tpu_custom_call.1']
    #allocation13 [shape = 'u8[16384]{0}', space=vmem, size = 0x4000, scoped, tag = 'input window, operand 8, single buffered']
    #allocation14 [shape = 'u8[8192]{0}', space=vmem, size = 0x2000, scoped, tag = 'output window, operand 0']
    %15 = vsyncpa [#allocation3], 0
    %s16 = scalar_lea.sflag [#allocation3], 1
    %17 = vsyncpa %s16, 0
    %18 = vsyncpa [#allocation6], 0
    %s19 = scalar_lea.sflag [#allocation6], 1
    %20 = vsyncpa %s19, 0
    %21 = vsyncpa [#allocation9], 0
    %22 = vsyncpa [#allocation12], 0
    %23 = vsyncpa [#allocation4], 0
    %s24 = scalar_lea.sflag [#allocation4], 1
    %25 = vsyncpa %s24, 0
    loop: start=0, step=1, limit=4
    $region2: #{tpu_custom_call.1} parent=1 // loop_pre_header
      _
    $region3: #{tpu_custom_call.1} parent=1 // loop_header
      %s27 = sphi 0, %s31
      %p28 = scmp.ge.s32.totalorder %s27, 4
      %s37 = sphi 0, %s39
      %s40 = sphi 0, %s37
      %s41 = sphi 0, %s40
      %s57 = sphi 0, %s41
      %s63 = sphi 0, %s65
      %s66 = sphi 0, %s63
      %s67 = sphi 0, %s66
      %s83 = sphi 0, %s67
      %s89 = sphi 0, %s91
      %s92 = sphi 0, %s89
      %s93 = sphi 0, %s92
      %s109 = sphi 0, %s93
      %s113 = sphi 0, %s113
      %s115 = sphi 0, %s113
      %s116 = sphi 0, %s115
      %s130 = sphi 0, %s116
      %s134 = sphi 0, %s134
      %s136 = sphi 0, %s134
      %s137 = sphi 0, %s136
      %s151 = sphi 0, %s137
      %s155 = sphi 0, %s155
      %s157 = sphi 0, %s155
      %s158 = sphi 0, %s157
      %s172 = sphi 0, %s158
      %s176 = sphi 0, %s176
      %s178 = sphi 0, %s176
      %s179 = sphi 0, %s178
      %s193 = sphi 0, %s179
      %s197 = sphi 0, %s197
      %s199 = sphi 0, %s197
      %s200 = sphi 0, %s199
      %s214 = sphi 0, %s200
      %s218 = sphi 0, %s218
      %s220 = sphi 0, %s218
      %s221 = sphi 0, %s220
      %s235 = sphi 0, %s221
      %s239 = sphi 0, %s239
      %s241 = sphi 0, %s239
      %s242 = sphi 0, %s241
      %s256 = sphi 0, %s242
      %s262 = sphi 0, %s264
      %s265 = sphi 0, %s262
      %s266 = sphi 0, %s265
      %s282 = sphi 0, %s266
    $region4: #{tpu_custom_call.1} parent=1 // loop_header_branch
      %30 = sbr.rel (%p28) target = $region8
    $region5: #{tpu_custom_call.1} parent=1 // loop_body
      %s32 = ssub.s32 %s27, 1
      %s33 = ssub.s32 %s27, 2
      %s34 = sadd.s32 %s27, 1
      %s35 = ssub.s32 %s27, %s34
      %p36 = scmp.eq.s32.totalorder %s35, 0
      %s38 = sadd.s32 %s37, 1
      %s39 = scalar_select %p36, %s37, %s38
      %p42 = pneg %p36
      %p43 = scmp.eq.s32.totalorder %s27, 1
      %p44 = por %p42, %p43
      %p45 = scmp.ne.s32.totalorder %s37, %s40
      %p46 = scmp.eq.s32.totalorder %s27, 0
      %p47 = por %p45, %p46
      %p48 = scmp.ne.s32.totalorder %s37, %s40
      %p49 = scmp.eq.s32.totalorder %s32, 1
      %p50 = por %p48, %p49
      %p51 = scmp.ne.s32.totalorder %s40, %s41
      %p52 = scmp.eq.s32.totalorder %s32, 0
      %p53 = por %p51, %p52
      %p54 = scmp.ne.s32.totalorder %s40, %s41
      %p55 = scmp.eq.s32.totalorder %s33, 1
      %p56 = por %p54, %p55
      %p58 = scmp.ne.s32.totalorder %s41, %s57
      %p59 = scmp.eq.s32.totalorder %s33, 0
      %p60 = por %p58, %p59
      %s61 = ssub.s32 %s27, %s34
      %p62 = scmp.eq.s32.totalorder %s61, 0
      %s64 = sadd.s32 %s63, 1
      %s65 = scalar_select %p62, %s63, %s64
      %p68 = pneg %p62
      %p69 = scmp.eq.s32.totalorder %s27, 1
      %p70 = por %p68, %p69
      %p71 = scmp.ne.s32.totalorder %s63, %s66
      %p72 = scmp.eq.s32.totalorder %s27, 0
      %p73 = por %p71, %p72
      %p74 = scmp.ne.s32.totalorder %s63, %s66
      %p75 = scmp.eq.s32.totalorder %s32, 1
      %p76 = por %p74, %p75
      %p77 = scmp.ne.s32.totalorder %s66, %s67
      %p78 = scmp.eq.s32.totalorder %s32, 0
      %p79 = por %p77, %p78
      %p80 = scmp.ne.s32.totalorder %s66, %s67
      %p81 = scmp.eq.s32.totalorder %s33, 1
      %p82 = por %p80, %p81
      %p84 = scmp.ne.s32.totalorder %s67, %s83
      %p85 = scmp.eq.s32.totalorder %s33, 0
      %p86 = por %p84, %p85
      %s87 = ssub.s32 %s27, %s34
      %p88 = scmp.eq.s32.totalorder %s87, 0
      %s90 = sadd.s32 %s89, 1
      %s91 = scalar_select %p88, %s89, %s90
      %p94 = pneg %p88
      %p95 = scmp.eq.s32.totalorder %s27, 1
      %p96 = por %p94, %p95
      %p97 = scmp.ne.s32.totalorder %s89, %s92
      %p98 = scmp.eq.s32.totalorder %s27, 0
      %p99 = por %p97, %p98
      %p100 = scmp.ne.s32.totalorder %s89, %s92
      %p101 = scmp.eq.s32.totalorder %s32, 1
      %p102 = por %p100, %p101
      %p103 = scmp.ne.s32.totalorder %s92, %s93
      %p104 = scmp.eq.s32.totalorder %s32, 0
      %p105 = por %p103, %p104
      %p106 = scmp.ne.s32.totalorder %s92, %s93
      %p107 = scmp.eq.s32.totalorder %s33, 1
      %p108 = por %p106, %p107
      %p110 = scmp.ne.s32.totalorder %s93, %s109
      %p111 = scmp.eq.s32.totalorder %s33, 0
      %p112 = por %p110, %p111
      %s114 = sadd.s32 %s113, 1
      %p117 = scmp.eq.s32.totalorder %s27, 1
      %p118 = scmp.ne.s32.totalorder %s113, %s115
      %p119 = scmp.eq.s32.totalorder %s27, 0
      %p120 = por %p118, %p119
      %p121 = scmp.ne.s32.totalorder %s113, %s115
      %p122 = scmp.eq.s32.totalorder %s32, 1
      %p123 = por %p121, %p122
      %p124 = scmp.ne.s32.totalorder %s115, %s116
      %p125 = scmp.eq.s32.totalorder %s32, 0
      %p126 = por %p124, %p125
      %p127 = scmp.ne.s32.totalorder %s115, %s116
      %p128 = scmp.eq.s32.totalorder %s33, 1
      %p129 = por %p127, %p128
      %p131 = scmp.ne.s32.totalorder %s116, %s130
      %p132 = scmp.eq.s32.totalorder %s33, 0
      %p133 = por %p131, %p132
      %s135 = sadd.s32 %s134, 1
      %p138 = scmp.eq.s32.totalorder %s27, 1
      %p139 = scmp.ne.s32.totalorder %s134, %s136
      %p140 = scmp.eq.s32.totalorder %s27, 0
      %p141 = por %p139, %p140
      %p142 = scmp.ne.s32.totalorder %s134, %s136
      %p143 = scmp.eq.s32.totalorder %s32, 1
      %p144 = por %p142, %p143
      %p145 = scmp.ne.s32.totalorder %s136, %s137
      %p146 = scmp.eq.s32.totalorder %s32, 0
      %p147 = por %p145, %p146
      %p148 = scmp.ne.s32.totalorder %s136, %s137
      %p149 = scmp.eq.s32.totalorder %s33, 1
      %p150 = por %p148, %p149
      %p152 = scmp.ne.s32.totalorder %s137, %s151
      %p153 = scmp.eq.s32.totalorder %s33, 0
      %p154 = por %p152, %p153
      %s156 = sadd.s32 %s155, 1
      %p159 = scmp.eq.s32.totalorder %s27, 1
      %p160 = scmp.ne.s32.totalorder %s155, %s157
      %p161 = scmp.eq.s32.totalorder %s27, 0
      %p162 = por %p160, %p161
      %p163 = scmp.ne.s32.totalorder %s155, %s157
      %p164 = scmp.eq.s32.totalorder %s32, 1
      %p165 = por %p163, %p164
      %p166 = scmp.ne.s32.totalorder %s157, %s158
      %p167 = scmp.eq.s32.totalorder %s32, 0
      %p168 = por %p166, %p167
      %p169 = scmp.ne.s32.totalorder %s157, %s158
      %p170 = scmp.eq.s32.totalorder %s33, 1
      %p171 = por %p169, %p170
      %p173 = scmp.ne.s32.totalorder %s158, %s172
      %p174 = scmp.eq.s32.totalorder %s33, 0
      %p175 = por %p173, %p174
      %s177 = sadd.s32 %s176, 1
      %p180 = scmp.eq.s32.totalorder %s27, 1
      %p181 = scmp.ne.s32.totalorder %s176, %s178
      %p182 = scmp.eq.s32.totalorder %s27, 0
      %p183 = por %p181, %p182
      %p184 = scmp.ne.s32.totalorder %s176, %s178
      %p185 = scmp.eq.s32.totalorder %s32, 1
      %p186 = por %p184, %p185
      %p187 = scmp.ne.s32.totalorder %s178, %s179
      %p188 = scmp.eq.s32.totalorder %s32, 0
      %p189 = por %p187, %p188
      %p190 = scmp.ne.s32.totalorder %s178, %s179
      %p191 = scmp.eq.s32.totalorder %s33, 1
      %p192 = por %p190, %p191
      %p194 = scmp.ne.s32.totalorder %s179, %s193
      %p195 = scmp.eq.s32.totalorder %s33, 0
      %p196 = por %p194, %p195
      %s198 = sadd.s32 %s197, 1
      %p201 = scmp.eq.s32.totalorder %s27, 1
      %p202 = scmp.ne.s32.totalorder %s197, %s199
      %p203 = scmp.eq.s32.totalorder %s27, 0
      %p204 = por %p202, %p203
      %p205 = scmp.ne.s32.totalorder %s197, %s199
      %p206 = scmp.eq.s32.totalorder %s32, 1
      %p207 = por %p205, %p206
      %p208 = scmp.ne.s32.totalorder %s199, %s200
      %p209 = scmp.eq.s32.totalorder %s32, 0
      %p210 = por %p208, %p209
      %p211 = scmp.ne.s32.totalorder %s199, %s200
      %p212 = scmp.eq.s32.totalorder %s33, 1
      %p213 = por %p211, %p212
      %p215 = scmp.ne.s32.totalorder %s200, %s214
      %p216 = scmp.eq.s32.totalorder %s33, 0
      %p217 = por %p215, %p216
      %s219 = sadd.s32 %s218, 1
      %p222 = scmp.eq.s32.totalorder %s27, 1
      %p223 = scmp.ne.s32.totalorder %s218, %s220
      %p224 = scmp.eq.s32.totalorder %s27, 0
      %p225 = por %p223, %p224
      %p226 = scmp.ne.s32.totalorder %s218, %s220
      %p227 = scmp.eq.s32.totalorder %s32, 1
      %p228 = por %p226, %p227
      %p229 = scmp.ne.s32.totalorder %s220, %s221
      %p230 = scmp.eq.s32.totalorder %s32, 0
      %p231 = por %p229, %p230
      %p232 = scmp.ne.s32.totalorder %s220, %s221
      %p233 = scmp.eq.s32.totalorder %s33, 1
      %p234 = por %p232, %p233
      %p236 = scmp.ne.s32.totalorder %s221, %s235
      %p237 = scmp.eq.s32.totalorder %s33, 0
      %p238 = por %p236, %p237
      %s240 = sadd.s32 %s239, 1
      %p243 = scmp.eq.s32.totalorder %s27, 1
      %p244 = scmp.ne.s32.totalorder %s239, %s241
      %p245 = scmp.eq.s32.totalorder %s27, 0
      %p246 = por %p244, %p245
      %p247 = scmp.ne.s32.totalorder %s239, %s241
      %p248 = scmp.eq.s32.totalorder %s32, 1
      %p249 = por %p247, %p248
      %p250 = scmp.ne.s32.totalorder %s241, %s242
      %p251 = scmp.eq.s32.totalorder %s32, 0
      %p252 = por %p250, %p251
      %p253 = scmp.ne.s32.totalorder %s241, %s242
      %p254 = scmp.eq.s32.totalorder %s33, 1
      %p255 = por %p253, %p254
      %p257 = scmp.ne.s32.totalorder %s242, %s256
      %p258 = scmp.eq.s32.totalorder %s33, 0
      %p259 = por %p257, %p258
      %s260 = ssub.s32 %s27, %s34
      %p261 = scmp.eq.s32.totalorder %s260, 0
      %s263 = sadd.s32 %s262, 1
      %s264 = scalar_select %p261, %s262, %s263
      %p267 = pneg %p261
      %p268 = scmp.eq.s32.totalorder %s27, 1
      %p269 = por %p267, %p268
      %p270 = scmp.ne.s32.totalorder %s262, %s265
      %p271 = scmp.eq.s32.totalorder %s27, 0
      %p272 = por %p270, %p271
      %p273 = scmp.ne.s32.totalorder %s262, %s265
      %p274 = scmp.eq.s32.totalorder %s32, 1
      %p275 = por %p273, %p274
      %p276 = scmp.ne.s32.totalorder %s265, %s266
      %p277 = scmp.eq.s32.totalorder %s32, 0
      %p278 = por %p276, %p277
      %p279 = scmp.ne.s32.totalorder %s265, %s266
      %p280 = scmp.eq.s32.totalorder %s33, 1
      %p281 = por %p279, %p280
      %p283 = scmp.ne.s32.totalorder %s266, %s282
      %p284 = scmp.eq.s32.totalorder %s33, 0
      %p285 = por %p283, %p284
      %p286 = scmp.le.s32.totalorder 1, %s27
      %p287 = scmp.lt.s32.totalorder %s27, 3
      %p288 = pnand %p286, %p287
      %p289 = pneg %p288
      // Predicated region
      $region9: #{tpu_custom_call.1} parent=5 // pred_check
        _
      $region10: #{tpu_custom_call.1} parent=5 // pred_check_branch
        %291 = sbr.rel (%p288) target = $region12
      $region11: #{tpu_custom_call.1} parent=5 // pred_region
        %s292 = ssub.s32 %s27, 1
        // Predicated region
        $region13: #{tpu_custom_call.1} parent=11 // pred_check
          %p293 = pneg %p126
        $region14: #{tpu_custom_call.1} parent=11 // pred_check_branch
          %295 = sbr.rel (%p293) target = $region16
        $region15: #{tpu_custom_call.1} parent=11 // pred_region
          %297 = vsyncadd [#allocation9], 0
          %s298 = sshll.u32 %s3, 4
          %s299 = int_to_ptr.hbm [resolvable:$true] %s298
          %s300 = sshll.u32 [#allocation8], 4
          %s301 = int_to_ptr.vmem [resolvable:$true] %s300
          %306 = dma.hbm_to_vmem [thread:$0]  %s299, 128, %s301, [#allocation9], 64, 64, 4
        $region16: #{tpu_custom_call.1} parent=11 // pred_fallthru
          _
        // Predicated region
        $region17: #{tpu_custom_call.1} parent=11 // pred_check
          %p307 = pneg %p147
        $region18: #{tpu_custom_call.1} parent=11 // pred_check_branch
          %309 = sbr.rel (%p307) target = $region20
        $region19: #{tpu_custom_call.1} parent=11 // pred_region
          %311 = vsyncadd [#allocation9], 0
          %s312 = sshll.u32 %s4, 4
          %s313 = int_to_ptr.hbm [resolvable:$true] %s312
          %s314 = sshll.u32 [#allocation10], 4
          %s315 = int_to_ptr.vmem [resolvable:$true] %s314
          %320 = dma.hbm_to_vmem [thread:$0]  %s313, 512, %s315, [#allocation9], 64, 64, 4
        $region20: #{tpu_custom_call.1} parent=11 // pred_fallthru
          _
        // Predicated region
        $region21: #{tpu_custom_call.1} parent=11 // pred_check
          %p321 = pneg %p168
        $region22: #{tpu_custom_call.1} parent=11 // pred_check_branch
          %323 = sbr.rel (%p321) target = $region24
        $region23: #{tpu_custom_call.1} parent=11 // pred_region
          _
        $region24: #{tpu_custom_call.1} parent=11 // pred_fallthru
          _
        // Predicated region
        $region25: #{tpu_custom_call.1} parent=11 // pred_check
          %p324 = pneg %p189
        $region26: #{tpu_custom_call.1} parent=11 // pred_check_branch
          %326 = sbr.rel (%p324) target = $region28
        $region27: #{tpu_custom_call.1} parent=11 // pred_region
          %328 = vsyncadd [#allocation12], 0
          %s329 = sshll.u32 %s6, 4
          %s330 = int_to_ptr.hbm [resolvable:$true] %s329
          %s331 = sshll.u32 [#allocation11], 4
          %s332 = int_to_ptr.vmem [resolvable:$true] %s331
          %337 = dma.hbm_to_vmem [thread:$0]  %s330, 512, %s332, [#allocation12], 64, 64, 4
        $region28: #{tpu_custom_call.1} parent=11 // pred_fallthru
          _
        // Predicated region
        $region29: #{tpu_custom_call.1} parent=11 // pred_check
          %p338 = pneg %p210
        $region30: #{tpu_custom_call.1} parent=11 // pred_check_branch
          %340 = sbr.rel (%p338) target = $region32
        $region31: #{tpu_custom_call.1} parent=11 // pred_region
          _
        $region32: #{tpu_custom_call.1} parent=11 // pred_fallthru
          _
        // Predicated region
        $region33: #{tpu_custom_call.1} parent=11 // pred_check
          %p341 = pneg %p231
        $region34: #{tpu_custom_call.1} parent=11 // pred_check_branch
          %343 = sbr.rel (%p341) target = $region36
        $region35: #{tpu_custom_call.1} parent=11 // pred_region
          %345 = vsyncadd [#allocation12], 0
          %s346 = sshll.u32 %s8, 4
          %s347 = int_to_ptr.hbm [resolvable:$true] %s346
          %s348 = sshll.u32 [#allocation13], 4
          %s349 = int_to_ptr.vmem [resolvable:$true] %s348
          %354 = dma.hbm_to_vmem [thread:$0]  %s347, 512, %s349, [#allocation12], 64, 64, 4
        $region36: #{tpu_custom_call.1} parent=11 // pred_fallthru
          _
        // Predicated region
        $region37: #{tpu_custom_call.1} parent=11 // pred_check
          %p355 = pneg %p252
        $region38: #{tpu_custom_call.1} parent=11 // pred_check_branch
          %357 = sbr.rel (%p355) target = $region40
        $region39: #{tpu_custom_call.1} parent=11 // pred_region
          _
        $region40: #{tpu_custom_call.1} parent=11 // pred_fallthru
          _
      $region12: #{tpu_custom_call.1} parent=5 // pred_fallthru
        _
      %p358 = scmp.lt.s32.totalorder %s27, 2
      // Predicated region
      $region41: #{tpu_custom_call.1} parent=5 // pred_check
        %p359 = pneg %p358
      $region42: #{tpu_custom_call.1} parent=5 // pred_check_branch
        %361 = sbr.rel (%p359) target = $region44
      $region43: #{tpu_custom_call.1} parent=5 // pred_region
        // Predicated region
        $region45: #{tpu_custom_call.1} parent=43 // pred_check
          %p362 = pneg %p47
        $region46: #{tpu_custom_call.1} parent=43 // pred_check_branch
          %364 = sbr.rel (%p362) target = $region48
        $region47: #{tpu_custom_call.1} parent=43 // pred_region
          %s365 = sand.u32 %s37, 1
          %s366 = scalar_lea.sflag [#allocation3], %s365
          %s367 = sand.u32 %s37, 1
          %s368 = smul.addr %s367, 4
          %s369 = scalar_lea.vmem [#allocation2], %s368
          %371 = vsyncadd %s366, 0
          %s372 = smul.addr %s27, 4
          %s373 = scalar_lea.hbm %s0, %s372
          %s375 = sshll.u32 %s373, 4
          %s376 = int_to_ptr.hbm [resolvable:$true] %s375
          %s377 = sshll.u32 %s369, 4
          %s378 = int_to_ptr.vmem [resolvable:$true] %s377
          %380 = dma.hbm_to_vmem [thread:$0]  %s376, 64, %s378, %s366
        $region48: #{tpu_custom_call.1} parent=43 // pred_fallthru
          _
        // Predicated region
        $region49: #{tpu_custom_call.1} parent=43 // pred_check
          %p381 = pneg %p73
        $region50: #{tpu_custom_call.1} parent=43 // pred_check_branch
          %383 = sbr.rel (%p381) target = $region52
        $region51: #{tpu_custom_call.1} parent=43 // pred_region
          %s384 = sand.u32 %s27, 1
          %s385 = scalar_lea.sflag [#allocation6], %s384
          %s386 = sand.u32 %s63, 1
          %s387 = smul.addr %s386, 4
          %s388 = scalar_lea.vmem [#allocation5], %s387
          %390 = vsyncadd %s385, 0
          %s391 = smul.addr %s27, 4
          %s392 = scalar_lea.hbm %s1, %s391
          %s394 = sshll.u32 %s392, 4
          %s395 = int_to_ptr.hbm [resolvable:$true] %s394
          %s396 = sshll.u32 %s388, 4
          %s397 = int_to_ptr.vmem [resolvable:$true] %s396
          %399 = dma.hbm_to_vmem [thread:$0]  %s395, 64, %s397, %s385
        $region52: #{tpu_custom_call.1} parent=43 // pred_fallthru
          _
        // Predicated region
        $region53: #{tpu_custom_call.1} parent=43 // pred_check
          %p400 = pneg %p99
        $region54: #{tpu_custom_call.1} parent=43 // pred_check_branch
          %402 = sbr.rel (%p400) target = $region56
        $region55: #{tpu_custom_call.1} parent=43 // pred_region
          %s403 = sand.u32 %s27, 1
          %s404 = scalar_lea.sflag [#allocation6], %s403
          %s405 = sand.u32 %s89, 1
          %s406 = scalar_lea.vmem [#allocation7], %s405
          %408 = vsyncadd %s404, 0
          %s409 = scalar_lea.hbm %s2, %s27
          %s411 = sshll.u32 %s409, 4
          %s412 = int_to_ptr.hbm [resolvable:$true] %s411
          %s413 = sshll.u32 %s406, 4
          %s414 = int_to_ptr.vmem [resolvable:$true] %s413
          %416 = dma.hbm_to_vmem [thread:$0]  %s412, 16, %s414, %s404
        $region56: #{tpu_custom_call.1} parent=43 // pred_fallthru
          _
      $region44: #{tpu_custom_call.1} parent=5 // pred_fallthru
        _
      %p417 = scmp.le.s32.totalorder 1, %s27
      %p418 = scmp.lt.s32.totalorder %s27, 3
      %p419 = pnand %p417, %p418
      %p420 = pneg %p419
      // Predicated region
      $region57: #{tpu_custom_call.1} parent=5 // pred_check
        _
      $region58: #{tpu_custom_call.1} parent=5 // pred_check_branch
        %422 = sbr.rel (%p419) target = $region60
      $region59: #{tpu_custom_call.1} parent=5 // pred_region
        %s423 = ssub.s32 %s27, 1
        %s424 = sand.u32 %s40, 1
        %s425 = scalar_lea.sflag [#allocation3], %s424
        %s426 = sand.u32 %s40, 1
        %s427 = smul.addr %s426, 4
        %s428 = scalar_lea.vmem [#allocation2], %s427
        // Predicated region
        $region61: #{tpu_custom_call.1} parent=59 // pred_check
          %p429 = pneg %p53
        $region62: #{tpu_custom_call.1} parent=59 // pred_check_branch
          %431 = sbr.rel (%p429) target = $region64
        $region63: #{tpu_custom_call.1} parent=59 // pred_region
          %433 = dma.done %s425, 64
        $region64: #{tpu_custom_call.1} parent=59 // pred_fallthru
          _
        %s434 = sand.u32 %s32, 1
        %s435 = scalar_lea.sflag [#allocation6], %s434
        %s436 = sand.u32 %s66, 1
        %s437 = smul.addr %s436, 4
        %s438 = scalar_lea.vmem [#allocation5], %s437
        // Predicated region
        $region65: #{tpu_custom_call.1} parent=59 // pred_check
          %p439 = pneg %p79
        $region66: #{tpu_custom_call.1} parent=59 // pred_check_branch
          %441 = sbr.rel (%p439) target = $region68
        $region67: #{tpu_custom_call.1} parent=59 // pred_region
          %443 = dma.done %s435, 64
        $region68: #{tpu_custom_call.1} parent=59 // pred_fallthru
          _
        %s444 = sand.u32 %s32, 1
        %s445 = scalar_lea.sflag [#allocation6], %s444
        %s446 = sand.u32 %s92, 1
        %s447 = scalar_lea.vmem [#allocation7], %s446
        // Predicated region
        $region69: #{tpu_custom_call.1} parent=59 // pred_check
          %p448 = pneg %p105
        $region70: #{tpu_custom_call.1} parent=59 // pred_check_branch
          %450 = sbr.rel (%p448) target = $region72
        $region71: #{tpu_custom_call.1} parent=59 // pred_region
          %452 = dma.done %s445, 16
        $region72: #{tpu_custom_call.1} parent=59 // pred_fallthru
          _
        // Predicated region
        $region73: #{tpu_custom_call.1} parent=59 // pred_check
          %p453 = pneg %p126
        $region74: #{tpu_custom_call.1} parent=59 // pred_check_branch
          %455 = sbr.rel (%p453) target = $region76
        $region75: #{tpu_custom_call.1} parent=59 // pred_region
          %457 = dma.done [#allocation9], 128
        $region76: #{tpu_custom_call.1} parent=59 // pred_fallthru
          _
        // Predicated region
        $region77: #{tpu_custom_call.1} parent=59 // pred_check
          %p458 = pneg %p147
        $region78: #{tpu_custom_call.1} parent=59 // pred_check_branch
          %460 = sbr.rel (%p458) target = $region80
        $region79: #{tpu_custom_call.1} parent=59 // pred_region
          %462 = dma.done [#allocation9], 512
        $region80: #{tpu_custom_call.1} parent=59 // pred_fallthru
          _
        // Predicated region
        $region81: #{tpu_custom_call.1} parent=59 // pred_check
          %p463 = pneg %p189
        $region82: #{tpu_custom_call.1} parent=59 // pred_check_branch
          %465 = sbr.rel (%p463) target = $region84
        $region83: #{tpu_custom_call.1} parent=59 // pred_region
          %467 = dma.done [#allocation12], 512
        $region84: #{tpu_custom_call.1} parent=59 // pred_fallthru
          _
        // Predicated region
        $region85: #{tpu_custom_call.1} parent=59 // pred_check
          %p468 = pneg %p231
        $region86: #{tpu_custom_call.1} parent=59 // pred_check_branch
          %470 = sbr.rel (%p468) target = $region88
        $region87: #{tpu_custom_call.1} parent=59 // pred_region
          %472 = dma.done [#allocation12], 512
        $region88: #{tpu_custom_call.1} parent=59 // pred_fallthru
          _
        %s473 = sand.u32 %s40, 1
        %s474 = scalar_lea.sflag [#allocation3], %s473
        %s475 = sand.u32 %s40, 1
        %s476 = smul.addr %s475, 4
        %s477 = scalar_lea.vmem [#allocation2], %s476
        %p478 = pneg %p53
        %p479 = pneg %p50
        %s480 = sand.u32 %s32, 1
        %s481 = scalar_lea.sflag [#allocation6], %s480
        %s482 = sand.u32 %s66, 1
        %s483 = smul.addr %s482, 4
        %s484 = scalar_lea.vmem [#allocation5], %s483
        %p485 = pneg %p79
        %p486 = pneg %p76
        %s487 = sand.u32 %s32, 1
        %s488 = scalar_lea.sflag [#allocation6], %s487
        %s489 = sand.u32 %s92, 1
        %s490 = scalar_lea.vmem [#allocation7], %s489
        %p491 = pneg %p105
        %p492 = pneg %p102
        %p493 = pneg %p126
        %p494 = pneg %p123
        %p495 = pneg %p147
        %p496 = pneg %p144
        %p497 = pneg %p168
        %p498 = pneg %p165
        %p499 = pneg %p189
        %p500 = pneg %p186
        %p501 = pneg %p210
        %p502 = pneg %p207
        %p503 = pneg %p231
        %p504 = pneg %p228
        %p505 = pneg %p252
        %p506 = pneg %p249
        %p507 = pneg %p278
        %p508 = pneg %p275
        %s509 = sand.u32 %s265, 1
        %s510 = scalar_lea.sflag [#allocation4], %s509
        %s511 = sand.u32 %s265, 1
        %s512 = smul.addr %s511, 8
        %s513 = scalar_lea.vmem [#allocation14], %s512
        %v515 = vld [vmem:[#allocation10] sm:$0xf]
        %v516 = vld [vmem:[#allocation10 + $0x4] sm:$0xf]
        %v517 = vld [vmem:[#allocation10 + $0x8] sm:$0xf]
        %v518 = vld [vmem:[#allocation10 + $0xc] sm:$0xf]
        %v519 = vld [vmem:[#allocation10 + $0x10] sm:$0xf]
        %v520 = vld [vmem:[#allocation10 + $0x14] sm:$0xf]
        %v521 = vld [vmem:[#allocation10 + $0x18] sm:$0xf]
        %v522 = vld [vmem:[#allocation10 + $0x1c] sm:$0xf]
        %v523 = vld [vmem:[#allocation11] sm:$0xf]
        %v524 = vld [vmem:[#allocation11 + $0x4] sm:$0xf]
        %v525 = vld [vmem:[#allocation11 + $0x8] sm:$0xf]
        %v526 = vld [vmem:[#allocation11 + $0xc] sm:$0xf]
        %v527 = vld [vmem:[#allocation11 + $0x10] sm:$0xf]
        %v528 = vld [vmem:[#allocation11 + $0x14] sm:$0xf]
        %v529 = vld [vmem:[#allocation11 + $0x18] sm:$0xf]
        %v530 = vld [vmem:[#allocation11 + $0x1c] sm:$0xf]
        %v531 = vld [vmem:[#allocation13] sm:$0xf]
        %v532 = vld [vmem:[#allocation13 + $0x4] sm:$0xf]
        %v533 = vld [vmem:[#allocation13 + $0x8] sm:$0xf]
        %v534 = vld [vmem:[#allocation13 + $0xc] sm:$0xf]
        %v535 = vld [vmem:[#allocation13 + $0x10] sm:$0xf]
        %v536 = vld [vmem:[#allocation13 + $0x14] sm:$0xf]
        %v537 = vld [vmem:[#allocation13 + $0x18] sm:$0xf]
        %v538 = vld [vmem:[#allocation13 + $0x1c] sm:$0xf]
        %v539 = vld [vmem:[%s5] sm:$0x1]
        %v540 = vld [vmem:[%s5 + $0x1] sm:$0x1]
        %v541 = vld [vmem:[%s7] sm:$0x1]
        %v542 = vld [vmem:[%s7 + $0x1] sm:$0x1]
        %v543 = vld [vmem:[%s9] sm:$0x1]
        %v544 = vld [vmem:[%s9 + $0x1] sm:$0x1]
        %v545 = vld [vmem:[%s428] sm:$0xf]
        %v548 = vperm.slane %v539, 0
        %v549 = vperm.slane %v540, 0
        %v556 = vunpack.c.l.b16 %v515
        %v557 = vunpack.c.l.b16 %v516
        %v558 = vunpack.c.l.b16 %v517
        %v559 = vunpack.c.l.b16 %v518
        %v560 = vpack.c.b16 %v557, %v556
        %v561 = vpack.c.b16 %v559, %v558
        %vm564 = vcmask 261120
        %v566 = vsel %vm564, %v545, 0
        %568 = vmatpush.bf16.msra.mxu0 0
        %569 = vmatpush.bf16.msra.mxu0 0
        %570 = vmatpush.bf16.msra.mxu0 0
        %571 = vmatpush.bf16.msra.mxu0 0
        %572 = vmatpush.bf16.msra.mxu0 0
        %573 = vmatpush.bf16.msra.mxu0 0
        %574 = vmatpush.bf16.msra.mxu0 %v561
        %575 = vmatpush.bf16.msra.mxu0 %v560
        %576 = vmatmul.bf16.gmra.mxu0 %v566
        %v577 = vpop.f32.mrf.mxu0
        %v578 = vadd.f32 %v548, %v577
        %v579 = vpop.f32.mrf.mxu0
        %580 = vdwg.mxu0
        %v585 = vunpack.c.l.b16 %v519
        %v586 = vunpack.c.l.b16 %v520
        %v587 = vunpack.c.l.b16 %v521
        %v588 = vunpack.c.l.b16 %v522
        %v589 = vpack.c.b16 %v586, %v585
        %v590 = vpack.c.b16 %v588, %v587
        %593 = vmatpush.bf16.msra.mxu0 0
        %594 = vmatpush.bf16.msra.mxu0 0
        %595 = vmatpush.bf16.msra.mxu0 0
        %596 = vmatpush.bf16.msra.mxu0 0
        %597 = vmatpush.bf16.msra.mxu0 0
        %598 = vmatpush.bf16.msra.mxu0 0
        %599 = vmatpush.bf16.msra.mxu0 %v590
        %600 = vmatpush.bf16.msra.mxu0 %v589
        %601 = vmatmul.bf16.gmra.mxu0 %v566
        %v602 = vpop.f32.mrf.mxu0
        %v603 = vadd.f32 %v549, %v602
        %v604 = vpop.f32.mrf.mxu0
        %605 = vdwg.mxu0
        %v606 = vld [vmem:[%s438] sm:$0xf]
        %v609 = vperm.slane %v543, 0
        %v610 = vperm.slane %v544, 0
        %v617 = vunpack.c.l.b16 %v531
        %v618 = vunpack.c.l.b16 %v532
        %v619 = vunpack.c.l.b16 %v533
        %v620 = vunpack.c.l.b16 %v534
        %v621 = vpack.c.b16 %v618, %v617
        %v622 = vpack.c.b16 %v620, %v619
        %v626 = vsel %vm564, %v606, 0
        %628 = vmatpush.bf16.msra.mxu0 0
        %629 = vmatpush.bf16.msra.mxu0 0
        %630 = vmatpush.bf16.msra.mxu0 0
        %631 = vmatpush.bf16.msra.mxu0 0
        %632 = vmatpush.bf16.msra.mxu0 0
        %633 = vmatpush.bf16.msra.mxu0 0
        %634 = vmatpush.bf16.msra.mxu0 %v622
        %635 = vmatpush.bf16.msra.mxu0 %v621
        %636 = vmatmul.bf16.gmra.mxu0 %v626
        %v637 = vpop.f32.mrf.mxu0
        %v638 = vadd.f32 %v609, %v637
        %v639 = vpop.f32.mrf.mxu0
        %640 = vdwg.mxu0
        %v645 = vunpack.c.l.b16 %v535
        %v646 = vunpack.c.l.b16 %v536
        %v647 = vunpack.c.l.b16 %v537
        %v648 = vunpack.c.l.b16 %v538
        %v649 = vpack.c.b16 %v646, %v645
        %v650 = vpack.c.b16 %v648, %v647
        %653 = vmatpush.bf16.msra.mxu0 0
        %654 = vmatpush.bf16.msra.mxu0 0
        %655 = vmatpush.bf16.msra.mxu0 0
        %656 = vmatpush.bf16.msra.mxu0 0
        %657 = vmatpush.bf16.msra.mxu0 0
        %658 = vmatpush.bf16.msra.mxu0 0
        %659 = vmatpush.bf16.msra.mxu0 %v650
        %660 = vmatpush.bf16.msra.mxu0 %v649
        %661 = vmatmul.bf16.gmra.mxu0 %v626
        %v662 = vpop.f32.mrf.mxu0
        %v663 = vadd.f32 %v610, %v662
        %v664 = vpop.f32.mrf.mxu0
        %665 = vdwg.mxu0
        %v666 = vld [vmem:[#allocation8] sm:$0xf]
        %v667 = vld [vmem:[#allocation8 + $0x4] sm:$0xf]
        %v668 = vld [vmem:[%s447] sm:$0x1]
        %v669 = vunpack.c.l.bf16 %v666
        %v670 = vunpack.c.l.bf16 %v667
        %v671 = vpack.c.bf16 %v578, %v578
        %v672 = vpack.c.bf16 %v603, %v603
        %v674 = vsel %vm564, %v666, 0
        %v677 = vsel %vm564, %v671, 0
        %679 = vmatpush.bf16.xpose.msra.mxu0 0
        %680 = vmatpush.bf16.xpose.msra.mxu0 0
        %681 = vmatpush.bf16.xpose.msra.mxu0 0
        %682 = vmatpush.bf16.xpose.msra.mxu0 0
        %683 = vmatpush.bf16.xpose.msra.mxu0 0
        %684 = vmatpush.bf16.xpose.msra.mxu0 0
        %685 = vmatpush.bf16.xpose.msra.mxu0 0
        %686 = vmatpush.bf16.xpose.msra.mxu0 %v677
        %687 = vmatmul.bf16.gmra.mxu0 %v674
        %v688 = vpop.f32.mrf.mxu0
        %v689 = vadd.f32 0.0, %v688
        %v690 = vpop.f32.mrf.mxu0
        %691 = vdwg.mxu0
        %v693 = vsel %vm564, %v667, 0
        %v696 = vsel %vm564, %v672, 0
        %698 = vmatpush.bf16.xpose.msra.mxu0 0
        %699 = vmatpush.bf16.xpose.msra.mxu0 0
        %700 = vmatpush.bf16.xpose.msra.mxu0 0
        %701 = vmatpush.bf16.xpose.msra.mxu0 0
        %702 = vmatpush.bf16.xpose.msra.mxu0 0
        %703 = vmatpush.bf16.xpose.msra.mxu0 0
        %704 = vmatpush.bf16.xpose.msra.mxu0 0
        %705 = vmatpush.bf16.xpose.msra.mxu0 %v696
        %706 = vmatmul.bf16.gmra.mxu0 %v693
        %v707 = vpop.f32.mrf.mxu0
        %v708 = vadd.f32 0.0, %v707
        %v709 = vpop.f32.mrf.mxu0
        %710 = vdwg.mxu0
        %v711 = vmul.f32 %v689, 0.17677669
        %v712 = vmul.f32 %v708, 0.17677669
        %v714 = vperm.slane %v668, 0
        %v716 = vadd.f32 %v711, %v714
        %v717 = vadd.f32 %v712, %v714
        %v718 = vmul.f32 %v669, %v669
        %v719 = vmul.f32 %v670, %v670
        %v720 = vsel %vm564, %v718, 0.0
        %721 = vadd.xlane.f32.xlu0 %v720
        %v722 = vpop.xlane.xlu0 %721
        %v723 = vsel %vm564, %v719, 0.0
        %724 = vadd.xlane.f32.xlu0 %v723
        %v725 = vpop.xlane.xlu0 %724
        %v726 = vmul.f32 %v722, 0.17677669
        %v727 = vmul.f32 %v725, 0.17677669
        %vm728 = vcmask 64512
        %v729 = vsel %vm728, %v716, -inf
        %730 = vmax.xlane.f32.xlu0 %v729
        %v731 = vpop.xlane.xlu0 %730
        %v732 = vsel %vm728, %v717, -inf
        %733 = vmax.xlane.f32.xlu0 %v732
        %v734 = vpop.xlane.xlu0 %733
        %v735 = vmax.f32 %v731, %v726
        %v736 = vmax.f32 %v734, %v727
        %v737 = vsub.f32 %v716, %v735
        %v738 = vsub.f32 %v717, %v736
        %v739 = vmul.f32 %v737, 1.442695
        %v740 = vpow.pop %v739
        %v741 = vmul.f32 %v738, 1.442695
        %v742 = vpow.pop %v741
        %v743 = vsub.f32 %v726, %v735
        %v744 = vsub.f32 %v727, %v736
        %v745 = vmul.f32 %v743, 1.442695
        %v746 = vpow.pop %v745
        %v747 = vmul.f32 %v744, 1.442695
        %v748 = vpow.pop %v747
        %v749 = vsel %vm728, %v740, 0.0
        %750 = vadd.xlane.f32.xlu0 %v749
        %v751 = vpop.xlane.xlu0 %750
        %v752 = vsel %vm728, %v742, 0.0
        %753 = vadd.xlane.f32.xlu0 %v752
        %v754 = vpop.xlane.xlu0 %753
        %v755 = vadd.f32 %v751, %v746
        %v756 = vadd.f32 %v754, %v748
        %v757 = vrcp.pop %v755
        %v758 = vrcp.pop %v756
        %v759 = vpack.c.bf16 %v740, %v740
        %v760 = vpack.c.bf16 %v742, %v742
        %v762 = vsel %vm728, %v759, 0
        %vm764 = vcmask 1043456
        %v765 = vsel %vm764, %v671, 0
        %767 = vmatpush.bf16.msra.mxu0 0
        %768 = vmatpush.bf16.msra.mxu0 0
        %769 = vmatpush.bf16.msra.mxu0 0
        %770 = vmatpush.bf16.msra.mxu0 0
        %771 = vmatpush.bf16.msra.mxu0 0
        %772 = vmatpush.bf16.msra.mxu0 0
        %773 = vmatpush.bf16.msra.mxu0 0
        %774 = vmatpush.bf16.msra.mxu0 %v765
        %775 = vmatmul.bf16.gmra.mxu0 %v762
        %v776 = vpop.f32.mrf.mxu0
        %v777 = vadd.f32 0.0, %v776
        %v778 = vpop.f32.mrf.mxu0
        %779 = vdwg.mxu0
        %v781 = vsel %vm728, %v760, 0
        %v783 = vsel %vm764, %v672, 0
        %785 = vmatpush.bf16.msra.mxu0 0
        %786 = vmatpush.bf16.msra.mxu0 0
        %787 = vmatpush.bf16.msra.mxu0 0
        %788 = vmatpush.bf16.msra.mxu0 0
        %789 = vmatpush.bf16.msra.mxu0 0
        %790 = vmatpush.bf16.msra.mxu0 0
        %791 = vmatpush.bf16.msra.mxu0 0
        %792 = vmatpush.bf16.msra.mxu0 %v783
        %793 = vmatmul.bf16.gmra.mxu0 %v781
        %v794 = vpop.f32.mrf.mxu0
        %v795 = vadd.f32 0.0, %v794
        %v796 = vpop.f32.mrf.mxu0
        %797 = vdwg.mxu0
        %v798 = vmul.f32 %v746, %v757
        %v799 = vmul.f32 %v748, %v758
        %v800 = vmul.f32 %v777, %v757
        %v801 = vmul.f32 %v795, %v758
        %v802 = vmul.f32 %v798, %v669
        %v803 = vmul.f32 %v799, %v670
        %v804 = vsel %vm564, %v802, 0.0
        %v805 = vrot.slane %v804, 4
        %v806 = vadd.f32 %v804, %v805
        %v807 = vrot.slane %v806, 2
        %v808 = vadd.f32 %v806, %v807
        %v809 = vrot.slane %v808, 1
        %v810 = vadd.f32 %v808, %v809
        %v811 = vsel %vm564, %v803, 0.0
        %v812 = vrot.slane %v811, 4
        %v813 = vadd.f32 %v811, %v812
        %v814 = vrot.slane %v813, 2
        %v815 = vadd.f32 %v813, %v814
        %v816 = vrot.slane %v815, 1
        %v817 = vadd.f32 %v815, %v816
        %v818 = vadd.f32 %v800, %v810
        %v819 = vadd.f32 %v801, %v817
        %v820 = vpack.c.bf16 %v818, %v818
        %v821 = vpack.c.bf16 %v819, %v819
        %v824 = vperm.slane %v541, 0
        %v825 = vperm.slane %v542, 0
        %v832 = vunpack.c.l.b16 %v523
        %v833 = vunpack.c.l.b16 %v524
        %v834 = vunpack.c.l.b16 %v525
        %v835 = vunpack.c.l.b16 %v526
        %v836 = vpack.c.b16 %v833, %v832
        %v837 = vpack.c.b16 %v835, %v834
        %v841 = vsel %vm564, %v820, 0
        %843 = vmatpush.bf16.msra.mxu0 0
        %844 = vmatpush.bf16.msra.mxu0 0
        %845 = vmatpush.bf16.msra.mxu0 0
        %846 = vmatpush.bf16.msra.mxu0 0
        %847 = vmatpush.bf16.msra.mxu0 0
        %848 = vmatpush.bf16.msra.mxu0 0
        %849 = vmatpush.bf16.msra.mxu0 %v837
        %850 = vmatpush.bf16.msra.mxu0 %v836
        %851 = vmatmul.bf16.gmra.mxu0 %v841
        %v852 = vpop.f32.mrf.mxu0
        %v853 = vadd.f32 %v824, %v852
        %v854 = vpop.f32.mrf.mxu0
        %855 = vdwg.mxu0
        %v860 = vunpack.c.l.b16 %v527
        %v861 = vunpack.c.l.b16 %v528
        %v862 = vunpack.c.l.b16 %v529
        %v863 = vunpack.c.l.b16 %v530
        %v864 = vpack.c.b16 %v861, %v860
        %v865 = vpack.c.b16 %v863, %v862
        %v869 = vsel %vm564, %v821, 0
        %871 = vmatpush.bf16.msra.mxu0 0
        %872 = vmatpush.bf16.msra.mxu0 0
        %873 = vmatpush.bf16.msra.mxu0 0
        %874 = vmatpush.bf16.msra.mxu0 0
        %875 = vmatpush.bf16.msra.mxu0 0
        %876 = vmatpush.bf16.msra.mxu0 0
        %877 = vmatpush.bf16.msra.mxu0 %v865
        %878 = vmatpush.bf16.msra.mxu0 %v864
        %879 = vmatmul.bf16.gmra.mxu0 %v869
        %v880 = vpop.f32.mrf.mxu0
        %v881 = vadd.f32 %v825, %v880
        %v882 = vpop.f32.mrf.mxu0
        %883 = vdwg.mxu0
        %v884 = vpack.c.bf16 %v853, %v853
        %v885 = vpack.c.bf16 %v881, %v881
        %v887 = vsel %vm564, %v884, 0
        %889 = vmatpush.bf16.xpose.msra.mxu0 0
        %890 = vmatpush.bf16.xpose.msra.mxu0 0
        %891 = vmatpush.bf16.xpose.msra.mxu0 0
        %892 = vmatpush.bf16.xpose.msra.mxu0 0
        %893 = vmatpush.bf16.xpose.msra.mxu0 0
        %894 = vmatpush.bf16.xpose.msra.mxu0 0
        %895 = vmatpush.bf16.xpose.msra.mxu0 0
        %896 = vmatpush.bf16.xpose.msra.mxu0 %v887
        %897 = vmatmul.bf16.gmra.mxu0 %v887
        %v898 = vpop.f32.mrf.mxu0
        %v899 = vadd.f32 0.0, %v898
        %v900 = vpop.f32.mrf.mxu0
        %901 = vdwg.mxu0
        %v903 = vsel %vm564, %v885, 0
        %905 = vmatpush.bf16.xpose.msra.mxu0 0
        %906 = vmatpush.bf16.xpose.msra.mxu0 0
        %907 = vmatpush.bf16.xpose.msra.mxu0 0
        %908 = vmatpush.bf16.xpose.msra.mxu0 0
        %909 = vmatpush.bf16.xpose.msra.mxu0 0
        %910 = vmatpush.bf16.xpose.msra.mxu0 0
        %911 = vmatpush.bf16.xpose.msra.mxu0 0
        %912 = vmatpush.bf16.xpose.msra.mxu0 %v903
        %913 = vmatmul.bf16.gmra.mxu0 %v903
        %v914 = vpop.f32.mrf.mxu0
        %v915 = vadd.f32 0.0, %v914
        %v916 = vpop.f32.mrf.mxu0
        %917 = vdwg.mxu0
        %v918 = vmul.f32 %v899, 0.17677669
        %v919 = vmul.f32 %v915, 0.17677669
        %v920 = vsel %vm728, %v918, -inf
        %921 = vmax.xlane.f32.xlu0 %v920
        %v922 = vpop.xlane.xlu0 %921
        %v923 = vsel %vm728, %v919, -inf
        %924 = vmax.xlane.f32.xlu0 %v923
        %v925 = vpop.xlane.xlu0 %924
        %v926 = vsub.f32 %v918, %v922
        %v927 = vsub.f32 %v919, %v925
        %v928 = vmul.f32 %v926, 1.442695
        %v929 = vpow.pop %v928
        %v930 = vmul.f32 %v927, 1.442695
        %v931 = vpow.pop %v930
        %v932 = vsel %vm728, %v929, 0.0
        %933 = vadd.xlane.f32.xlu0 %v932
        %v934 = vpop.xlane.xlu0 %933
        %v935 = vsel %vm728, %v931, 0.0
        %936 = vadd.xlane.f32.xlu0 %v935
        %v937 = vpop.xlane.xlu0 %936
        %v938 = vrcp.pop %v934
        %v939 = vrcp.pop %v937
        %v940 = vpack.c.bf16 %v929, %v929
        %v941 = vpack.c.bf16 %v931, %v931
        %v943 = vsel %vm728, %v940, 0
        %v945 = vsel %vm764, %v884, 0
        %947 = vmatpush.bf16.msra.mxu0 0
        %948 = vmatpush.bf16.msra.mxu0 0
        %949 = vmatpush.bf16.msra.mxu0 0
        %950 = vmatpush.bf16.msra.mxu0 0
        %951 = vmatpush.bf16.msra.mxu0 0
        %952 = vmatpush.bf16.msra.mxu0 0
        %953 = vmatpush.bf16.msra.mxu0 0
        %954 = vmatpush.bf16.msra.mxu0 %v945
        %955 = vmatmul.bf16.gmra.mxu0 %v943
        %v956 = vpop.f32.mrf.mxu0
        %v957 = vadd.f32 0.0, %v956
        %v958 = vpop.f32.mrf.mxu0
        %959 = vdwg.mxu0
        %v961 = vsel %vm728, %v941, 0
        %v963 = vsel %vm764, %v885, 0
        %965 = vmatpush.bf16.msra.mxu0 0
        %966 = vmatpush.bf16.msra.mxu0 0
        %967 = vmatpush.bf16.msra.mxu0 0
        %968 = vmatpush.bf16.msra.mxu0 0
        %969 = vmatpush.bf16.msra.mxu0 0
        %970 = vmatpush.bf16.msra.mxu0 0
        %971 = vmatpush.bf16.msra.mxu0 0
        %972 = vmatpush.bf16.msra.mxu0 %v963
        %973 = vmatmul.bf16.gmra.mxu0 %v961
        %v974 = vpop.f32.mrf.mxu0
        %v975 = vadd.f32 0.0, %v974
        %v976 = vpop.f32.mrf.mxu0
        %977 = vdwg.mxu0
        %v978 = vmul.f32 %v957, %v938
        %v979 = vmul.f32 %v975, %v939
        %v980 = vpack.c.bf16 %v978, %v978
        %v981 = vpack.c.bf16 %v979, %v979
        %v983 = vsel %vm564, %v980, 0
        %985 = vmatpush.bf16.msra.mxu0 0
        %986 = vmatpush.bf16.msra.mxu0 0
        %987 = vmatpush.bf16.msra.mxu0 0
        %988 = vmatpush.bf16.msra.mxu0 0
        %989 = vmatpush.bf16.msra.mxu0 0
        %990 = vmatpush.bf16.msra.mxu0 0
        %991 = vmatpush.bf16.msra.mxu0 %v622
        %992 = vmatpush.bf16.msra.mxu0 %v621
        %993 = vmatmul.bf16.gmra.mxu0 %v983
        %v994 = vpop.f32.mrf.mxu0
        %v995 = vadd.f32 %v609, %v994
        %v996 = vpop.f32.mrf.mxu0
        %997 = vdwg.mxu0
        %v999 = vsel %vm564, %v981, 0
        %1001 = vmatpush.bf16.msra.mxu0 0
        %1002 = vmatpush.bf16.msra.mxu0 0
        %1003 = vmatpush.bf16.msra.mxu0 0
        %1004 = vmatpush.bf16.msra.mxu0 0
        %1005 = vmatpush.bf16.msra.mxu0 0
        %1006 = vmatpush.bf16.msra.mxu0 0
        %1007 = vmatpush.bf16.msra.mxu0 %v650
        %1008 = vmatpush.bf16.msra.mxu0 %v649
        %1009 = vmatmul.bf16.gmra.mxu0 %v999
        %v1010 = vpop.f32.mrf.mxu0
        %v1011 = vadd.f32 %v610, %v1010
        %v1012 = vpop.f32.mrf.mxu0
        %1013 = vdwg.mxu0
        %v1014 = vpack.c.bf16 %v638, %v638
        %v1015 = vpack.c.bf16 %v663, %v663
        %v1016 = vpack.c.bf16 %v995, %v995
        %v1017 = vpack.c.bf16 %v1011, %v1011
        %v1019 = vsel %vm564, %v1014, 0
        %v1022 = vsel %vm564, %v1016, 0
        %1024 = vmatpush.bf16.xpose.msra.mxu0 0
        %1025 = vmatpush.bf16.xpose.msra.mxu0 0
        %1026 = vmatpush.bf16.xpose.msra.mxu0 0
        %1027 = vmatpush.bf16.xpose.msra.mxu0 0
        %1028 = vmatpush.bf16.xpose.msra.mxu0 0
        %1029 = vmatpush.bf16.xpose.msra.mxu0 0
        %1030 = vmatpush.bf16.xpose.msra.mxu0 0
        %1031 = vmatpush.bf16.xpose.msra.mxu0 %v1022
        %1032 = vmatmul.bf16.gmra.mxu0 %v1019
        %v1033 = vpop.f32.mrf.mxu0
        %v1034 = vadd.f32 0.0, %v1033
        %v1035 = vpop.f32.mrf.mxu0
        %1036 = vdwg.mxu0
        %v1038 = vsel %vm564, %v1015, 0
        %v1041 = vsel %vm564, %v1017, 0
        %1043 = vmatpush.bf16.xpose.msra.mxu0 0
        %1044 = vmatpush.bf16.xpose.msra.mxu0 0
        %1045 = vmatpush.bf16.xpose.msra.mxu0 0
        %1046 = vmatpush.bf16.xpose.msra.mxu0 0
        %1047 = vmatpush.bf16.xpose.msra.mxu0 0
        %1048 = vmatpush.bf16.xpose.msra.mxu0 0
        %1049 = vmatpush.bf16.xpose.msra.mxu0 0
        %1050 = vmatpush.bf16.xpose.msra.mxu0 %v1041
        %1051 = vmatmul.bf16.gmra.mxu0 %v1038
        %v1052 = vpop.f32.mrf.mxu0
        %v1053 = vadd.f32 0.0, %v1052
        %v1054 = vpop.f32.mrf.mxu0
        %1055 = vdwg.mxu0
        %v1056 = vmul.f32 %v1034, 0.17677669
        %v1057 = vmul.f32 %v1053, 0.17677669
        %v1058 = vmul.f32 %v638, %v638
        %v1059 = vmul.f32 %v663, %v663
        %v1060 = vsel %vm564, %v1058, 0.0
        %1061 = vadd.xlane.f32.xlu0 %v1060
        %v1062 = vpop.xlane.xlu0 %1061
        %v1063 = vsel %vm564, %v1059, 0.0
        %1064 = vadd.xlane.f32.xlu0 %v1063
        %v1065 = vpop.xlane.xlu0 %1064
        %v1066 = vmul.f32 %v1062, 0.17677669
        %v1067 = vmul.f32 %v1065, 0.17677669
        %v1068 = vsel %vm728, %v1056, -inf
        %1069 = vmax.xlane.f32.xlu0 %v1068
        %v1070 = vpop.xlane.xlu0 %1069
        %v1071 = vsel %vm728, %v1057, -inf
        %1072 = vmax.xlane.f32.xlu0 %v1071
        %v1073 = vpop.xlane.xlu0 %1072
        %v1074 = vmax.f32 %v1070, %v1066
        %v1075 = vmax.f32 %v1073, %v1067
        %v1076 = vsub.f32 %v1056, %v1074
        %v1077 = vsub.f32 %v1057, %v1075
        %v1078 = vmul.f32 %v1076, 1.442695
        %v1079 = vpow.pop %v1078
        %v1080 = vmul.f32 %v1077, 1.442695
        %v1081 = vpow.pop %v1080
        %v1082 = vsub.f32 %v1066, %v1074
        %v1083 = vsub.f32 %v1067, %v1075
        %v1084 = vmul.f32 %v1082, 1.442695
        %v1085 = vpow.pop %v1084
        %v1086 = vmul.f32 %v1083, 1.442695
        %v1087 = vpow.pop %v1086
        %v1088 = vsel %vm728, %v1079, 0.0
        %1089 = vadd.xlane.f32.xlu0 %v1088
        %v1090 = vpop.xlane.xlu0 %1089
        %v1091 = vsel %vm728, %v1081, 0.0
        %1092 = vadd.xlane.f32.xlu0 %v1091
        %v1093 = vpop.xlane.xlu0 %1092
        %v1094 = vadd.f32 %v1090, %v1085
        %v1095 = vadd.f32 %v1093, %v1087
        %v1096 = vrcp.pop %v1094
        %v1097 = vrcp.pop %v1095
        %v1098 = vpack.c.bf16 %v1079, %v1079
        %v1099 = vpack.c.bf16 %v1081, %v1081
        %v1101 = vsel %vm728, %v1098, 0
        %v1103 = vsel %vm764, %v1016, 0
        %1105 = vmatpush.bf16.msra.mxu0 0
        %1106 = vmatpush.bf16.msra.mxu0 0
        %1107 = vmatpush.bf16.msra.mxu0 0
        %1108 = vmatpush.bf16.msra.mxu0 0
        %1109 = vmatpush.bf16.msra.mxu0 0
        %1110 = vmatpush.bf16.msra.mxu0 0
        %1111 = vmatpush.bf16.msra.mxu0 0
        %1112 = vmatpush.bf16.msra.mxu0 %v1103
        %1113 = vmatmul.bf16.gmra.mxu0 %v1101
        %v1114 = vpop.f32.mrf.mxu0
        %v1115 = vadd.f32 0.0, %v1114
        %v1116 = vpop.f32.mrf.mxu0
        %1117 = vdwg.mxu0
        %v1119 = vsel %vm728, %v1099, 0
        %v1121 = vsel %vm764, %v1017, 0
        %1123 = vmatpush.bf16.msra.mxu0 0
        %1124 = vmatpush.bf16.msra.mxu0 0
        %1125 = vmatpush.bf16.msra.mxu0 0
        %1126 = vmatpush.bf16.msra.mxu0 0
        %1127 = vmatpush.bf16.msra.mxu0 0
        %1128 = vmatpush.bf16.msra.mxu0 0
        %1129 = vmatpush.bf16.msra.mxu0 0
        %1130 = vmatpush.bf16.msra.mxu0 %v1121
        %1131 = vmatmul.bf16.gmra.mxu0 %v1119
        %v1132 = vpop.f32.mrf.mxu0
        %v1133 = vadd.f32 0.0, %v1132
        %v1134 = vpop.f32.mrf.mxu0
        %1135 = vdwg.mxu0
        %v1136 = vmul.f32 %v1085, %v1096
        %v1137 = vmul.f32 %v1087, %v1097
        %v1138 = vmul.f32 %v1115, %v1096
        %v1139 = vmul.f32 %v1133, %v1097
        %v1140 = vmul.f32 %v1136, %v638
        %v1141 = vmul.f32 %v1137, %v663
        %v1142 = vsel %vm564, %v1140, 0.0
        %v1143 = vrot.slane %v1142, 4
        %v1144 = vadd.f32 %v1142, %v1143
        %v1145 = vrot.slane %v1144, 2
        %v1146 = vadd.f32 %v1144, %v1145
        %v1147 = vrot.slane %v1146, 1
        %v1148 = vadd.f32 %v1146, %v1147
        %v1149 = vsel %vm564, %v1141, 0.0
        %v1150 = vrot.slane %v1149, 4
        %v1151 = vadd.f32 %v1149, %v1150
        %v1152 = vrot.slane %v1151, 2
        %v1153 = vadd.f32 %v1151, %v1152
        %v1154 = vrot.slane %v1153, 1
        %v1155 = vadd.f32 %v1153, %v1154
        %v1156 = vadd.f32 %v1138, %v1148
        %v1157 = vadd.f32 %v1139, %v1155
        %1158 = vst.msk [vmem:[%s513] sm:$0xff] %vm564, %v1156
        %1160 = vrot.lane.b32.xlu0 %v1157, 32
        %v1161 = vpop.permute.xlu0 %1160
        %vm1163 = vcmask 523520
        %1164 = vst.msk [vmem:[%s513] sm:$0xff] %vm1163, %v1161
        %s1165 = sand.u32 %s265, 1
        %s1166 = scalar_lea.sflag [#allocation4], %s1165
        %s1167 = sand.u32 %s265, 1
        %s1168 = smul.addr %s1167, 8
        %s1169 = scalar_lea.vmem [#allocation14], %s1168
        // Predicated region
        $region89: #{tpu_custom_call.1} parent=59 // pred_check
          %p1170 = pneg %p275
        $region90: #{tpu_custom_call.1} parent=59 // pred_check_branch
          %1172 = sbr.rel (%p1170) target = $region92
        $region91: #{tpu_custom_call.1} parent=59 // pred_region
          %1174 = vsyncadd %s1166, 0
          %s1175 = smul.addr %s32, 8
          %s1176 = scalar_lea.hbm %s10, %s1175
          %s1178 = sshll.u32 %s1169, 4
          %s1179 = int_to_ptr.vmem [resolvable:$true] %s1178
          %s1180 = sshll.u32 %s1176, 4
          %s1181 = int_to_ptr.hbm [resolvable:$true] %s1180
          %1183 = dma.vmem_to_hbm [thread:$0]  %s1179, 128, %s1181, %s1166
        $region92: #{tpu_custom_call.1} parent=59 // pred_fallthru
          _
      $region60: #{tpu_custom_call.1} parent=5 // pred_fallthru
        _
      %p1184 = scmp.le.s32.totalorder 2, %s27
      // Predicated region
      $region93: #{tpu_custom_call.1} parent=5 // pred_check
        %p1185 = pneg %p1184
      $region94: #{tpu_custom_call.1} parent=5 // pred_check_branch
        %1187 = sbr.rel (%p1185) target = $region96
      $region95: #{tpu_custom_call.1} parent=5 // pred_region
        %s1188 = ssub.s32 %s27, 2
        // Predicated region
        $region97: #{tpu_custom_call.1} parent=95 // pred_check
          %p1189 = pneg %p281
        $region98: #{tpu_custom_call.1} parent=95 // pred_check_branch
          %1191 = sbr.rel (%p1189) target = $region100
        $region99: #{tpu_custom_call.1} parent=95 // pred_region
          %s1192 = sand.u32 %s266, 1
          %s1193 = scalar_lea.sflag [#allocation4], %s1192
          %s1194 = sand.u32 %s266, 1
          %s1195 = smul.addr %s1194, 8
          %s1196 = scalar_lea.vmem [#allocation14], %s1195
          %1198 = dma.done %s1193, 128
        $region100: #{tpu_custom_call.1} parent=95 // pred_fallthru
          _
      $region96: #{tpu_custom_call.1} parent=5 // pred_fallthru
        _
    $region6: #{tpu_custom_call.1} parent=1 // loop_footer
      %s31 = sadd.s32 1, %s27
    $region7: #{tpu_custom_call.1} parent=1 // loop_footer_branch
      %26 = sbr.rel target = $region3
    $region8: #{tpu_custom_call.1} parent=1 // loop_exit
      _
    %1199 = vsyncpa [#allocation3], 1
    %s1200 = scalar_lea.sflag [#allocation3], 1
    %1201 = vsyncpa %s1200, 1
    %1202 = vsyncpa [#allocation6], 1
    %s1203 = scalar_lea.sflag [#allocation6], 1
    %1204 = vsyncpa %s1203, 1
    %1205 = vsyncpa [#allocation9], 1
    %1206 = vsyncpa [#allocation12], 1
    %1207 = vsyncpa [#allocation4], 1
    %s1208 = scalar_lea.sflag [#allocation4], 1
    %1209 = vsyncpa %s1208, 1

// kernel: tpu_custom_call.1
$region0: #{tpu_custom_call.1}
  #allocation0 [shape = 'u32[]', space=smem, size = 0x4, offset = 0x4, fixed_abs, tag = 'smem constant byte address 0x4 - core index']
  #allocation1 [shape = 'u32[72,128]{1,0:T(1,128)}', space=vmem, size = 0x9000, scoped, tag = 'internal scratch']
  %s0 = inlined_call_operand.hbm [shape: bf16[2,8,32], index: 0, kind: input, shape index: {}]
  %s1 = inlined_call_operand.hbm [shape: bf16[2,8,32], index: 1, kind: input, shape index: {}]
  %s2 = inlined_call_operand.hbm [shape: f32[2,1,8], index: 2, kind: input, shape index: {}]
  %s3 = inlined_call_operand.hbm [shape: bf16[2,8,32], index: 3, kind: input, shape index: {}]
  %s4 = inlined_call_operand.hbm [shape: bf16[2,32,32], index: 4, kind: input, shape index: {}]
  %s5 = inlined_call_operand.vmem [shape: f32[2,1,32], index: 5, kind: input, shape index: {}]
  %s6 = inlined_call_operand.hbm [shape: bf16[2,32,32], index: 6, kind: input, shape index: {}]
  %s7 = inlined_call_operand.vmem [shape: f32[2,1,32], index: 7, kind: input, shape index: {}]
  %s8 = inlined_call_operand.hbm [shape: bf16[2,32,32], index: 8, kind: input, shape index: {}]
  %s9 = inlined_call_operand.vmem [shape: f32[2,1,32], index: 9, kind: input, shape index: {}]
  %s10 = inlined_call_operand.hbm [shape: f32[2,8,64], index: 10, kind: output, shape index: {}]
  %s11 = sld [smem:[#allocation0]]
  $region101: #{tpu_custom_call.1} parent=0
    _
  %s13 = ssub.s32 1, %s11
  %s14 = scalar_select 0, %s13, %s11
  $region1: #{tpu_custom_call.1} parent=0
    #allocation2 [shape = 'u8[4096]{0}', space=vmem, size = 0x1000, scoped, tag = 'input window, operand 0']
    #allocation3 [shape = 's32[2]{0}', space=sflag, size = 0x8, scoped, tag = 'scoped memory for tpu_custom_call.1']
    #allocation4 [shape = 's32[2]{0}', space=sflag, size = 0x8, scoped, tag = 'scoped memory for tpu_custom_call.1']
    #allocation5 [shape = 'u8[4096]{0}', space=vmem, size = 0x1000, scoped, tag = 'input window, operand 1']
    #allocation6 [shape = 's32[2]{0}', space=sflag, size = 0x8, scoped, tag = 'scoped memory for tpu_custom_call.1']
    #allocation7 [shape = 'u8[1024]{0}', space=vmem, size = 0x400, scoped, tag = 'input window, operand 2']
    #allocation8 [shape = 'u8[4096]{0}', space=vmem, size = 0x1000, scoped, tag = 'input window, operand 3, single buffered']
    #allocation9 [shape = 's32[1]{0}', space=sflag, size = 0x4, scoped, tag = 'scoped memory for tpu_custom_call.1']
    #allocation10 [shape = 'u8[16384]{0}', space=vmem, size = 0x4000, scoped, tag = 'input window, operand 4, single buffered']
    #allocation11 [shape = 'u8[16384]{0}', space=vmem, size = 0x4000, scoped, tag = 'input window, operand 6, single buffered']
    #allocation12 [shape = 's32[1]{0}', space=sflag, size = 0x4, scoped, tag = 'scoped memory for tpu_custom_call.1']
    #allocation13 [shape = 'u8[16384]{0}', space=vmem, size = 0x4000, scoped, tag = 'input window, operand 8, single buffered']
    #allocation14 [shape = 'u8[8192]{0}', space=vmem, size = 0x2000, scoped, tag = 'output window, operand 0']
    %15 = vsyncpa [#allocation3], 0
    %s16 = scalar_lea.sflag [#allocation3], 1
    %17 = vsyncpa %s16, 0
    %18 = vsyncpa [#allocation6], 0
    %s19 = scalar_lea.sflag [#allocation6], 1
    %20 = vsyncpa %s19, 0
    %21 = vsyncpa [#allocation9], 0
    %22 = vsyncpa [#allocation12], 0
    %23 = vsyncpa [#allocation4], 0
    %s24 = scalar_lea.sflag [#allocation4], 1
    %25 = vsyncpa %s24, 0
    loop: start=0, step=1, limit=4
    $region2: #{tpu_custom_call.1} parent=1 // loop_pre_header
      _
    $region3: #{tpu_custom_call.1} parent=1 // loop_header
      %s27 = sphi 0, %s31
      %p28 = scmp.ge.s32.totalorder %s27, 4
      %s37 = sphi 0, %s39
      %s40 = sphi 0, %s37
      %s41 = sphi 0, %s40
      %s57 = sphi 0, %s41
      %s63 = sphi 0, %s65
      %s66 = sphi 0, %s63
      %s67 = sphi 0, %s66
      %s83 = sphi 0, %s67
      %s89 = sphi 0, %s91
      %s92 = sphi 0, %s89
      %s93 = sphi 0, %s92
      %s109 = sphi 0, %s93
      %s113 = sphi 0, %s113
      %s115 = sphi 0, %s113
      %s116 = sphi 0, %s115
      %s130 = sphi 0, %s116
      %s134 = sphi 0, %s134
      %s136 = sphi 0, %s134
      %s137 = sphi 0, %s136
      %s151 = sphi 0, %s137
      %s155 = sphi 0, %s155
      %s157 = sphi 0, %s155
      %s158 = sphi 0, %s157
      %s172 = sphi 0, %s158
      %s176 = sphi 0, %s176
      %s178 = sphi 0, %s176
      %s179 = sphi 0, %s178
      %s193 = sphi 0, %s179
      %s197 = sphi 0, %s197
      %s199 = sphi 0, %s197
      %s200 = sphi 0, %s199
      %s214 = sphi 0, %s200
      %s218 = sphi 0, %s218
      %s220 = sphi 0, %s218
      %s221 = sphi 0, %s220
      %s235 = sphi 0, %s221
      %s239 = sphi 0, %s239
      %s241 = sphi 0, %s239
      %s242 = sphi 0, %s241
      %s256 = sphi 0, %s242
      %s262 = sphi 0, %s264
      %s265 = sphi 0, %s262
      %s266 = sphi 0, %s265
      %s282 = sphi 0, %s266
    $region4: #{tpu_custom_call.1} parent=1 // loop_header_branch
      %30 = sbr.rel (%p28) target = $region8
    $region5: #{tpu_custom_call.1} parent=1 // loop_body
      %s32 = ssub.s32 %s27, 1
      %s33 = ssub.s32 %s27, 2
      %s34 = sadd.s32 %s27, 1
      %s35 = ssub.s32 %s27, %s34
      %p36 = scmp.eq.s32.totalorder %s35, 0
      %s38 = sadd.s32 %s37, 1
      %s39 = scalar_select %p36, %s37, %s38
      %p42 = pneg %p36
      %p43 = scmp.eq.s32.totalorder %s27, 1
      %p44 = por %p42, %p43
      %p45 = scmp.ne.s32.totalorder %s37, %s40
      %p46 = scmp.eq.s32.totalorder %s27, 0
      %p47 = por %p45, %p46
      %p48 = scmp.ne.s32.totalorder %s37, %s40
      %p49 = scmp.eq.s32.totalorder %s32, 1
      %p50 = por %p48, %p49
      %p51 = scmp.ne.s32.totalorder %s40, %s41
      %p52 = scmp.eq.s32.totalorder %s32, 0
      %p53 = por %p51, %p52
      %p54 = scmp.ne.s32.totalorder %s40, %s41
      %p55 = scmp.eq.s32.totalorder %s33, 1
      %p56 = por %p54, %p55
      %p58 = scmp.ne.s32.totalorder %s41, %s57
      %p59 = scmp.eq.s32.totalorder %s33, 0
      %p60 = por %p58, %p59
      %s61 = ssub.s32 %s27, %s34
      %p62 = scmp.eq.s32.totalorder %s61, 0
      %s64 = sadd.s32 %s63, 1
      %s65 = scalar_select %p62, %s63, %s64
      %p68 = pneg %p62
      %p69 = scmp.eq.s32.totalorder %s27, 1
      %p70 = por %p68, %p69
      %p71 = scmp.ne.s32.totalorder %s63, %s66
      %p72 = scmp.eq.s32.totalorder %s27, 0
      %p73 = por %p71, %p72
      %p74 = scmp.ne.s32.totalorder %s63, %s66
      %p75 = scmp.eq.s32.totalorder %s32, 1
      %p76 = por %p74, %p75
      %p77 = scmp.ne.s32.totalorder %s66, %s67
      %p78 = scmp.eq.s32.totalorder %s32, 0
      %p79 = por %p77, %p78
      %p80 = scmp.ne.s32.totalorder %s66, %s67
      %p81 = scmp.eq.s32.totalorder %s33, 1
      %p82 = por %p80, %p81
      %p84 = scmp.ne.s32.totalorder %s67, %s83
      %p85 = scmp.eq.s32.totalorder %s33, 0
      %p86 = por %p84, %p85
      %s87 = ssub.s32 %s27, %s34
      %p88 = scmp.eq.s32.totalorder %s87, 0
      %s90 = sadd.s32 %s89, 1
      %s91 = scalar_select %p88, %s89, %s90
      %p94 = pneg %p88
      %p95 = scmp.eq.s32.totalorder %s27, 1
      %p96 = por %p94, %p95
      %p97 = scmp.ne.s32.totalorder %s89, %s92
      %p98 = scmp.eq.s32.totalorder %s27, 0
      %p99 = por %p97, %p98
      %p100 = scmp.ne.s32.totalorder %s89, %s92
      %p101 = scmp.eq.s32.totalorder %s32, 1
      %p102 = por %p100, %p101
      %p103 = scmp.ne.s32.totalorder %s92, %s93
      %p104 = scmp.eq.s32.totalorder %s32, 0
      %p105 = por %p103, %p104
      %p106 = scmp.ne.s32.totalorder %s92, %s93
      %p107 = scmp.eq.s32.totalorder %s33, 1
      %p108 = por %p106, %p107
      %p110 = scmp.ne.s32.totalorder %s93, %s109
      %p111 = scmp.eq.s32.totalorder %s33, 0
      %p112 = por %p110, %p111
      %s114 = sadd.s32 %s113, 1
      %p117 = scmp.eq.s32.totalorder %s27, 1
      %p118 = scmp.ne.s32.totalorder %s113, %s115
      %p119 = scmp.eq.s32.totalorder %s27, 0
      %p120 = por %p118, %p119
      %p121 = scmp.ne.s32.totalorder %s113, %s115
      %p122 = scmp.eq.s32.totalorder %s32, 1
      %p123 = por %p121, %p122
      %p124 = scmp.ne.s32.totalorder %s115, %s116
      %p125 = scmp.eq.s32.totalorder %s32, 0
      %p126 = por %p124, %p125
      %p127 = scmp.ne.s32.totalorder %s115, %s116
      %p128 = scmp.eq.s32.totalorder %s33, 1
      %p129 = por %p127, %p128
      %p131 = scmp.ne.s32.totalorder %s116, %s130
      %p132 = scmp.eq.s32.totalorder %s33, 0
      %p133 = por %p131, %p132
      %s135 = sadd.s32 %s134, 1
      %p138 = scmp.eq.s32.totalorder %s27, 1
      %p139 = scmp.ne.s32.totalorder %s134, %s136
      %p140 = scmp.eq.s32.totalorder %s27, 0
      %p141 = por %p139, %p140
      %p142 = scmp.ne.s32.totalorder %s134, %s136
      %p143 = scmp.eq.s32.totalorder %s32, 1
      %p144 = por %p142, %p143
      %p145 = scmp.ne.s32.totalorder %s136, %s137
      %p146 = scmp.eq.s32.totalorder %s32, 0
      %p147 = por %p145, %p146
      %p148 = scmp.ne.s32.totalorder %s136, %s137
      %p149 = scmp.eq.s32.totalorder %s33, 1
      %p150 = por %p148, %p149
      %p152 = scmp.ne.s32.totalorder %s137, %s151
      %p153 = scmp.eq.s32.totalorder %s33, 0
      %p154 = por %p152, %p153
      %s156 = sadd.s32 %s155, 1
      %p159 = scmp.eq.s32.totalorder %s27, 1
      %p160 = scmp.ne.s32.totalorder %s155, %s157
      %p161 = scmp.eq.s32.totalorder %s27, 0
      %p162 = por %p160, %p161
      %p163 = scmp.ne.s32.totalorder %s155, %s157
      %p164 = scmp.eq.s32.totalorder %s32, 1
      %p165 = por %p163, %p164
      %p166 = scmp.ne.s32.totalorder %s157, %s158
      %p167 = scmp.eq.s32.totalorder %s32, 0
      %p168 = por %p166, %p167
      %p169 = scmp.ne.s32.totalorder %s157, %s158
      %p170 = scmp.eq.s32.totalorder %s33, 1
      %p171 = por %p169, %p170
      %p173 = scmp.ne.s32.totalorder %s158, %s172
      %p174 = scmp.eq.s32.totalorder %s33, 0
      %p175 = por %p173, %p174
      %s177 = sadd.s32 %s176, 1
      %p180 = scmp.eq.s32.totalorder %s27, 1
      %p181 = scmp.ne.s32.totalorder %s176, %s178
      %p182 = scmp.eq.s32.totalorder %s27, 0
      %p183 = por %p181, %p182
      %p184 = scmp.ne.s32.totalorder %s176, %s178
      %p185 = scmp.eq.s32.totalorder %s32, 1
      %p186 = por %p184, %p185
      %p187 = scmp.ne.s32.totalorder %s178, %s179
      %p188 = scmp.eq.s32.totalorder %s32, 0
      %p189 = por %p187, %p188
      %p190 = scmp.ne.s32.totalorder %s178, %s179
      %p191 = scmp.eq.s32.totalorder %s33, 1
      %p192 = por %p190, %p191
      %p194 = scmp.ne.s32.totalorder %s179, %s193
      %p195 = scmp.eq.s32.totalorder %s33, 0
      %p196 = por %p194, %p195
      %s198 = sadd.s32 %s197, 1
      %p201 = scmp.eq.s32.totalorder %s27, 1
      %p202 = scmp.ne.s32.totalorder %s197, %s199
      %p203 = scmp.eq.s32.totalorder %s27, 0
      %p204 = por %p202, %p203
      %p205 = scmp.ne.s32.totalorder %s197, %s199
      %p206 = scmp.eq.s32.totalorder %s32, 1
      %p207 = por %p205, %p206
      %p208 = scmp.ne.s32.totalorder %s199, %s200
      %p209 = scmp.eq.s32.totalorder %s32, 0
      %p210 = por %p208, %p209
      %p211 = scmp.ne.s32.totalorder %s199, %s200
      %p212 = scmp.eq.s32.totalorder %s33, 1
      %p213 = por %p211, %p212
      %p215 = scmp.ne.s32.totalorder %s200, %s214
      %p216 = scmp.eq.s32.totalorder %s33, 0
      %p217 = por %p215, %p216
      %s219 = sadd.s32 %s218, 1
      %p222 = scmp.eq.s32.totalorder %s27, 1
      %p223 = scmp.ne.s32.totalorder %s218, %s220
      %p224 = scmp.eq.s32.totalorder %s27, 0
      %p225 = por %p223, %p224
      %p226 = scmp.ne.s32.totalorder %s218, %s220
      %p227 = scmp.eq.s32.totalorder %s32, 1
      %p228 = por %p226, %p227
      %p229 = scmp.ne.s32.totalorder %s220, %s221
      %p230 = scmp.eq.s32.totalorder %s32, 0
      %p231 = por %p229, %p230
      %p232 = scmp.ne.s32.totalorder %s220, %s221
      %p233 = scmp.eq.s32.totalorder %s33, 1
      %p234 = por %p232, %p233
      %p236 = scmp.ne.s32.totalorder %s221, %s235
      %p237 = scmp.eq.s32.totalorder %s33, 0
      %p238 = por %p236, %p237
      %s240 = sadd.s32 %s239, 1
      %p243 = scmp.eq.s32.totalorder %s27, 1
      %p244 = scmp.ne.s32.totalorder %s239, %s241
      %p245 = scmp.eq.s32.totalorder %s27, 0
      %p246 = por %p244, %p245
      %p247 = scmp.ne.s32.totalorder %s239, %s241
      %p248 = scmp.eq.s32.totalorder %s32, 1
      %p249 = por %p247, %p248
      %p250 = scmp.ne.s32.totalorder %s241, %s242
      %p251 = scmp.eq.s32.totalorder %s32, 0
      %p252 = por %p250, %p251
      %p253 = scmp.ne.s32.totalorder %s241, %s242
      %p254 = scmp.eq.s32.totalorder %s33, 1
      %p255 = por %p253, %p254
      %p257 = scmp.ne.s32.totalorder %s242, %s256
      %p258 = scmp.eq.s32.totalorder %s33, 0
      %p259 = por %p257, %p258
      %s260 = ssub.s32 %s27, %s34
      %p261 = scmp.eq.s32.totalorder %s260, 0
      %s263 = sadd.s32 %s262, 1
      %s264 = scalar_select %p261, %s262, %s263
      %p267 = pneg %p261
      %p268 = scmp.eq.s32.totalorder %s27, 1
      %p269 = por %p267, %p268
      %p270 = scmp.ne.s32.totalorder %s262, %s265
      %p271 = scmp.eq.s32.totalorder %s27, 0
      %p272 = por %p270, %p271
      %p273 = scmp.ne.s32.totalorder %s262, %s265
      %p274 = scmp.eq.s32.totalorder %s32, 1
      %p275 = por %p273, %p274
      %p276 = scmp.ne.s32.totalorder %s265, %s266
      %p277 = scmp.eq.s32.totalorder %s32, 0
      %p278 = por %p276, %p277
      %p279 = scmp.ne.s32.totalorder %s265, %s266
      %p280 = scmp.eq.s32.totalorder %s33, 1
      %p281 = por %p279, %p280
      %p283 = scmp.ne.s32.totalorder %s266, %s282
      %p284 = scmp.eq.s32.totalorder %s33, 0
      %p285 = por %p283, %p284
      %p286 = scmp.le.s32.totalorder 1, %s27
      %p287 = scmp.lt.s32.totalorder %s27, 3
      %p288 = pnand %p286, %p287
      %p289 = pneg %p288
      // Predicated region
      $region9: #{tpu_custom_call.1} parent=5 // pred_check
        _
      $region10: #{tpu_custom_call.1} parent=5 // pred_check_branch
        %291 = sbr.rel (%p288) target = $region12
      $region11: #{tpu_custom_call.1} parent=5 // pred_region
        %s292 = ssub.s32 %s27, 1
        // Predicated region
        $region13: #{tpu_custom_call.1} parent=11 // pred_check
          %p293 = pneg %p126
        $region14: #{tpu_custom_call.1} parent=11 // pred_check_branch
          %295 = sbr.rel (%p293) target = $region16
        $region15: #{tpu_custom_call.1} parent=11 // pred_region
          %297 = vsyncadd [#allocation9], 0
          %s298 = sshll.u32 %s3, 4
          %s299 = int_to_ptr.hbm [resolvable:$true] %s298
          %s300 = sshll.u32 [#allocation8], 4
          %s301 = int_to_ptr.vmem [resolvable:$true] %s300
          %306 = dma.hbm_to_vmem [thread:$0]  %s299, 128, %s301, [#allocation9], 64, 64, 4
        $region16: #{tpu_custom_call.1} parent=11 // pred_fallthru
          _
        // Predicated region
        $region17: #{tpu_custom_call.1} parent=11 // pred_check
          %p307 = pneg %p147
        $region18: #{tpu_custom_call.1} parent=11 // pred_check_branch
          %309 = sbr.rel (%p307) target = $region20
        $region19: #{tpu_custom_call.1} parent=11 // pred_region
          %311 = vsyncadd [#allocation9], 0
          %s312 = sshll.u32 %s4, 4
          %s313 = int_to_ptr.hbm [resolvable:$true] %s312
          %s314 = sshll.u32 [#allocation10], 4
          %s315 = int_to_ptr.vmem [resolvable:$true] %s314
          %320 = dma.hbm_to_vmem [thread:$0]  %s313, 512, %s315, [#allocation9], 64, 64, 4
        $region20: #{tpu_custom_call.1} parent=11 // pred_fallthru
          _
        // Predicated region
        $region21: #{tpu_custom_call.1} parent=11 // pred_check
          %p321 = pneg %p168
        $region22: #{tpu_custom_call.1} parent=11 // pred_check_branch
          %323 = sbr.rel (%p321) target = $region24
        $region23: #{tpu_custom_call.1} parent=11 // pred_region
          _
        $region24: #{tpu_custom_call.1} parent=11 // pred_fallthru
          _
        // Predicated region
        $region25: #{tpu_custom_call.1} parent=11 // pred_check
          %p324 = pneg %p189
        $region26: #{tpu_custom_call.1} parent=11 // pred_check_branch
          %326 = sbr.rel (%p324) target = $region28
        $region27: #{tpu_custom_call.1} parent=11 // pred_region
          %328 = vsyncadd [#allocation12], 0
          %s329 = sshll.u32 %s6, 4
          %s330 = int_to_ptr.hbm [resolvable:$true] %s329
          %s331 = sshll.u32 [#allocation11], 4
          %s332 = int_to_ptr.vmem [resolvable:$true] %s331
          %337 = dma.hbm_to_vmem [thread:$0]  %s330, 512, %s332, [#allocation12], 64, 64, 4
        $region28: #{tpu_custom_call.1} parent=11 // pred_fallthru
          _
        // Predicated region
        $region29: #{tpu_custom_call.1} parent=11 // pred_check
          %p338 = pneg %p210
        $region30: #{tpu_custom_call.1} parent=11 // pred_check_branch
          %340 = sbr.rel (%p338) target = $region32
        $region31: #{tpu_custom_call.1} parent=11 // pred_region
          _
        $region32: #{tpu_custom_call.1} parent=11 // pred_fallthru
          _
        // Predicated region
        $region33: #{tpu_custom_call.1} parent=11 // pred_check
          %p341 = pneg %p231
        $region34: #{tpu_custom_call.1} parent=11 // pred_check_branch
          %343 = sbr.rel (%p341) target = $region36
        $region35: #{tpu_custom_call.1} parent=11 // pred_region
          %345 = vsyncadd [#allocation12], 0
          %s346 = sshll.u32 %s8, 4
          %s347 = int_to_ptr.hbm [resolvable:$true] %s346
          %s348 = sshll.u32 [#allocation13], 4
          %s349 = int_to_ptr.vmem [resolvable:$true] %s348
          %354 = dma.hbm_to_vmem [thread:$0]  %s347, 512, %s349, [#allocation12], 64, 64, 4
        $region36: #{tpu_custom_call.1} parent=11 // pred_fallthru
          _
        // Predicated region
        $region37: #{tpu_custom_call.1} parent=11 // pred_check
          %p355 = pneg %p252
        $region38: #{tpu_custom_call.1} parent=11 // pred_check_branch
          %357 = sbr.rel (%p355) target = $region40
        $region39: #{tpu_custom_call.1} parent=11 // pred_region
          _
        $region40: #{tpu_custom_call.1} parent=11 // pred_fallthru
          _
      $region12: #{tpu_custom_call.1} parent=5 // pred_fallthru
        _
      %p358 = scmp.lt.s32.totalorder %s27, 2
      // Predicated region
      $region41: #{tpu_custom_call.1} parent=5 // pred_check
        %p359 = pneg %p358
      $region42: #{tpu_custom_call.1} parent=5 // pred_check_branch
        %361 = sbr.rel (%p359) target = $region44
      $region43: #{tpu_custom_call.1} parent=5 // pred_region
        // Predicated region
        $region45: #{tpu_custom_call.1} parent=43 // pred_check
          %p362 = pneg %p47
        $region46: #{tpu_custom_call.1} parent=43 // pred_check_branch
          %364 = sbr.rel (%p362) target = $region48
        $region47: #{tpu_custom_call.1} parent=43 // pred_region
          %s365 = sand.u32 %s37, 1
          %s366 = scalar_lea.sflag [#allocation3], %s365
          %s367 = sand.u32 %s37, 1
          %s368 = smul.addr %s367, 4
          %s369 = scalar_lea.vmem [#allocation2], %s368
          %371 = vsyncadd %s366, 0
          %s372 = smul.addr %s27, 4
          %s373 = scalar_lea.hbm %s0, %s372
          %s375 = sshll.u32 %s373, 4
          %s376 = int_to_ptr.hbm [resolvable:$true] %s375
          %s377 = sshll.u32 %s369, 4
          %s378 = int_to_ptr.vmem [resolvable:$true] %s377
          %380 = dma.hbm_to_vmem [thread:$0]  %s376, 64, %s378, %s366
        $region48: #{tpu_custom_call.1} parent=43 // pred_fallthru
          _
        // Predicated region
        $region49: #{tpu_custom_call.1} parent=43 // pred_check
          %p381 = pneg %p73
        $region50: #{tpu_custom_call.1} parent=43 // pred_check_branch
          %383 = sbr.rel (%p381) target = $region52
        $region51: #{tpu_custom_call.1} parent=43 // pred_region
          %s384 = sand.u32 %s27, 1
          %s385 = scalar_lea.sflag [#allocation6], %s384
          %s386 = sand.u32 %s63, 1
          %s387 = smul.addr %s386, 4
          %s388 = scalar_lea.vmem [#allocation5], %s387
          %390 = vsyncadd %s385, 0
          %s391 = smul.addr %s27, 4
          %s392 = scalar_lea.hbm %s1, %s391
          %s394 = sshll.u32 %s392, 4
          %s395 = int_to_ptr.hbm [resolvable:$true] %s394
          %s396 = sshll.u32 %s388, 4
          %s397 = int_to_ptr.vmem [resolvable:$true] %s396
          %399 = dma.hbm_to_vmem [thread:$0]  %s395, 64, %s397, %s385
        $region52: #{tpu_custom_call.1} parent=43 // pred_fallthru
          _
        // Predicated region
        $region53: #{tpu_custom_call.1} parent=43 // pred_check
          %p400 = pneg %p99
        $region54: #{tpu_custom_call.1} parent=43 // pred_check_branch
          %402 = sbr.rel (%p400) target = $region56
        $region55: #{tpu_custom_call.1} parent=43 // pred_region
          %s403 = sand.u32 %s27, 1
          %s404 = scalar_lea.sflag [#allocation6], %s403
          %s405 = sand.u32 %s89, 1
          %s406 = scalar_lea.vmem [#allocation7], %s405
          %408 = vsyncadd %s404, 0
          %s409 = scalar_lea.hbm %s2, %s27
          %s411 = sshll.u32 %s409, 4
          %s412 = int_to_ptr.hbm [resolvable:$true] %s411
          %s413 = sshll.u32 %s406, 4
          %s414 = int_to_ptr.vmem [resolvable:$true] %s413
          %416 = dma.hbm_to_vmem [thread:$0]  %s412, 16, %s414, %s404
        $region56: #{tpu_custom_call.1} parent=43 // pred_fallthru
          _
      $region44: #{tpu_custom_call.1} parent=5 // pred_fallthru
        _
      %p417 = scmp.le.s32.totalorder 1, %s27
      %p418 = scmp.lt.s32.totalorder %s27, 3
      %p419 = pnand %p417, %p418
      %p420 = pneg %p419
      // Predicated region
      $region57: #{tpu_custom_call.1} parent=5 // pred_check
        _
      $region58: #{tpu_custom_call.1} parent=5 // pred_check_branch
        %422 = sbr.rel (%p419) target = $region60
      $region59: #{tpu_custom_call.1} parent=5 // pred_region
        %s423 = ssub.s32 %s27, 1
        %s424 = sand.u32 %s40, 1
        %s425 = scalar_lea.sflag [#allocation3], %s424
        %s426 = sand.u32 %s40, 1
        %s427 = smul.addr %s426, 4
        %s428 = scalar_lea.vmem [#allocation2], %s427
        // Predicated region
        $region61: #{tpu_custom_call.1} parent=59 // pred_check
          %p429 = pneg %p53
        $region62: #{tpu_custom_call.1} parent=59 // pred_check_branch
          %431 = sbr.rel (%p429) target = $region64
        $region63: #{tpu_custom_call.1} parent=59 // pred_region
          %433 = dma.done %s425, 64
        $region64: #{tpu_custom_call.1} parent=59 // pred_fallthru
          _
        %s434 = sand.u32 %s32, 1
        %s435 = scalar_lea.sflag [#allocation6], %s434
        %s436 = sand.u32 %s66, 1
        %s437 = smul.addr %s436, 4
        %s438 = scalar_lea.vmem [#allocation5], %s437
        // Predicated region
        $region65: #{tpu_custom_call.1} parent=59 // pred_check
          %p439 = pneg %p79
        $region66: #{tpu_custom_call.1} parent=59 // pred_check_branch
          %441 = sbr.rel (%p439) target = $region68
        $region67: #{tpu_custom_call.1} parent=59 // pred_region
          %443 = dma.done %s435, 64
        $region68: #{tpu_custom_call.1} parent=59 // pred_fallthru
          _
        %s444 = sand.u32 %s32, 1
        %s445 = scalar_lea.sflag [#allocation6], %s444
        %s446 = sand.u32 %s92, 1
        %s447 = scalar_lea.vmem [#allocation7], %s446
        // Predicated region
        $region69: #{tpu_custom_call.1} parent=59 // pred_check
          %p448 = pneg %p105
        $region70: #{tpu_custom_call.1} parent=59 // pred_check_branch
          %450 = sbr.rel (%p448) target = $region72
        $region71: #{tpu_custom_call.1} parent=59 // pred_region
          %452 = dma.done %s445, 16
        $region72: #{tpu_custom_call.1} parent=59 // pred_fallthru
          _
        // Predicated region
        $region73: #{tpu_custom_call.1} parent=59 // pred_check
          %p453 = pneg %p126
        $region74: #{tpu_custom_call.1} parent=59 // pred_check_branch
          %455 = sbr.rel (%p453) target = $region76
        $region75: #{tpu_custom_call.1} parent=59 // pred_region
          %457 = dma.done [#allocation9], 128
        $region76: #{tpu_custom_call.1} parent=59 // pred_fallthru
          _
        // Predicated region
        $region77: #{tpu_custom_call.1} parent=59 // pred_check
          %p458 = pneg %p147
        $region78: #{tpu_custom_call.1} parent=59 // pred_check_branch
          %460 = sbr.rel (%p458) target = $region80
        $region79: #{tpu_custom_call.1} parent=59 // pred_region
          %462 = dma.done [#allocation9], 512
        $region80: #{tpu_custom_call.1} parent=59 // pred_fallthru
          _
        // Predicated region
        $region81: #{tpu_custom_call.1} parent=59 // pred_check
          %p463 = pneg %p189
        $region82: #{tpu_custom_call.1} parent=59 // pred_check_branch
          %465 = sbr.rel (%p463) target = $region84
        $region83: #{tpu_custom_call.1} parent=59 // pred_region
          %467 = dma.done [#allocation12], 512
        $region84: #{tpu_custom_call.1} parent=59 // pred_fallthru
          _
        // Predicated region
        $region85: #{tpu_custom_call.1} parent=59 // pred_check
          %p468 = pneg %p231
        $region86: #{tpu_custom_call.1} parent=59 // pred_check_branch
          %470 = sbr.rel (%p468) target = $region88
        $region87: #{tpu_custom_call.1} parent=59 // pred_region
          %472 = dma.done [#allocation12], 512
        $region88: #{tpu_custom_call.1} parent=59 // pred_fallthru
          _
        %s473 = sand.u32 %s40, 1
        %s474 = scalar_lea.sflag [#allocation3], %s473
        %s475 = sand.u32 %s40, 1
        %s476 = smul.addr %s475, 4
        %s477 = scalar_lea.vmem [#allocation2], %s476
        %p478 = pneg %p53
        %p479 = pneg %p50
        %s480 = sand.u32 %s32, 1
        %s481 = scalar_lea.sflag [#allocation6], %s480
        %s482 = sand.u32 %s66, 1
        %s483 = smul.addr %s482, 4
        %s484 = scalar_lea.vmem [#allocation5], %s483
        %p485 = pneg %p79
        %p486 = pneg %p76
        %s487 = sand.u32 %s32, 1
        %s488 = scalar_lea.sflag [#allocation6], %s487
        %s489 = sand.u32 %s92, 1
        %s490 = scalar_lea.vmem [#allocation7], %s489
        %p491 = pneg %p105
        %p492 = pneg %p102
        %p493 = pneg %p126
        %p494 = pneg %p123
        %p495 = pneg %p147
        %p496 = pneg %p144
        %p497 = pneg %p168
        %p498 = pneg %p165
        %p499 = pneg %p189
        %p500 = pneg %p186
        %p501 = pneg %p210
        %p502 = pneg %p207
        %p503 = pneg %p231
        %p504 = pneg %p228
        %p505 = pneg %p252
        %p506 = pneg %p249
        %p507 = pneg %p278
        %p508 = pneg %p275
        %s509 = sand.u32 %s265, 1
        %s510 = scalar_lea.sflag [#allocation4], %s509
        %s511 = sand.u32 %s265, 1
        %s512 = smul.addr %s511, 8
        %s513 = scalar_lea.vmem [#allocation14], %s512
        %v515 = vld [vmem:[#allocation10] sm:$0xf]
        %v516 = vld [vmem:[#allocation10 + $0x4] sm:$0xf]
        %v517 = vld [vmem:[#allocation10 + $0x8] sm:$0xf]
        %v518 = vld [vmem:[#allocation10 + $0xc] sm:$0xf]
        %v519 = vld [vmem:[#allocation10 + $0x10] sm:$0xf]
        %v520 = vld [vmem:[#allocation10 + $0x14] sm:$0xf]
        %v521 = vld [vmem:[#allocation10 + $0x18] sm:$0xf]
        %v522 = vld [vmem:[#allocation10 + $0x1c] sm:$0xf]
        %v523 = vld [vmem:[#allocation11] sm:$0xf]
        %v524 = vld [vmem:[#allocation11 + $0x4] sm:$0xf]
        %v525 = vld [vmem:[#allocation11 + $0x8] sm:$0xf]
        %v526 = vld [vmem:[#allocation11 + $0xc] sm:$0xf]
        %v527 = vld [vmem:[#allocation11 + $0x10] sm:$0xf]
        %v528 = vld [vmem:[#allocation11 + $0x14] sm:$0xf]
        %v529 = vld [vmem:[#allocation11 + $0x18] sm:$0xf]
        %v530 = vld [vmem:[#allocation11 + $0x1c] sm:$0xf]
        %v531 = vld [vmem:[#allocation13] sm:$0xf]
        %v532 = vld [vmem:[#allocation13 + $0x4] sm:$0xf]
        %v533 = vld [vmem:[#allocation13 + $0x8] sm:$0xf]
        %v534 = vld [vmem:[#allocation13 + $0xc] sm:$0xf]
        %v535 = vld [vmem:[#allocation13 + $0x10] sm:$0xf]
        %v536 = vld [vmem:[#allocation13 + $0x14] sm:$0xf]
        %v537 = vld [vmem:[#allocation13 + $0x18] sm:$0xf]
        %v538 = vld [vmem:[#allocation13 + $0x1c] sm:$0xf]
        %v539 = vld [vmem:[%s5] sm:$0x1]
        %v540 = vld [vmem:[%s5 + $0x1] sm:$0x1]
        %v541 = vld [vmem:[%s7] sm:$0x1]
        %v542 = vld [vmem:[%s7 + $0x1] sm:$0x1]
        %v543 = vld [vmem:[%s9] sm:$0x1]
        %v544 = vld [vmem:[%s9 + $0x1] sm:$0x1]
        %v545 = vld [vmem:[%s428] sm:$0xf]
        %v548 = vperm.slane %v539, 0
        %v549 = vperm.slane %v540, 0
        %v556 = vunpack.c.l.b16 %v515
        %v557 = vunpack.c.l.b16 %v516
        %v558 = vunpack.c.l.b16 %v517
        %v559 = vunpack.c.l.b16 %v518
        %v560 = vpack.c.b16 %v557, %v556
        %v561 = vpack.c.b16 %v559, %v558
        %vm564 = vcmask 261120
        %v566 = vsel %vm564, %v545, 0
        %568 = vmatpush.bf16.msra.mxu0 0
        %569 = vmatpush.bf16.msra.mxu0 0
        %570 = vmatpush.bf16.msra.mxu0 0
        %571 = vmatpush.bf16.msra.mxu0 0
        %572 = vmatpush.bf16.msra.mxu0 0
        %573 = vmatpush.bf16.msra.mxu0 0
        %574 = vmatpush.bf16.msra.mxu0 %v561
        %575 = vmatpush.bf16.msra.mxu0 %v560
        %576 = vmatmul.bf16.gmra.mxu0 %v566
        %v577 = vpop.f32.mrf.mxu0
        %v578 = vadd.f32 %v548, %v577
        %v579 = vpop.f32.mrf.mxu0
        %580 = vdwg.mxu0
        %v585 = vunpack.c.l.b16 %v519
        %v586 = vunpack.c.l.b16 %v520
        %v587 = vunpack.c.l.b16 %v521
        %v588 = vunpack.c.l.b16 %v522
        %v589 = vpack.c.b16 %v586, %v585
        %v590 = vpack.c.b16 %v588, %v587
        %593 = vmatpush.bf16.msra.mxu0 0
        %594 = vmatpush.bf16.msra.mxu0 0
        %595 = vmatpush.bf16.msra.mxu0 0
        %596 = vmatpush.bf16.msra.mxu0 0
        %597 = vmatpush.bf16.msra.mxu0 0
        %598 = vmatpush.bf16.msra.mxu0 0
        %599 = vmatpush.bf16.msra.mxu0 %v590
        %600 = vmatpush.bf16.msra.mxu0 %v589
        %601 = vmatmul.bf16.gmra.mxu0 %v566
        %v602 = vpop.f32.mrf.mxu0
        %v603 = vadd.f32 %v549, %v602
        %v604 = vpop.f32.mrf.mxu0
        %605 = vdwg.mxu0
        %v606 = vld [vmem:[%s438] sm:$0xf]
        %v609 = vperm.slane %v543, 0
        %v610 = vperm.slane %v544, 0
        %v617 = vunpack.c.l.b16 %v531
        %v618 = vunpack.c.l.b16 %v532
        %v619 = vunpack.c.l.b16 %v533
        %v620 = vunpack.c.l.b16 %v534
        %v621 = vpack.c.b16 %v618, %v617
        %v622 = vpack.c.b16 %v620, %v619
        %v626 = vsel %vm564, %v606, 0
        %628 = vmatpush.bf16.msra.mxu0 0
        %629 = vmatpush.bf16.msra.mxu0 0
        %630 = vmatpush.bf16.msra.mxu0 0
        %631 = vmatpush.bf16.msra.mxu0 0
        %632 = vmatpush.bf16.msra.mxu0 0
        %633 = vmatpush.bf16.msra.mxu0 0
        %634 = vmatpush.bf16.msra.mxu0 %v622
        %635 = vmatpush.bf16.msra.mxu0 %v621
        %636 = vmatmul.bf16.gmra.mxu0 %v626
        %v637 = vpop.f32.mrf.mxu0
        %v638 = vadd.f32 %v609, %v637
        %v639 = vpop.f32.mrf.mxu0
        %640 = vdwg.mxu0
        %v645 = vunpack.c.l.b16 %v535
        %v646 = vunpack.c.l.b16 %v536
        %v647 = vunpack.c.l.b16 %v537
        %v648 = vunpack.c.l.b16 %v538
        %v649 = vpack.c.b16 %v646, %v645
        %v650 = vpack.c.b16 %v648, %v647
        %653 = vmatpush.bf16.msra.mxu0 0
        %654 = vmatpush.bf16.msra.mxu0 0
        %655 = vmatpush.bf16.msra.mxu0 0
        %656 = vmatpush.bf16.msra.mxu0 0
        %657 = vmatpush.bf16.msra.mxu0 0
        %658 = vmatpush.bf16.msra.mxu0 0
        %659 = vmatpush.bf16.msra.mxu0 %v650
        %660 = vmatpush.bf16.msra.mxu0 %v649
        %661 = vmatmul.bf16.gmra.mxu0 %v626
        %v662 = vpop.f32.mrf.mxu0
        %v663 = vadd.f32 %v610, %v662
        %v664 = vpop.f32.mrf.mxu0
        %665 = vdwg.mxu0
        %v666 = vld [vmem:[#allocation8] sm:$0xf]
        %v667 = vld [vmem:[#allocation8 + $0x4] sm:$0xf]
        %v668 = vld [vmem:[%s447] sm:$0x1]
        %v669 = vunpack.c.l.bf16 %v666
        %v670 = vunpack.c.l.bf16 %v667
        %v671 = vpack.c.bf16 %v578, %v578
        %v672 = vpack.c.bf16 %v603, %v603
        %v674 = vsel %vm564, %v666, 0
        %v677 = vsel %vm564, %v671, 0
        %679 = vmatpush.bf16.xpose.msra.mxu0 0
        %680 = vmatpush.bf16.xpose.msra.mxu0 0
        %681 = vmatpush.bf16.xpose.msra.mxu0 0
        %682 = vmatpush.bf16.xpose.msra.mxu0 0
        %683 = vmatpush.bf16.xpose.msra.mxu0 0
        %684 = vmatpush.bf16.xpose.msra.mxu0 0
        %685 = vmatpush.bf16.xpose.msra.mxu0 0
        %686 = vmatpush.bf16.xpose.msra.mxu0 %v677
        %687 = vmatmul.bf16.gmra.mxu0 %v674
        %v688 = vpop.f32.mrf.mxu0
        %v689 = vadd.f32 0.0, %v688
        %v690 = vpop.f32.mrf.mxu0
        %691 = vdwg.mxu0
        %v693 = vsel %vm564, %v667, 0
        %v696 = vsel %vm564, %v672, 0
        %698 = vmatpush.bf16.xpose.msra.mxu0 0
        %699 = vmatpush.bf16.xpose.msra.mxu0 0
        %700 = vmatpush.bf16.xpose.msra.mxu0 0
        %701 = vmatpush.bf16.xpose.msra.mxu0 0
        %702 = vmatpush.bf16.xpose.msra.mxu0 0
        %703 = vmatpush.bf16.xpose.msra.mxu0 0
        %704 = vmatpush.bf16.xpose.msra.mxu0 0
        %705 = vmatpush.bf16.xpose.msra.mxu0 %v696
        %706 = vmatmul.bf16.gmra.mxu0 %v693
        %v707 = vpop.f32.mrf.mxu0
        %v708 = vadd.f32 0.0, %v707
        %v709 = vpop.f32.mrf.mxu0
        %710 = vdwg.mxu0
        %v711 = vmul.f32 %v689, 0.17677669
        %v712 = vmul.f32 %v708, 0.17677669
        %v714 = vperm.slane %v668, 0
        %v716 = vadd.f32 %v711, %v714
        %v717 = vadd.f32 %v712, %v714
        %v718 = vmul.f32 %v669, %v669
        %v719 = vmul.f32 %v670, %v670
        %v720 = vsel %vm564, %v718, 0.0
        %721 = vadd.xlane.f32.xlu0 %v720
        %v722 = vpop.xlane.xlu0 %721
        %v723 = vsel %vm564, %v719, 0.0
        %724 = vadd.xlane.f32.xlu0 %v723
        %v725 = vpop.xlane.xlu0 %724
        %v726 = vmul.f32 %v722, 0.17677669
        %v727 = vmul.f32 %v725, 0.17677669
        %vm728 = vcmask 64512
        %v729 = vsel %vm728, %v716, -inf
        %730 = vmax.xlane.f32.xlu0 %v729
        %v731 = vpop.xlane.xlu0 %730
        %v732 = vsel %vm728, %v717, -inf
        %733 = vmax.xlane.f32.xlu0 %v732
        %v734 = vpop.xlane.xlu0 %733
        %v735 = vmax.f32 %v731, %v726
        %v736 = vmax.f32 %v734, %v727
        %v737 = vsub.f32 %v716, %v735
        %v738 = vsub.f32 %v717, %v736
        %v739 = vmul.f32 %v737, 1.442695
        %v740 = vpow.pop %v739
        %v741 = vmul.f32 %v738, 1.442695
        %v742 = vpow.pop %v741
        %v743 = vsub.f32 %v726, %v735
        %v744 = vsub.f32 %v727, %v736
        %v745 = vmul.f32 %v743, 1.442695
        %v746 = vpow.pop %v745
        %v747 = vmul.f32 %v744, 1.442695
        %v748 = vpow.pop %v747
        %v749 = vsel %vm728, %v740, 0.0
        %750 = vadd.xlane.f32.xlu0 %v749
        %v751 = vpop.xlane.xlu0 %750
        %v752 = vsel %vm728, %v742, 0.0
        %753 = vadd.xlane.f32.xlu0 %v752
        %v754 = vpop.xlane.xlu0 %753
        %v755 = vadd.f32 %v751, %v746
        %v756 = vadd.f32 %v754, %v748
        %v757 = vrcp.pop %v755
        %v758 = vrcp.pop %v756
        %v759 = vpack.c.bf16 %v740, %v740
        %v760 = vpack.c.bf16 %v742, %v742
        %v762 = vsel %vm728, %v759, 0
        %vm764 = vcmask 1043456
        %v765 = vsel %vm764, %v671, 0
        %767 = vmatpush.bf16.msra.mxu0 0
        %768 = vmatpush.bf16.msra.mxu0 0
        %769 = vmatpush.bf16.msra.mxu0 0
        %770 = vmatpush.bf16.msra.mxu0 0
        %771 = vmatpush.bf16.msra.mxu0 0
        %772 = vmatpush.bf16.msra.mxu0 0
        %773 = vmatpush.bf16.msra.mxu0 0
        %774 = vmatpush.bf16.msra.mxu0 %v765
        %775 = vmatmul.bf16.gmra.mxu0 %v762
        %v776 = vpop.f32.mrf.mxu0
        %v777 = vadd.f32 0.0, %v776
        %v778 = vpop.f32.mrf.mxu0
        %779 = vdwg.mxu0
        %v781 = vsel %vm728, %v760, 0
        %v783 = vsel %vm764, %v672, 0
        %785 = vmatpush.bf16.msra.mxu0 0
        %786 = vmatpush.bf16.msra.mxu0 0
        %787 = vmatpush.bf16.msra.mxu0 0
        %788 = vmatpush.bf16.msra.mxu0 0
        %789 = vmatpush.bf16.msra.mxu0 0
        %790 = vmatpush.bf16.msra.mxu0 0
        %791 = vmatpush.bf16.msra.mxu0 0
        %792 = vmatpush.bf16.msra.mxu0 %v783
        %793 = vmatmul.bf16.gmra.mxu0 %v781
        %v794 = vpop.f32.mrf.mxu0
        %v795 = vadd.f32 0.0, %v794
        %v796 = vpop.f32.mrf.mxu0
        %797 = vdwg.mxu0
        %v798 = vmul.f32 %v746, %v757
        %v799 = vmul.f32 %v748, %v758
        %v800 = vmul.f32 %v777, %v757
        %v801 = vmul.f32 %v795, %v758
        %v802 = vmul.f32 %v798, %v669
        %v803 = vmul.f32 %v799, %v670
        %v804 = vsel %vm564, %v802, 0.0
        %v805 = vrot.slane %v804, 4
        %v806 = vadd.f32 %v804, %v805
        %v807 = vrot.slane %v806, 2
        %v808 = vadd.f32 %v806, %v807
        %v809 = vrot.slane %v808, 1
        %v810 = vadd.f32 %v808, %v809
        %v811 = vsel %vm564, %v803, 0.0
        %v812 = vrot.slane %v811, 4
        %v813 = vadd.f32 %v811, %v812
        %v814 = vrot.slane %v813, 2
        %v815 = vadd.f32 %v813, %v814
        %v816 = vrot.slane %v815, 1
        %v817 = vadd.f32 %v815, %v816
        %v818 = vadd.f32 %v800, %v810
        %v819 = vadd.f32 %v801, %v817
        %v820 = vpack.c.bf16 %v818, %v818
        %v821 = vpack.c.bf16 %v819, %v819
        %v824 = vperm.slane %v541, 0
        %v825 = vperm.slane %v542, 0
        %v832 = vunpack.c.l.b16 %v523
        %v833 = vunpack.c.l.b16 %v524
        %v834 = vunpack.c.l.b16 %v525
        %v835 = vunpack.c.l.b16 %v526
        %v836 = vpack.c.b16 %v833, %v832
        %v837 = vpack.c.b16 %v835, %v834
        %v841 = vsel %vm564, %v820, 0
        %843 = vmatpush.bf16.msra.mxu0 0
        %844 = vmatpush.bf16.msra.mxu0 0
        %845 = vmatpush.bf16.msra.mxu0 0
        %846 = vmatpush.bf16.msra.mxu0 0
        %847 = vmatpush.bf16.msra.mxu0 0
        %848 = vmatpush.bf16.msra.mxu0 0
        %849 = vmatpush.bf16.msra.mxu0 %v837
        %850 = vmatpush.bf16.msra.mxu0 %v836
        %851 = vmatmul.bf16.gmra.mxu0 %v841
        %v852 = vpop.f32.mrf.mxu0
        %v853 = vadd.f32 %v824, %v852
        %v854 = vpop.f32.mrf.mxu0
        %855 = vdwg.mxu0
        %v860 = vunpack.c.l.b16 %v527
        %v861 = vunpack.c.l.b16 %v528
        %v862 = vunpack.c.l.b16 %v529
        %v863 = vunpack.c.l.b16 %v530
        %v864 = vpack.c.b16 %v861, %v860
        %v865 = vpack.c.b16 %v863, %v862
        %v869 = vsel %vm564, %v821, 0
        %871 = vmatpush.bf16.msra.mxu0 0
        %872 = vmatpush.bf16.msra.mxu0 0
        %873 = vmatpush.bf16.msra.mxu0 0
        %874 = vmatpush.bf16.msra.mxu0 0
        %875 = vmatpush.bf16.msra.mxu0 0
        %876 = vmatpush.bf16.msra.mxu0 0
        %877 = vmatpush.bf16.msra.mxu0 %v865
        %878 = vmatpush.bf16.msra.mxu0 %v864
        %879 = vmatmul.bf16.gmra.mxu0 %v869
        %v880 = vpop.f32.mrf.mxu0
        %v881 = vadd.f32 %v825, %v880
        %v882 = vpop.f32.mrf.mxu0
        %883 = vdwg.mxu0
        %v884 = vpack.c.bf16 %v853, %v853
        %v885 = vpack.c.bf16 %v881, %v881
        %v887 = vsel %vm564, %v884, 0
        %889 = vmatpush.bf16.xpose.msra.mxu0 0
        %890 = vmatpush.bf16.xpose.msra.mxu0 0
        %891 = vmatpush.bf16.xpose.msra.mxu0 0
        %892 = vmatpush.bf16.xpose.msra.mxu0 0
        %893 = vmatpush.bf16.xpose.msra.mxu0 0
        %894 = vmatpush.bf16.xpose.msra.mxu0 0
        %895 = vmatpush.bf16.xpose.msra.mxu0 0
        %896 = vmatpush.bf16.xpose.msra.mxu0 %v887
        %897 = vmatmul.bf16.gmra.mxu0 %v887
        %v898 = vpop.f32.mrf.mxu0
        %v899 = vadd.f32 0.0, %v898
        %v900 = vpop.f32.mrf.mxu0
        %901 = vdwg.mxu0
        %v903 = vsel %vm564, %v885, 0
        %905 = vmatpush.bf16.xpose.msra.mxu0 0
        %906 = vmatpush.bf16.xpose.msra.mxu0 0
        %907 = vmatpush.bf16.xpose.msra.mxu0 0
        %908 = vmatpush.bf16.xpose.msra.mxu0 0
        %909 = vmatpush.bf16.xpose.msra.mxu0 0
        %910 = vmatpush.bf16.xpose.msra.mxu0 0
        %911 = vmatpush.bf16.xpose.msra.mxu0 0
        %912 = vmatpush.bf16.xpose.msra.mxu0 %v903
        %913 = vmatmul.bf16.gmra.mxu0 %v903
        %v914 = vpop.f32.mrf.mxu0
        %v915 = vadd.f32 0.0, %v914
        %v916 = vpop.f32.mrf.mxu0
        %917 = vdwg.mxu0
        %v918 = vmul.f32 %v899, 0.17677669
        %v919 = vmul.f32 %v915, 0.17677669
        %v920 = vsel %vm728, %v918, -inf
        %921 = vmax.xlane.f32.xlu0 %v920
        %v922 = vpop.xlane.xlu0 %921
        %v923 = vsel %vm728, %v919, -inf
        %924 = vmax.xlane.f32.xlu0 %v923
        %v925 = vpop.xlane.xlu0 %924
        %v926 = vsub.f32 %v918, %v922
        %v927 = vsub.f32 %v919, %v925
        %v928 = vmul.f32 %v926, 1.442695
        %v929 = vpow.pop %v928
        %v930 = vmul.f32 %v927, 1.442695
        %v931 = vpow.pop %v930
        %v932 = vsel %vm728, %v929, 0.0
        %933 = vadd.xlane.f32.xlu0 %v932
        %v934 = vpop.xlane.xlu0 %933
        %v935 = vsel %vm728, %v931, 0.0
        %936 = vadd.xlane.f32.xlu0 %v935
        %v937 = vpop.xlane.xlu0 %936
        %v938 = vrcp.pop %v934
        %v939 = vrcp.pop %v937
        %v940 = vpack.c.bf16 %v929, %v929
        %v941 = vpack.c.bf16 %v931, %v931
        %v943 = vsel %vm728, %v940, 0
        %v945 = vsel %vm764, %v884, 0
        %947 = vmatpush.bf16.msra.mxu0 0
        %948 = vmatpush.bf16.msra.mxu0 0
        %949 = vmatpush.bf16.msra.mxu0 0
        %950 = vmatpush.bf16.msra.mxu0 0
        %951 = vmatpush.bf16.msra.mxu0 0
        %952 = vmatpush.bf16.msra.mxu0 0
        %953 = vmatpush.bf16.msra.mxu0 0
        %954 = vmatpush.bf16.msra.mxu0 %v945
        %955 = vmatmul.bf16.gmra.mxu0 %v943
        %v956 = vpop.f32.mrf.mxu0
        %v957 = vadd.f32 0.0, %v956
        %v958 = vpop.f32.mrf.mxu0
        %959 = vdwg.mxu0
        %v961 = vsel %vm728, %v941, 0
        %v963 = vsel %vm764, %v885, 0
        %965 = vmatpush.bf16.msra.mxu0 0
        %966 = vmatpush.bf16.msra.mxu0 0
        %967 = vmatpush.bf16.msra.mxu0 0
        %968 = vmatpush.bf16.msra.mxu0 0
        %969 = vmatpush.bf16.msra.mxu0 0
        %970 = vmatpush.bf16.msra.mxu0 0
        %971 = vmatpush.bf16.msra.mxu0 0
        %972 = vmatpush.bf16.msra.mxu0 %v963
        %973 = vmatmul.bf16.gmra.mxu0 %v961
        %v974 = vpop.f32.mrf.mxu0
        %v975 = vadd.f32 0.0, %v974
        %v976 = vpop.f32.mrf.mxu0
        %977 = vdwg.mxu0
        %v978 = vmul.f32 %v957, %v938
        %v979 = vmul.f32 %v975, %v939
        %v980 = vpack.c.bf16 %v978, %v978
        %v981 = vpack.c.bf16 %v979, %v979
        %v983 = vsel %vm564, %v980, 0
        %985 = vmatpush.bf16.msra.mxu0 0
        %986 = vmatpush.bf16.msra.mxu0 0
        %987 = vmatpush.bf16.msra.mxu0 0
        %988 = vmatpush.bf16.msra.mxu0 0
        %989 = vmatpush.bf16.msra.mxu0 0
        %990 = vmatpush.bf16.msra.mxu0 0
        %991 = vmatpush.bf16.msra.mxu0 %v622
        %992 = vmatpush.bf16.msra.mxu0 %v621
        %993 = vmatmul.bf16.gmra.mxu0 %v983
        %v994 = vpop.f32.mrf.mxu0
        %v995 = vadd.f32 %v609, %v994
        %v996 = vpop.f32.mrf.mxu0
        %997 = vdwg.mxu0
        %v999 = vsel %vm564, %v981, 0
        %1001 = vmatpush.bf16.msra.mxu0 0
        %1002 = vmatpush.bf16.msra.mxu0 0
        %1003 = vmatpush.bf16.msra.mxu0 0
        %1004 = vmatpush.bf16.msra.mxu0 0
        %1005 = vmatpush.bf16.msra.mxu0 0
        %1006 = vmatpush.bf16.msra.mxu0 0
        %1007 = vmatpush.bf16.msra.mxu0 %v650
        %1008 = vmatpush.bf16.msra.mxu0 %v649
        %1009 = vmatmul.bf16.gmra.mxu0 %v999
        %v1010 = vpop.f32.mrf.mxu0
        %v1011 = vadd.f32 %v610, %v1010
        %v1012 = vpop.f32.mrf.mxu0
        %1013 = vdwg.mxu0
        %v1014 = vpack.c.bf16 %v638, %v638
        %v1015 = vpack.c.bf16 %v663, %v663
        %v1016 = vpack.c.bf16 %v995, %v995
        %v1017 = vpack.c.bf16 %v1011, %v1011
        %v1019 = vsel %vm564, %v1014, 0
        %v1022 = vsel %vm564, %v1016, 0
        %1024 = vmatpush.bf16.xpose.msra.mxu0 0
        %1025 = vmatpush.bf16.xpose.msra.mxu0 0
        %1026 = vmatpush.bf16.xpose.msra.mxu0 0
        %1027 = vmatpush.bf16.xpose.msra.mxu0 0
        %1028 = vmatpush.bf16.xpose.msra.mxu0 0
        %1029 = vmatpush.bf16.xpose.msra.mxu0 0
        %1030 = vmatpush.bf16.xpose.msra.mxu0 0
        %1031 = vmatpush.bf16.xpose.msra.mxu0 %v1022
        %1032 = vmatmul.bf16.gmra.mxu0 %v1019
        %v1033 = vpop.f32.mrf.mxu0
        %v1034 = vadd.f32 0.0, %v1033
        %v1035 = vpop.f32.mrf.mxu0
        %1036 = vdwg.mxu0
        %v1038 = vsel %vm564, %v1015, 0
        %v1041 = vsel %vm564, %v1017, 0
        %1043 = vmatpush.bf16.xpose.msra.mxu0 0
        %1044 = vmatpush.bf16.xpose.msra.mxu0 0
        %1045 = vmatpush.bf16.xpose.msra.mxu0 0
        %1046 = vmatpush.bf16.xpose.msra.mxu0 0
        %1047 = vmatpush.bf16.xpose.msra.mxu0 0
        %1048 = vmatpush.bf16.xpose.msra.mxu0 0
        %1049 = vmatpush.bf16.xpose.msra.mxu0 0
        %1050 = vmatpush.bf16.xpose.msra.mxu0 %v1041
        %1051 = vmatmul.bf16.gmra.mxu0 %v1038
        %v1052 = vpop.f32.mrf.mxu0
        %v1053 = vadd.f32 0.0, %v1052
        %v1054 = vpop.f32.mrf.mxu0
        %1055 = vdwg.mxu0
        %v1056 = vmul.f32 %v1034, 0.17677669
        %v1057 = vmul.f32 %v1053, 0.17677669
        %v1058 = vmul.f32 %v638, %v638
        %v1059 = vmul.f32 %v663, %v663
        %v1060 = vsel %vm564, %v1058, 0.0
        %1061 = vadd.xlane.f32.xlu0 %v1060
        %v1062 = vpop.xlane.xlu0 %1061
        %v1063 = vsel %vm564, %v1059, 0.0
        %1064 = vadd.xlane.f32.xlu0 %v1063
        %v1065 = vpop.xlane.xlu0 %1064
        %v1066 = vmul.f32 %v1062, 0.17677669
        %v1067 = vmul.f32 %v1065, 0.17677669
        %v1068 = vsel %vm728, %v1056, -inf
        %1069 = vmax.xlane.f32.xlu0 %v1068
        %v1070 = vpop.xlane.xlu0 %1069
        %v1071 = vsel %vm728, %v1057, -inf
        %1072 = vmax.xlane.f32.xlu0 %v1071
        %v1073 = vpop.xlane.xlu0 %1072
        %v1074 = vmax.f32 %v1070, %v1066
        %v1075 = vmax.f32 %v1073, %v1067
        %v1076 = vsub.f32 %v1056, %v1074
        %v1077 = vsub.f32 %v1057, %v1075
        %v1078 = vmul.f32 %v1076, 1.442695
        %v1079 = vpow.pop %v1078
        %v1080 = vmul.f32 %v1077, 1.442695
        %v1081 = vpow.pop %v1080
        %v1082 = vsub.f32 %v1066, %v1074
        %v1083 = vsub.f32 %v1067, %v1075
        %v1084 = vmul.f32 %v1082, 1.442695
        %v1085 = vpow.pop %v1084
        %v1086 = vmul.f32 %v1083, 1.442695
        %v1087 = vpow.pop %v1086
        %v1088 = vsel %vm728, %v1079, 0.0
        %1089 = vadd.xlane.f32.xlu0 %v1088
        %v1090 = vpop.xlane.xlu0 %1089
        %v1091 = vsel %vm728, %v1081, 0.0
        %1092 = vadd.xlane.f32.xlu0 %v1091
        %v1093 = vpop.xlane.xlu0 %1092
        %v1094 = vadd.f32 %v1090, %v1085
        %v1095 = vadd.f32 %v1093, %v1087
        %v1096 = vrcp.pop %v1094
        %v1097 = vrcp.pop %v1095
        %v1098 = vpack.c.bf16 %v1079, %v1079
        %v1099 = vpack.c.bf16 %v1081, %v1081
        %v1101 = vsel %vm728, %v1098, 0
        %v1103 = vsel %vm764, %v1016, 0
        %1105 = vmatpush.bf16.msra.mxu0 0
        %1106 = vmatpush.bf16.msra.mxu0 0
        %1107 = vmatpush.bf16.msra.mxu0 0
        %1108 = vmatpush.bf16.msra.mxu0 0
        %1109 = vmatpush.bf16.msra.mxu0 0
        %1110 = vmatpush.bf16.msra.mxu0 0
        %1111 = vmatpush.bf16.msra.mxu0 0
        %1112 = vmatpush.bf16.msra.mxu0 %v1103
        %1113 = vmatmul.bf16.gmra.mxu0 %v1101
        %v1114 = vpop.f32.mrf.mxu0
        %v1115 = vadd.f32 0.0, %v1114
        %v1116 = vpop.f32.mrf.mxu0
        %1117 = vdwg.mxu0
        %v1119 = vsel %vm728, %v1099, 0
        %v1121 = vsel %vm764, %v1017, 0
        %1123 = vmatpush.bf16.msra.mxu0 0
        %1124 = vmatpush.bf16.msra.mxu0 0
        %1125 = vmatpush.bf16.msra.mxu0 0
        %1126 = vmatpush.bf16.msra.mxu0 0
        %1127 = vmatpush.bf16.msra.mxu0 0
        %1128 = vmatpush.bf16.msra.mxu0 0
        %1129 = vmatpush.bf16.msra.mxu0 0
        %1130 = vmatpush.bf16.msra.mxu0 %v1121
        %1131 = vmatmul.bf16.gmra.mxu0 %v1119
        %v1132 = vpop.f32.mrf.mxu0
        %v1133 = vadd.f32 0.0, %v1132
        %v1134 = vpop.f32.mrf.mxu0
        %1135 = vdwg.mxu0
        %v1136 = vmul.f32 %v1085, %v1096
        %v1137 = vmul.f32 %v1087, %v1097
        %v1138 = vmul.f32 %v1115, %v1096
        %v1139 = vmul.f32 %v1133, %v1097
        %v1140 = vmul.f32 %v1136, %v638
        %v1141 = vmul.f32 %v1137, %v663
        %v1142 = vsel %vm564, %v1140, 0.0
        %v1143 = vrot.slane %v1142, 4
        %v1144 = vadd.f32 %v1142, %v1143
        %v1145 = vrot.slane %v1144, 2
        %v1146 = vadd.f32 %v1144, %v1145
        %v1147 = vrot.slane %v1146, 1
        %v1148 = vadd.f32 %v1146, %v1147
        %v1149 = vsel %vm564, %v1141, 0.0
        %v1150 = vrot.slane %v1149, 4
        %v1151 = vadd.f32 %v1149, %v1150
        %v1152 = vrot.slane %v1151, 2
        %v1153 = vadd.f32 %v1151, %v1152
        %v1154 = vrot.slane %v1153, 1
        %v1155 = vadd.f32 %v1153, %v1154
        %v1156 = vadd.f32 %v1138, %v1148
        %v1157 = vadd.f32 %v1139, %v1155
        %1158 = vst.msk [vmem:[%s513] sm:$0xff] %vm564, %v1156
        %1160 = vrot.lane.b32.xlu0 %v1157, 32
        %v1161 = vpop.permute.xlu0 %1160
        %vm1163 = vcmask 523520
        %1164 = vst.msk [vmem:[%s513] sm:$0xff] %vm1163, %v1161
        %s1165 = sand.u32 %s265, 1
        %s1166 = scalar_lea.sflag [#allocation4], %s1165
        %s1167 = sand.u32 %s265, 1
        %s1168 = smul.addr %s1167, 8
        %s1169 = scalar_lea.vmem [#allocation14], %s1168
        // Predicated region
        $region89: #{tpu_custom_call.1} parent=59 // pred_check
          %p1170 = pneg %p275
        $region90: #{tpu_custom_call.1} parent=59 // pred_check_branch
          %1172 = sbr.rel (%p1170) target = $region92
        $region91: #{tpu_custom_call.1} parent=59 // pred_region
          %1174 = vsyncadd %s1166, 0
          %s1175 = smul.addr %s32, 8
          %s1176 = scalar_lea.hbm %s10, %s1175
          %s1178 = sshll.u32 %s1169, 4
          %s1179 = int_to_ptr.vmem [resolvable:$true] %s1178
          %s1180 = sshll.u32 %s1176, 4
          %s1181 = int_to_ptr.hbm [resolvable:$true] %s1180
          %1183 = dma.vmem_to_hbm [thread:$0]  %s1179, 128, %s1181, %s1166
        $region92: #{tpu_custom_call.1} parent=59 // pred_fallthru
          _
      $region60: #{tpu_custom_call.1} parent=5 // pred_fallthru
        _
      %p1184 = scmp.le.s32.totalorder 2, %s27
      // Predicated region
      $region93: #{tpu_custom_call.1} parent=5 // pred_check
        %p1185 = pneg %p1184
      $region94: #{tpu_custom_call.1} parent=5 // pred_check_branch
        %1187 = sbr.rel (%p1185) target = $region96
      $region95: #{tpu_custom_call.1} parent=5 // pred_region
        %s1188 = ssub.s32 %s27, 2
        // Predicated region
        $region97: #{tpu_custom_call.1} parent=95 // pred_check
          %p1189 = pneg %p281
        $region98: #{tpu_custom_call.1} parent=95 // pred_check_branch
          %1191 = sbr.rel (%p1189) target = $region100
        $region99: #{tpu_custom_call.1} parent=95 // pred_region
          %s1192 = sand.u32 %s266, 1
          %s1193 = scalar_lea.sflag [#allocation4], %s1192
          %s1194 = sand.u32 %s266, 1
          %s1195 = smul.addr %s1194, 8
          %s1196 = scalar_lea.vmem [#allocation14], %s1195
          %1198 = dma.done %s1193, 128
        $region100: #{tpu_custom_call.1} parent=95 // pred_fallthru
          _
      $region96: #{tpu_custom_call.1} parent=5 // pred_fallthru
        _
    $region6: #{tpu_custom_call.1} parent=1 // loop_footer
      %s31 = sadd.s32 1, %s27
    $region7: #{tpu_custom_call.1} parent=1 // loop_footer_branch
      %26 = sbr.rel target = $region3
    $region8: #{tpu_custom_call.1} parent=1 // loop_exit
      _
    %1199 = vsyncpa [#allocation3], 1
    %s1200 = scalar_lea.sflag [#allocation3], 1
    %1201 = vsyncpa %s1200, 1
    %1202 = vsyncpa [#allocation6], 1
    %s1203 = scalar_lea.sflag [#allocation6], 1
    %1204 = vsyncpa %s1203, 1
    %1205 = vsyncpa [#allocation9], 1
    %1206 = vsyncpa [#allocation12], 1
    %1207 = vsyncpa [#allocation4], 1
    %s1208 = scalar_lea.sflag [#allocation4], 1
    %1209 = vsyncpa %s1208, 1

</llo_original>
